<compile_context>
chip_gen: v5e
topology: v5e:2x2
jax: 0.10.0
libtpu: 0.0.40
codegen_flags: <defaults>
</compile_context>

<pallas_src>
import jax
import jax.numpy as jnp
import numpy as np
from jax.experimental import pallas as pl
from jax.experimental.pallas import tpu as pltpu

KERNEL_SIZES = (17, 17, 17, 3, 3, 3, 3, 3, 3)   # stack1: 3x k=17, stack2: 6x k=3
KMAX = 17
PAD = KMAX // 2                                  # 8 -> sublane aligned center offset
N_BLOCKS = len(KERNEL_SIZES)
LN_EPS = 1e-5

# TODO(synk): jax.nn.gelu defaults to the tanh approximation; PyTorch nn.GELU default is
# exact erf GELU (use approximate=False if bit-level parity with torch is required).


def _layernorm(h, g, b):
    mu = jnp.mean(h, axis=-1, keepdims=True)
    var = jnp.mean((h - mu) ** 2, axis=-1, keepdims=True)
    return (h - mu) * jax.lax.rsqrt(var + LN_EPS) * g + b


def _encoder_kernel(x_ref, ln_g_ref, ln_b_ref, cw_ref, cb_ref, lw_ref, lb_ref,
                    sg_ref, sb_ref, pwm_ref, pws_ref, pbm_ref, pbs_ref,
                    std_ref, mean_ref, pad_ref):
    Bb, T, D = x_ref.shape

    # Zero the halo rows of the persistent padded scratch once per grid step; the
    # center rows are overwritten by every block, the halo is only ever read.
    pad_ref[:, 0:PAD, :] = jnp.zeros((Bb, PAD, D), jnp.float32)
    pad_ref[:, PAD + T:PAD + T + PAD, :] = jnp.zeros((Bb, PAD, D), jnp.float32)

    h = x_ref[...].astype(jnp.float32)                      # (Bb, T, D)

    def lconv_block(h, i, ksz):
        # pre-LayerNorm
        y = _layernorm(h, ln_g_ref[i], ln_b_ref[i])         # (Bb, T, D)
        # depthwise conv along time, 'same' zero padding via the scratch halo;
        # only the ksz real taps are unrolled (zero-padded taps are skipped);
        # the centre tap uses the in-register y (no VMEM round trip) and seeds acc.
        pad_ref[:, PAD:PAD + T, :] = y
        w = cw_ref[i]                                       # (KMAX, D), loaded once
        lo = PAD - ksz // 2
        acc = y * w[PAD:PAD + 1, :]
        for k in range(lo, lo + ksz):
            if k == PAD:
                continue
            acc = acc + pad_ref[:, k:k + T, :] * w[k:k + 1, :]
        acc = jax.nn.gelu(acc + cb_ref[i])
        # pointwise channel-mixing projection: bf16 MXU matmul, f32 accumulate
        acc2 = jnp.dot(acc.reshape(Bb * T, D).astype(jnp.bfloat16),
                       lw_ref[i],
                       preferred_element_type=jnp.float32)
        acc2 = acc2.reshape(Bb, T, D) + lb_ref[i]
        # dropout is identity at inference
        return h + acc2

    # stack1: 3 x LConvBlock(kernel 17) + LayerNorm
    for i in range(3):
        h = lconv_block(h, i, KERNEL_SIZES[i])
    h = _layernorm(h, sg_ref[0], sb_ref[0])

    # stack2: 6 x LConvBlock(kernel 3) + LayerNorm
    for i in range(3, N_BLOCKS):
        h = lconv_block(h, i, KERNEL_SIZES[i])
    h = _layernorm(h, sg_ref[1], sb_ref[1])

    # final projection D -> 2D as two lane-dense (D, D) matmuls written directly
    hb = h.reshape(Bb * T, D).astype(jnp.bfloat16)
    mean = jnp.dot(hb, pwm_ref[...], preferred_element_type=jnp.float32) + pbm_ref[...]
    std = jnp.dot(hb, pws_ref[...], preferred_element_type=jnp.float32) + pbs_ref[...]
    mean_ref[...] = mean.reshape(Bb, T, D).astype(mean_ref.dtype)
    std_ref[...] = std.reshape(Bb, T, D).astype(std_ref.dtype)


def _choose_block_batch(B, T, target_rows=256):
    """Pack enough batch rows per grid step to give the MXU ~target_rows rows."""
    bb = max(1, min(B, max(1, target_rows // max(T, 1))))
    while B % bb:
        bb -= 1
    return bb


def residual_encoder(x, params, block_batch=None):
    """x: (B, T, D) float32. Returns (std, mean), each (B, T, D)."""
    B, T, D = x.shape
    ln_g, ln_b, cw, cb, lw, lb, sg, sb, pw, pb = params

    Bb = _choose_block_batch(B, T) if block_batch is None else block_batch
    assert B % Bb == 0

    # bf16 MXU operands; biases / LN params stay f32 (VPU math is f32 on all gens)
    lw_bf = lw.astype(jnp.bfloat16)                 # (N_BLOCKS, D, D)
    pw_mean = pw[:, :D].astype(jnp.bfloat16)        # (D, D)
    pw_std = pw[:, D:].astype(jnp.bfloat16)         # (D, D)
    pb_mean = pb[:, :D]
    pb_std = pb[:, D:]

    def full(arr):
        nd = arr.ndim
        return pl.BlockSpec(arr.shape, lambda g: (0,) * nd)

    seq_spec = pl.BlockSpec((Bb, T, D), lambda g: (g, 0, 0))
    out_shape = (jax.ShapeDtypeStruct((B, T, D), x.dtype),
                 jax.ShapeDtypeStruct((B, T, D), x.dtype))

    # TODO(synk): for very long T, add a T grid axis with a cumulative-receptive-field
    # halo (3*8 + 6*1 = 30 rows/side) so the whole sequence need not be VMEM resident.
    std, mean = pl.pallas_call(
        _encoder_kernel,
        out_shape=out_shape,
        grid_spec=pltpu.PrefetchScalarGridSpec(
            num_scalar_prefetch=0,
            grid=(B // Bb,),
            in_specs=[seq_spec,
                      full(ln_g), full(ln_b), full(cw), full(cb),
                      full(lw_bf), full(lb), full(sg), full(sb),
                      full(pw_mean), full(pw_std), full(pb_mean), full(pb_std)],
            out_specs=[seq_spec, seq_spec],
            scratch_shapes=[pltpu.VMEM((Bb, T + 2 * PAD, D), jnp.float32)]),
        compiler_params=pltpu.CompilerParams(
            dimension_semantics=("parallel",),           # batch items independent (v7x 2 TCs)
            vmem_limit_bytes=32 * 1024 * 1024),
    )(x, ln_g, ln_b, cw, cb, lw_bf, lb, sg, sb, pw_mean, pw_std, pb_mean, pb_std)
    return std, mean


def init_params(key, dim):
    """Deterministic synthetic parameters. Conv kernels zero-padded/centered to KMAX taps."""
    ks = jax.random.split(key, 8)

    ln_g = jnp.ones((N_BLOCKS, 1, dim), jnp.float32)
    ln_b = jnp.zeros((N_BLOCKS, 1, dim), jnp.float32)

    cw = np.zeros((N_BLOCKS, KMAX, dim), np.float32)
    raw = np.asarray(jax.random.normal(ks[0], (N_BLOCKS, KMAX, dim))) * 0.1
    for i, ksz in enumerate(KERNEL_SIZES):
        lo = PAD - ksz // 2
        cw[i, lo:lo + ksz, :] = raw[i, lo:lo + ksz, :]
    cw = jnp.asarray(cw)
    cb = jax.random.normal(ks[1], (N_BLOCKS, 1, dim)) * 0.05

    lw = jax.random.normal(ks[2], (N_BLOCKS, dim, dim)) * (0.5 / np.sqrt(dim))
    lb = jax.random.normal(ks[3], (N_BLOCKS, 1, dim)) * 0.05

    sg = jnp.ones((2, 1, dim), jnp.float32)
    sb = jnp.zeros((2, 1, dim), jnp.float32)

    pw = jax.random.normal(ks[4], (dim, 2 * dim)) * (1.0 / np.sqrt(dim))
    pb = jax.random.normal(ks[5], (1, 2 * dim)) * 0.05

    return (ln_g, ln_b, cw, cb, lw, lb, sg, sb,
            pw.astype(jnp.float32), pb.astype(jnp.float32))


def residual_encoder_ref(x, params):
    """Pure-JAX reference with the same math (bf16 MXU operands, f32 accumulate)."""
    ln_g, ln_b, cw, cb, lw, lb, sg, sb, pw, pb = params
    B, T, D = x.shape
    lw_bf = lw.astype(jnp.bfloat16)
    pw_bf = pw.astype(jnp.bfloat16)

    def ln(h, g, b):
        mu = jnp.mean(h, axis=-1, keepdims=True)
        var = jnp.mean((h - mu) ** 2, axis=-1, keepdims=True)
        return (h - mu) * jax.lax.rsqrt(var + LN_EPS) * g + b

    def block(h, i):
        y = ln(h, ln_g[i], ln_b[i])
        yp = jnp.pad(y, ((0, 0), (PAD, PAD), (0, 0)))
        acc = jnp.zeros_like(y)
        for k in range(KMAX):
            acc = acc + yp[:, k:k + T, :] * cw[i, k][None, None, :]
        acc = jax.nn.gelu(acc + cb[i])
        acc = jnp.einsum('btd,de->bte', acc.astype(jnp.bfloat16), lw_bf[i],
                         preferred_element_type=jnp.float32) + lb[i]
        return h + acc

    h = x.astype(jnp.float32)
    for i in range(3):
        h = block(h, i)
    h = ln(h, sg[0], sb[0])
    for i in range(3, N_BLOCKS):
        h = block(h, i)
    h = ln(h, sg[1], sb[1])
    proj = jnp.einsum('btd,de->bte', h.astype(jnp.bfloat16), pw_bf,
                      preferred_element_type=jnp.float32) + pb
    return proj[..., D:], proj[..., :D]   # (std, mean)


if __name__ == "__main__":
    B, T, D = 2, 16, 32
    key = jax.random.PRNGKey(0)
    kx, kp = jax.random.split(key)
    x = jax.random.normal(kx, (B, T, D), dtype=jnp.float32)
    params = init_params(kp, D)

    std, mean = jax.block_until_ready(residual_encoder(x, params))

    std_ref, mean_ref = residual_encoder_ref(x, params)
    np.testing.assert_allclose(np.asarray(std), np.asarray(std_ref), rtol=2e-3, atol=2e-3)
    np.testing.assert_allclose(np.asarray(mean), np.asarray(mean_ref), rtol=2e-3, atol=2e-3)

    print("KERNEL_OK")
</pallas_src>

<mosaic_0001>
module attributes {stable_mosaic.version = 11 : i64} {
  func.func @_encoder_kernel(%arg0: i32, %arg1: memref<2x16x32xf32, #tpu.memory_space<vmem>>, %arg2: memref<9x1x32xf32, #tpu.memory_space<vmem>>, %arg3: memref<9x1x32xf32, #tpu.memory_space<vmem>>, %arg4: memref<9x17x32xf32, #tpu.memory_space<vmem>>, %arg5: memref<9x1x32xf32, #tpu.memory_space<vmem>>, %arg6: memref<9x32x32xbf16, #tpu.memory_space<vmem>>, %arg7: memref<9x1x32xf32, #tpu.memory_space<vmem>>, %arg8: memref<2x1x32xf32, #tpu.memory_space<vmem>>, %arg9: memref<2x1x32xf32, #tpu.memory_space<vmem>>, %arg10: memref<32x32xbf16, #tpu.memory_space<vmem>>, %arg11: memref<32x32xbf16, #tpu.memory_space<vmem>>, %arg12: memref<1x32xf32, #tpu.memory_space<vmem>>, %arg13: memref<1x32xf32, #tpu.memory_space<vmem>>, %arg14: memref<2x16x32xf32, #tpu.memory_space<vmem>>, %arg15: memref<2x16x32xf32, #tpu.memory_space<vmem>>, %arg16: memref<2x32x32xf32, #tpu.memory_space<vmem>>) attributes {dimension_semantics = [#tpu.dimension_semantics<parallel>], iteration_bounds = array<i64: 1>, scalar_prefetch = 0 : i64, scratch_operands = 1 : i64, tpu.core_type = #tpu.core_type<tc>, window_params = [{transform_indices = @transform_0, window_bounds = array<i64: 2, 16, 32>}, {pipeline_mode = #tpu.pipeline_mode<synchronous>, transform_indices = @transform_1, window_bounds = array<i64: 9, 1, 32>}, {pipeline_mode = #tpu.pipeline_mode<synchronous>, transform_indices = @transform_2, window_bounds = array<i64: 9, 1, 32>}, {pipeline_mode = #tpu.pipeline_mode<synchronous>, transform_indices = @transform_3, window_bounds = array<i64: 9, 17, 32>}, {pipeline_mode = #tpu.pipeline_mode<synchronous>, transform_indices = @transform_4, window_bounds = array<i64: 9, 1, 32>}, {pipeline_mode = #tpu.pipeline_mode<synchronous>, transform_indices = @transform_5, window_bounds = array<i64: 9, 32, 32>}, {pipeline_mode = #tpu.pipeline_mode<synchronous>, transform_indices = @transform_6, window_bounds = array<i64: 9, 1, 32>}, {pipeline_mode = #tpu.pipeline_mode<synchronous>, transform_indices = @transform_7, window_bounds = array<i64: 2, 1, 32>}, {pipeline_mode = #tpu.pipeline_mode<synchronous>, transform_indices = @transform_8, window_bounds = array<i64: 2, 1, 32>}, {pipeline_mode = #tpu.pipeline_mode<synchronous>, transform_indices = @transform_9, window_bounds = array<i64: 32, 32>}, {pipeline_mode = #tpu.pipeline_mode<synchronous>, transform_indices = @transform_10, window_bounds = array<i64: 32, 32>}, {pipeline_mode = #tpu.pipeline_mode<synchronous>, transform_indices = @transform_11, window_bounds = array<i64: 1, 32>}, {pipeline_mode = #tpu.pipeline_mode<synchronous>, transform_indices = @transform_12, window_bounds = array<i64: 1, 32>}, {transform_indices = @transform_13, window_bounds = array<i64: 2, 16, 32>}, {transform_indices = @transform_14, window_bounds = array<i64: 2, 16, 32>}]} {
    %cst = arith.constant 0.000000e+00 : f32
    %0 = vector.broadcast %cst : f32 to vector<2x8x32xf32>
    %c0 = arith.constant 0 : index
    %c0_0 = arith.constant 0 : index
    %c0_1 = arith.constant 0 : index
    %1 = vector.load %arg16[%c0, %c0_0, %c0_1] : memref<2x32x32xf32, #tpu.memory_space<vmem>>, vector<2x8x32xf32>
    tpu.vector_store %arg16[%c0, %c0_0, %c0_1], %0 {strides = array<i32>} : memref<2x32x32xf32, #tpu.memory_space<vmem>>, vector<2x8x32xf32>,
    %cst_2 = arith.constant 0.000000e+00 : f32
    %2 = vector.broadcast %cst_2 : f32 to vector<2x8x32xf32>
    %c0_3 = arith.constant 0 : index
    %c24 = arith.constant 24 : index
    %c0_4 = arith.constant 0 : index
    %3 = vector.load %arg16[%c0_3, %c24, %c0_4] : memref<2x32x32xf32, #tpu.memory_space<vmem>>, vector<2x8x32xf32>
    tpu.vector_store %arg16[%c0_3, %c24, %c0_4], %2 {strides = array<i32>} : memref<2x32x32xf32, #tpu.memory_space<vmem>>, vector<2x8x32xf32>,
    %c0_5 = arith.constant 0 : index
    %c0_6 = arith.constant 0 : index
    %c0_7 = arith.constant 0 : index
    %4 = vector.load %arg1[%c0_5, %c0_6, %c0_7] : memref<2x16x32xf32, #tpu.memory_space<vmem>>, vector<2x16x32xf32>
    %c0_8 = arith.constant 0 : index
    %c0_9 = arith.constant 0 : index
    %c0_10 = arith.constant 0 : index
    %5 = vector.load %arg2[%c0_8, %c0_9, %c0_10] : memref<9x1x32xf32, #tpu.memory_space<vmem>>, vector<1x1x32xf32>
    %6 = vector.shape_cast %5 : vector<1x1x32xf32> to vector<1x32xf32>
    %c0_11 = arith.constant 0 : index
    %c0_12 = arith.constant 0 : index
    %c0_13 = arith.constant 0 : index
    %7 = vector.load %arg3[%c0_11, %c0_12, %c0_13] : memref<9x1x32xf32, #tpu.memory_space<vmem>>, vector<1x1x32xf32>
    %8 = vector.shape_cast %7 : vector<1x1x32xf32> to vector<1x32xf32>
    %cst_14 = arith.constant dense<0.000000e+00> : vector<2x16xf32>
    %9 = vector.multi_reduction <add>, %4, %cst_14 [2] : vector<2x16x32xf32> to vector<2x16xf32>
    %10 = vector.shape_cast %9 : vector<2x16xf32> to vector<2x16x1xf32>
    %cst_15 = arith.constant 3.200000e+01 : f32
    %11 = vector.broadcast %cst_15 : f32 to vector<2x16x1xf32>
    %12 = arith.divf %10, %11 : vector<2x16x1xf32>
    %13 = vector.broadcast %12 : vector<2x16x1xf32> to vector<2x16x32xf32>
    %14 = arith.subf %4, %13 : vector<2x16x32xf32>
    %15 = arith.mulf %14, %14 : vector<2x16x32xf32>
    %cst_16 = arith.constant dense<0.000000e+00> : vector<2x16xf32>
    %16 = vector.multi_reduction <add>, %15, %cst_16 [2] : vector<2x16x32xf32> to vector<2x16xf32>
    %17 = vector.shape_cast %16 : vector<2x16xf32> to vector<2x16x1xf32>
    %cst_17 = arith.constant 3.200000e+01 : f32
    %18 = vector.broadcast %cst_17 : f32 to vector<2x16x1xf32>
    %19 = arith.divf %17, %18 : vector<2x16x1xf32>
    %20 = vector.broadcast %12 : vector<2x16x1xf32> to vector<2x16x32xf32>
    %21 = arith.subf %4, %20 : vector<2x16x32xf32>
    %cst_18 = arith.constant 9.99999974E-6 : f32
    %22 = vector.broadcast %cst_18 : f32 to vector<2x16x1xf32>
    %23 = arith.addf %19, %22 : vector<2x16x1xf32>
    %24 = math.rsqrt %23 : vector<2x16x1xf32>
    %25 = vector.broadcast %24 : vector<2x16x1xf32> to vector<2x16x32xf32>
    %26 = arith.mulf %21, %25 : vector<2x16x32xf32>
    %27 = vector.shape_cast %6 : vector<1x32xf32> to vector<1x1x32xf32>
    %28 = vector.broadcast %27 : vector<1x1x32xf32> to vector<2x16x32xf32>
    %29 = arith.mulf %26, %28 : vector<2x16x32xf32>
    %30 = vector.shape_cast %8 : vector<1x32xf32> to vector<1x1x32xf32>
    %31 = vector.broadcast %30 : vector<1x1x32xf32> to vector<2x16x32xf32>
    %32 = arith.addf %29, %31 : vector<2x16x32xf32>
    %c0_19 = arith.constant 0 : index
    %c8 = arith.constant 8 : index
    %c0_20 = arith.constant 0 : index
    %33 = vector.load %arg16[%c0_19, %c8, %c0_20] : memref<2x32x32xf32, #tpu.memory_space<vmem>>, vector<2x16x32xf32>
    tpu.vector_store %arg16[%c0_19, %c8, %c0_20], %32 {strides = array<i32>} : memref<2x32x32xf32, #tpu.memory_space<vmem>>, vector<2x16x32xf32>,
    %c0_21 = arith.constant 0 : index
    %c0_22 = arith.constant 0 : index
    %c0_23 = arith.constant 0 : index
    %34 = vector.load %arg4[%c0_21, %c0_22, %c0_23] : memref<9x17x32xf32, #tpu.memory_space<vmem>>, vector<1x17x32xf32>
    %35 = vector.shape_cast %34 : vector<1x17x32xf32> to vector<17x32xf32>
    %36 = vector.extract_strided_slice %35 {offsets = [8, 0], sizes = [1, 32], strides = [1, 1]} : vector<17x32xf32> to vector<1x32xf32>
    %37 = vector.shape_cast %36 : vector<1x32xf32> to vector<1x1x32xf32>
    %38 = vector.broadcast %37 : vector<1x1x32xf32> to vector<2x16x32xf32>
    %39 = arith.mulf %32, %38 : vector<2x16x32xf32>
    %c0_24 = arith.constant 0 : index
    %c0_25 = arith.constant 0 : index
    %c0_26 = arith.constant 0 : index
    %40 = vector.load %arg16[%c0_24, %c0_25, %c0_26] : memref<2x32x32xf32, #tpu.memory_space<vmem>>, vector<2x16x32xf32>
    %41 = vector.extract_strided_slice %35 {offsets = [0, 0], sizes = [1, 32], strides = [1, 1]} : vector<17x32xf32> to vector<1x32xf32>
    %42 = vector.shape_cast %41 : vector<1x32xf32> to vector<1x1x32xf32>
    %43 = vector.broadcast %42 : vector<1x1x32xf32> to vector<2x16x32xf32>
    %44 = arith.mulf %40, %43 : vector<2x16x32xf32>
    %45 = arith.addf %39, %44 : vector<2x16x32xf32>
    %c0_27 = arith.constant 0 : index
    %c1 = arith.constant 1 : index
    %c0_28 = arith.constant 0 : index
    %46 = vector.load %arg16[%c0_27, %c1, %c0_28] : memref<2x32x32xf32, #tpu.memory_space<vmem>>, vector<2x16x32xf32>
    %47 = vector.extract_strided_slice %35 {offsets = [1, 0], sizes = [1, 32], strides = [1, 1]} : vector<17x32xf32> to vector<1x32xf32>
    %48 = vector.shape_cast %47 : vector<1x32xf32> to vector<1x1x32xf32>
    %49 = vector.broadcast %48 : vector<1x1x32xf32> to vector<2x16x32xf32>
    %50 = arith.mulf %46, %49 : vector<2x16x32xf32>
    %51 = arith.addf %45, %50 : vector<2x16x32xf32>
    %c0_29 = arith.constant 0 : index
    %c2 = arith.constant 2 : index
    %c0_30 = arith.constant 0 : index
    %52 = vector.load %arg16[%c0_29, %c2, %c0_30] : memref<2x32x32xf32, #tpu.memory_space<vmem>>, vector<2x16x32xf32>
    %53 = vector.extract_strided_slice %35 {offsets = [2, 0], sizes = [1, 32], strides = [1, 1]} : vector<17x32xf32> to vector<1x32xf32>
    %54 = vector.shape_cast %53 : vector<1x32xf32> to vector<1x1x32xf32>
    %55 = vector.broadcast %54 : vector<1x1x32xf32> to vector<2x16x32xf32>
    %56 = arith.mulf %52, %55 : vector<2x16x32xf32>
    %57 = arith.addf %51, %56 : vector<2x16x32xf32>
    %c0_31 = arith.constant 0 : index
    %c3 = arith.constant 3 : index
    %c0_32 = arith.constant 0 : index
    %58 = vector.load %arg16[%c0_31, %c3, %c0_32] : memref<2x32x32xf32, #tpu.memory_space<vmem>>, vector<2x16x32xf32>
    %59 = vector.extract_strided_slice %35 {offsets = [3, 0], sizes = [1, 32], strides = [1, 1]} : vector<17x32xf32> to vector<1x32xf32>
    %60 = vector.shape_cast %59 : vector<1x32xf32> to vector<1x1x32xf32>
    %61 = vector.broadcast %60 : vector<1x1x32xf32> to vector<2x16x32xf32>
    %62 = arith.mulf %58, %61 : vector<2x16x32xf32>
    %63 = arith.addf %57, %62 : vector<2x16x32xf32>
    %c0_33 = arith.constant 0 : index
    %c4 = arith.constant 4 : index
    %c0_34 = arith.constant 0 : index
    %64 = vector.load %arg16[%c0_33, %c4, %c0_34] : memref<2x32x32xf32, #tpu.memory_space<vmem>>, vector<2x16x32xf32>
    %65 = vector.extract_strided_slice %35 {offsets = [4, 0], sizes = [1, 32], strides = [1, 1]} : vector<17x32xf32> to vector<1x32xf32>
    %66 = vector.shape_cast %65 : vector<1x32xf32> to vector<1x1x32xf32>
    %67 = vector.broadcast %66 : vector<1x1x32xf32> to vector<2x16x32xf32>
    %68 = arith.mulf %64, %67 : vector<2x16x32xf32>
    %69 = arith.addf %63, %68 : vector<2x16x32xf32>
    %c0_35 = arith.constant 0 : index
    %c5 = arith.constant 5 : index
    %c0_36 = arith.constant 0 : index
    %70 = vector.load %arg16[%c0_35, %c5, %c0_36] : memref<2x32x32xf32, #tpu.memory_space<vmem>>, vector<2x16x32xf32>
    %71 = vector.extract_strided_slice %35 {offsets = [5, 0], sizes = [1, 32], strides = [1, 1]} : vector<17x32xf32> to vector<1x32xf32>
    %72 = vector.shape_cast %71 : vector<1x32xf32> to vector<1x1x32xf32>
    %73 = vector.broadcast %72 : vector<1x1x32xf32> to vector<2x16x32xf32>
    %74 = arith.mulf %70, %73 : vector<2x16x32xf32>
    %75 = arith.addf %69, %74 : vector<2x16x32xf32>
    %c0_37 = arith.constant 0 : index
    %c6 = arith.constant 6 : index
    %c0_38 = arith.constant 0 : index
    %76 = vector.load %arg16[%c0_37, %c6, %c0_38] : memref<2x32x32xf32, #tpu.memory_space<vmem>>, vector<2x16x32xf32>
    %77 = vector.extract_strided_slice %35 {offsets = [6, 0], sizes = [1, 32], strides = [1, 1]} : vector<17x32xf32> to vector<1x32xf32>
    %78 = vector.shape_cast %77 : vector<1x32xf32> to vector<1x1x32xf32>
    %79 = vector.broadcast %78 : vector<1x1x32xf32> to vector<2x16x32xf32>
    %80 = arith.mulf %76, %79 : vector<2x16x32xf32>
    %81 = arith.addf %75, %80 : vector<2x16x32xf32>
    %c0_39 = arith.constant 0 : index
    %c7 = arith.constant 7 : index
    %c0_40 = arith.constant 0 : index
    %82 = vector.load %arg16[%c0_39, %c7, %c0_40] : memref<2x32x32xf32, #tpu.memory_space<vmem>>, vector<2x16x32xf32>
    %83 = vector.extract_strided_slice %35 {offsets = [7, 0], sizes = [1, 32], strides = [1, 1]} : vector<17x32xf32> to vector<1x32xf32>
    %84 = vector.shape_cast %83 : vector<1x32xf32> to vector<1x1x32xf32>
    %85 = vector.broadcast %84 : vector<1x1x32xf32> to vector<2x16x32xf32>
    %86 = arith.mulf %82, %85 : vector<2x16x32xf32>
    %87 = arith.addf %81, %86 : vector<2x16x32xf32>
    %c0_41 = arith.constant 0 : index
    %c9 = arith.constant 9 : index
    %c0_42 = arith.constant 0 : index
    %88 = vector.load %arg16[%c0_41, %c9, %c0_42] : memref<2x32x32xf32, #tpu.memory_space<vmem>>, vector<2x16x32xf32>
    %89 = vector.extract_strided_slice %35 {offsets = [9, 0], sizes = [1, 32], strides = [1, 1]} : vector<17x32xf32> to vector<1x32xf32>
    %90 = vector.shape_cast %89 : vector<1x32xf32> to vector<1x1x32xf32>
    %91 = vector.broadcast %90 : vector<1x1x32xf32> to vector<2x16x32xf32>
    %92 = arith.mulf %88, %91 : vector<2x16x32xf32>
    %93 = arith.addf %87, %92 : vector<2x16x32xf32>
    %c0_43 = arith.constant 0 : index
    %c10 = arith.constant 10 : index
    %c0_44 = arith.constant 0 : index
    %94 = vector.load %arg16[%c0_43, %c10, %c0_44] : memref<2x32x32xf32, #tpu.memory_space<vmem>>, vector<2x16x32xf32>
    %95 = vector.extract_strided_slice %35 {offsets = [10, 0], sizes = [1, 32], strides = [1, 1]} : vector<17x32xf32> to vector<1x32xf32>
    %96 = vector.shape_cast %95 : vector<1x32xf32> to vector<1x1x32xf32>
    %97 = vector.broadcast %96 : vector<1x1x32xf32> to vector<2x16x32xf32>
    %98 = arith.mulf %94, %97 : vector<2x16x32xf32>
    %99 = arith.addf %93, %98 : vector<2x16x32xf32>
    %c0_45 = arith.constant 0 : index
    %c11 = arith.constant 11 : index
    %c0_46 = arith.constant 0 : index
    %100 = vector.load %arg16[%c0_45, %c11, %c0_46] : memref<2x32x32xf32, #tpu.memory_space<vmem>>, vector<2x16x32xf32>
    %101 = vector.extract_strided_slice %35 {offsets = [11, 0], sizes = [1, 32], strides = [1, 1]} : vector<17x32xf32> to vector<1x32xf32>
    %102 = vector.shape_cast %101 : vector<1x32xf32> to vector<1x1x32xf32>
    %103 = vector.broadcast %102 : vector<1x1x32xf32> to vector<2x16x32xf32>
    %104 = arith.mulf %100, %103 : vector<2x16x32xf32>
    %105 = arith.addf %99, %104 : vector<2x16x32xf32>
    %c0_47 = arith.constant 0 : index
    %c12 = arith.constant 12 : index
    %c0_48 = arith.constant 0 : index
    %106 = vector.load %arg16[%c0_47, %c12, %c0_48] : memref<2x32x32xf32, #tpu.memory_space<vmem>>, vector<2x16x32xf32>
    %107 = vector.extract_strided_slice %35 {offsets = [12, 0], sizes = [1, 32], strides = [1, 1]} : vector<17x32xf32> to vector<1x32xf32>
    %108 = vector.shape_cast %107 : vector<1x32xf32> to vector<1x1x32xf32>
    %109 = vector.broadcast %108 : vector<1x1x32xf32> to vector<2x16x32xf32>
    %110 = arith.mulf %106, %109 : vector<2x16x32xf32>
    %111 = arith.addf %105, %110 : vector<2x16x32xf32>
    %c0_49 = arith.constant 0 : index
    %c13 = arith.constant 13 : index
    %c0_50 = arith.constant 0 : index
    %112 = vector.load %arg16[%c0_49, %c13, %c0_50] : memref<2x32x32xf32, #tpu.memory_space<vmem>>, vector<2x16x32xf32>
    %113 = vector.extract_strided_slice %35 {offsets = [13, 0], sizes = [1, 32], strides = [1, 1]} : vector<17x32xf32> to vector<1x32xf32>
    %114 = vector.shape_cast %113 : vector<1x32xf32> to vector<1x1x32xf32>
    %115 = vector.broadcast %114 : vector<1x1x32xf32> to vector<2x16x32xf32>
    %116 = arith.mulf %112, %115 : vector<2x16x32xf32>
    %117 = arith.addf %111, %116 : vector<2x16x32xf32>
    %c0_51 = arith.constant 0 : index
    %c14 = arith.constant 14 : index
    %c0_52 = arith.constant 0 : index
    %118 = vector.load %arg16[%c0_51, %c14, %c0_52] : memref<2x32x32xf32, #tpu.memory_space<vmem>>, vector<2x16x32xf32>
    %119 = vector.extract_strided_slice %35 {offsets = [14, 0], sizes = [1, 32], strides = [1, 1]} : vector<17x32xf32> to vector<1x32xf32>
    %120 = vector.shape_cast %119 : vector<1x32xf32> to vector<1x1x32xf32>
    %121 = vector.broadcast %120 : vector<1x1x32xf32> to vector<2x16x32xf32>
    %122 = arith.mulf %118, %121 : vector<2x16x32xf32>
    %123 = arith.addf %117, %122 : vector<2x16x32xf32>
    %c0_53 = arith.constant 0 : index
    %c15 = arith.constant 15 : index
    %c0_54 = arith.constant 0 : index
    %124 = vector.load %arg16[%c0_53, %c15, %c0_54] : memref<2x32x32xf32, #tpu.memory_space<vmem>>, vector<2x16x32xf32>
    %125 = vector.extract_strided_slice %35 {offsets = [15, 0], sizes = [1, 32], strides = [1, 1]} : vector<17x32xf32> to vector<1x32xf32>
    %126 = vector.shape_cast %125 : vector<1x32xf32> to vector<1x1x32xf32>
    %127 = vector.broadcast %126 : vector<1x1x32xf32> to vector<2x16x32xf32>
    %128 = arith.mulf %124, %127 : vector<2x16x32xf32>
    %129 = arith.addf %123, %128 : vector<2x16x32xf32>
    %c0_55 = arith.constant 0 : index
    %c16 = arith.constant 16 : index
    %c0_56 = arith.constant 0 : index
    %130 = vector.load %arg16[%c0_55, %c16, %c0_56] : memref<2x32x32xf32, #tpu.memory_space<vmem>>, vector<2x16x32xf32>
    %131 = vector.extract_strided_slice %35 {offsets = [16, 0], sizes = [1, 32], strides = [1, 1]} : vector<17x32xf32> to vector<1x32xf32>
    %132 = vector.shape_cast %131 : vector<1x32xf32> to vector<1x1x32xf32>
    %133 = vector.broadcast %132 : vector<1x1x32xf32> to vector<2x16x32xf32>
    %134 = arith.mulf %130, %133 : vector<2x16x32xf32>
    %135 = arith.addf %129, %134 : vector<2x16x32xf32>
    %c0_57 = arith.constant 0 : index
    %c0_58 = arith.constant 0 : index
    %c0_59 = arith.constant 0 : index
    %136 = vector.load %arg5[%c0_57, %c0_58, %c0_59] : memref<9x1x32xf32, #tpu.memory_space<vmem>>, vector<1x1x32xf32>
    %137 = vector.shape_cast %136 : vector<1x1x32xf32> to vector<1x32xf32>
    %138 = vector.shape_cast %137 : vector<1x32xf32> to vector<1x1x32xf32>
    %139 = vector.broadcast %138 : vector<1x1x32xf32> to vector<2x16x32xf32>
    %140 = arith.addf %135, %139 : vector<2x16x32xf32>
    %141 = arith.mulf %140, %140 : vector<2x16x32xf32>
    %142 = arith.mulf %140, %141 : vector<2x16x32xf32>
    %cst_60 = arith.constant 4.471500e-02 : f32
    %143 = vector.broadcast %cst_60 : f32 to vector<2x16x32xf32>
    %144 = arith.mulf %143, %142 : vector<2x16x32xf32>
    %145 = arith.addf %140, %144 : vector<2x16x32xf32>
    %cst_61 = arith.constant 0.797884583 : f32
    %146 = vector.broadcast %cst_61 : f32 to vector<2x16x32xf32>
    %147 = arith.mulf %146, %145 : vector<2x16x32xf32>
    %148 = math.tanh %147 : vector<2x16x32xf32>
    %cst_62 = arith.constant 1.000000e+00 : f32
    %149 = vector.broadcast %cst_62 : f32 to vector<2x16x32xf32>
    %150 = arith.addf %149, %148 : vector<2x16x32xf32>
    %cst_63 = arith.constant 5.000000e-01 : f32
    %151 = vector.broadcast %cst_63 : f32 to vector<2x16x32xf32>
    %152 = arith.mulf %151, %150 : vector<2x16x32xf32>
    %153 = arith.mulf %140, %152 : vector<2x16x32xf32>
    %154 = vector.shape_cast %153 : vector<2x16x32xf32> to vector<32x32xf32>
    %155 = arith.truncf %154 : vector<32x32xf32> to vector<32x32xbf16>
    %c0_64 = arith.constant 0 : index
    %c0_65 = arith.constant 0 : index
    %c0_66 = arith.constant 0 : index
    %156 = vector.load %arg6[%c0_64, %c0_65, %c0_66] : memref<9x32x32xbf16, #tpu.memory_space<vmem>>, vector<1x32x32xbf16>
    %157 = vector.shape_cast %156 : vector<1x32x32xbf16> to vector<32x32xbf16>
    %cst_67 = arith.constant dense<0.000000e+00> : vector<32x32xf32>
    %158 = tpu.matmul %155, %157, %cst_67 {dimension_numbers = #tpu.dot_dimension_numbers<[1], [0], [0], [1], [0, 0, 1, 1], [], []>} : vector<32x32xbf16>, vector<32x32xbf16>, vector<32x32xf32> -> vector<32x32xf32>
    %159 = vector.shape_cast %158 : vector<32x32xf32> to vector<2x16x32xf32>
    %c0_68 = arith.constant 0 : index
    %c0_69 = arith.constant 0 : index
    %c0_70 = arith.constant 0 : index
    %160 = vector.load %arg7[%c0_68, %c0_69, %c0_70] : memref<9x1x32xf32, #tpu.memory_space<vmem>>, vector<1x1x32xf32>
    %161 = vector.shape_cast %160 : vector<1x1x32xf32> to vector<1x32xf32>
    %162 = vector.shape_cast %161 : vector<1x32xf32> to vector<1x1x32xf32>
    %163 = vector.broadcast %162 : vector<1x1x32xf32> to vector<2x16x32xf32>
    %164 = arith.addf %159, %163 : vector<2x16x32xf32>
    %165 = arith.addf %4, %164 : vector<2x16x32xf32>
    %c1_71 = arith.constant 1 : index
    %c0_72 = arith.constant 0 : index
    %c0_73 = arith.constant 0 : index
    %166 = vector.load %arg2[%c1_71, %c0_72, %c0_73] : memref<9x1x32xf32, #tpu.memory_space<vmem>>, vector<1x1x32xf32>
    %167 = vector.shape_cast %166 : vector<1x1x32xf32> to vector<1x32xf32>
    %c1_74 = arith.constant 1 : index
    %c0_75 = arith.constant 0 : index
    %c0_76 = arith.constant 0 : index
    %168 = vector.load %arg3[%c1_74, %c0_75, %c0_76] : memref<9x1x32xf32, #tpu.memory_space<vmem>>, vector<1x1x32xf32>
    %169 = vector.shape_cast %168 : vector<1x1x32xf32> to vector<1x32xf32>
    %cst_77 = arith.constant dense<0.000000e+00> : vector<2x16xf32>
    %170 = vector.multi_reduction <add>, %165, %cst_77 [2] : vector<2x16x32xf32> to vector<2x16xf32>
    %171 = vector.shape_cast %170 : vector<2x16xf32> to vector<2x16x1xf32>
    %cst_78 = arith.constant 3.200000e+01 : f32
    %172 = vector.broadcast %cst_78 : f32 to vector<2x16x1xf32>
    %173 = arith.divf %171, %172 : vector<2x16x1xf32>
    %174 = vector.broadcast %173 : vector<2x16x1xf32> to vector<2x16x32xf32>
    %175 = arith.subf %165, %174 : vector<2x16x32xf32>
    %176 = arith.mulf %175, %175 : vector<2x16x32xf32>
    %cst_79 = arith.constant dense<0.000000e+00> : vector<2x16xf32>
    %177 = vector.multi_reduction <add>, %176, %cst_79 [2] : vector<2x16x32xf32> to vector<2x16xf32>
    %178 = vector.shape_cast %177 : vector<2x16xf32> to vector<2x16x1xf32>
    %cst_80 = arith.constant 3.200000e+01 : f32
    %179 = vector.broadcast %cst_80 : f32 to vector<2x16x1xf32>
    %180 = arith.divf %178, %179 : vector<2x16x1xf32>
    %181 = vector.broadcast %173 : vector<2x16x1xf32> to vector<2x16x32xf32>
    %182 = arith.subf %165, %181 : vector<2x16x32xf32>
    %cst_81 = arith.constant 9.99999974E-6 : f32
    %183 = vector.broadcast %cst_81 : f32 to vector<2x16x1xf32>
    %184 = arith.addf %180, %183 : vector<2x16x1xf32>
    %185 = math.rsqrt %184 : vector<2x16x1xf32>
    %186 = vector.broadcast %185 : vector<2x16x1xf32> to vector<2x16x32xf32>
    %187 = arith.mulf %182, %186 : vector<2x16x32xf32>
    %188 = vector.shape_cast %167 : vector<1x32xf32> to vector<1x1x32xf32>
    %189 = vector.broadcast %188 : vector<1x1x32xf32> to vector<2x16x32xf32>
    %190 = arith.mulf %187, %189 : vector<2x16x32xf32>
    %191 = vector.shape_cast %169 : vector<1x32xf32> to vector<1x1x32xf32>
    %192 = vector.broadcast %191 : vector<1x1x32xf32> to vector<2x16x32xf32>
    %193 = arith.addf %190, %192 : vector<2x16x32xf32>
    %c0_82 = arith.constant 0 : index
    %c8_83 = arith.constant 8 : index
    %c0_84 = arith.constant 0 : index
    %194 = vector.load %arg16[%c0_82, %c8_83, %c0_84] : memref<2x32x32xf32, #tpu.memory_space<vmem>>, vector<2x16x32xf32>
    tpu.vector_store %arg16[%c0_82, %c8_83, %c0_84], %193 {strides = array<i32>} : memref<2x32x32xf32, #tpu.memory_space<vmem>>, vector<2x16x32xf32>,
    %c1_85 = arith.constant 1 : index
    %c0_86 = arith.constant 0 : index
    %c0_87 = arith.constant 0 : index
    %195 = vector.load %arg4[%c1_85, %c0_86, %c0_87] : memref<9x17x32xf32, #tpu.memory_space<vmem>>, vector<1x17x32xf32>
    %196 = vector.shape_cast %195 : vector<1x17x32xf32> to vector<17x32xf32>
    %197 = vector.extract_strided_slice %196 {offsets = [8, 0], sizes = [1, 32], strides = [1, 1]} : vector<17x32xf32> to vector<1x32xf32>
    %198 = vector.shape_cast %197 : vector<1x32xf32> to vector<1x1x32xf32>
    %199 = vector.broadcast %198 : vector<1x1x32xf32> to vector<2x16x32xf32>
    %200 = arith.mulf %193, %199 : vector<2x16x32xf32>
    %c0_88 = arith.constant 0 : index
    %c0_89 = arith.constant 0 : index
    %c0_90 = arith.constant 0 : index
    %201 = vector.load %arg16[%c0_88, %c0_89, %c0_90] : memref<2x32x32xf32, #tpu.memory_space<vmem>>, vector<2x16x32xf32>
    %202 = vector.extract_strided_slice %196 {offsets = [0, 0], sizes = [1, 32], strides = [1, 1]} : vector<17x32xf32> to vector<1x32xf32>
    %203 = vector.shape_cast %202 : vector<1x32xf32> to vector<1x1x32xf32>
    %204 = vector.broadcast %203 : vector<1x1x32xf32> to vector<2x16x32xf32>
    %205 = arith.mulf %201, %204 : vector<2x16x32xf32>
    %206 = arith.addf %200, %205 : vector<2x16x32xf32>
    %c0_91 = arith.constant 0 : index
    %c1_92 = arith.constant 1 : index
    %c0_93 = arith.constant 0 : index
    %207 = vector.load %arg16[%c0_91, %c1_92, %c0_93] : memref<2x32x32xf32, #tpu.memory_space<vmem>>, vector<2x16x32xf32>
    %208 = vector.extract_strided_slice %196 {offsets = [1, 0], sizes = [1, 32], strides = [1, 1]} : vector<17x32xf32> to vector<1x32xf32>
    %209 = vector.shape_cast %208 : vector<1x32xf32> to vector<1x1x32xf32>
    %210 = vector.broadcast %209 : vector<1x1x32xf32> to vector<2x16x32xf32>
    %211 = arith.mulf %207, %210 : vector<2x16x32xf32>
    %212 = arith.addf %206, %211 : vector<2x16x32xf32>
    %c0_94 = arith.constant 0 : index
    %c2_95 = arith.constant 2 : index
    %c0_96 = arith.constant 0 : index
    %213 = vector.load %arg16[%c0_94, %c2_95, %c0_96] : memref<2x32x32xf32, #tpu.memory_space<vmem>>, vector<2x16x32xf32>
    %214 = vector.extract_strided_slice %196 {offsets = [2, 0], sizes = [1, 32], strides = [1, 1]} : vector<17x32xf32> to vector<1x32xf32>
    %215 = vector.shape_cast %214 : vector<1x32xf32> to vector<1x1x32xf32>
    %216 = vector.broadcast %215 : vector<1x1x32xf32> to vector<2x16x32xf32>
    %217 = arith.mulf %213, %216 : vector<2x16x32xf32>
    %218 = arith.addf %212, %217 : vector<2x16x32xf32>
    %c0_97 = arith.constant 0 : index
    %c3_98 = arith.constant 3 : index
    %c0_99 = arith.constant 0 : index
    %219 = vector.load %arg16[%c0_97, %c3_98, %c0_99] : memref<2x32x32xf32, #tpu.memory_space<vmem>>, vector<2x16x32xf32>
    %220 = vector.extract_strided_slice %196 {offsets = [3, 0], sizes = [1, 32], strides = [1, 1]} : vector<17x32xf32> to vector<1x32xf32>
    %221 = vector.shape_cast %220 : vector<1x32xf32> to vector<1x1x32xf32>
    %222 = vector.broadcast %221 : vector<1x1x32xf32> to vector<2x16x32xf32>
    %223 = arith.mulf %219, %222 : vector<2x16x32xf32>
    %224 = arith.addf %218, %223 : vector<2x16x32xf32>
    %c0_100 = arith.constant 0 : index
    %c4_101 = arith.constant 4 : index
    %c0_102 = arith.constant 0 : index
    %225 = vector.load %arg16[%c0_100, %c4_101, %c0_102] : memref<2x32x32xf32, #tpu.memory_space<vmem>>, vector<2x16x32xf32>
    %226 = vector.extract_strided_slice %196 {offsets = [4, 0], sizes = [1, 32], strides = [1, 1]} : vector<17x32xf32> to vector<1x32xf32>
    %227 = vector.shape_cast %226 : vector<1x32xf32> to vector<1x1x32xf32>
    %228 = vector.broadcast %227 : vector<1x1x32xf32> to vector<2x16x32xf32>
    %229 = arith.mulf %225, %228 : vector<2x16x32xf32>
    %230 = arith.addf %224, %229 : vector<2x16x32xf32>
    %c0_103 = arith.constant 0 : index
    %c5_104 = arith.constant 5 : index
    %c0_105 = arith.constant 0 : index
    %231 = vector.load %arg16[%c0_103, %c5_104, %c0_105] : memref<2x32x32xf32, #tpu.memory_space<vmem>>, vector<2x16x32xf32>
    %232 = vector.extract_strided_slice %196 {offsets = [5, 0], sizes = [1, 32], strides = [1, 1]} : vector<17x32xf32> to vector<1x32xf32>
    %233 = vector.shape_cast %232 : vector<1x32xf32> to vector<1x1x32xf32>
    %234 = vector.broadcast %233 : vector<1x1x32xf32> to vector<2x16x32xf32>
    %235 = arith.mulf %231, %234 : vector<2x16x32xf32>
    %236 = arith.addf %230, %235 : vector<2x16x32xf32>
    %c0_106 = arith.constant 0 : index
    %c6_107 = arith.constant 6 : index
    %c0_108 = arith.constant 0 : index
    %237 = vector.load %arg16[%c0_106, %c6_107, %c0_108] : memref<2x32x32xf32, #tpu.memory_space<vmem>>, vector<2x16x32xf32>
    %238 = vector.extract_strided_slice %196 {offsets = [6, 0], sizes = [1, 32], strides = [1, 1]} : vector<17x32xf32> to vector<1x32xf32>
    %239 = vector.shape_cast %238 : vector<1x32xf32> to vector<1x1x32xf32>
    %240 = vector.broadcast %239 : vector<1x1x32xf32> to vector<2x16x32xf32>
    %241 = arith.mulf %237, %240 : vector<2x16x32xf32>
    %242 = arith.addf %236, %241 : vector<2x16x32xf32>
    %c0_109 = arith.constant 0 : index
    %c7_110 = arith.constant 7 : index
    %c0_111 = arith.constant 0 : index
    %243 = vector.load %arg16[%c0_109, %c7_110, %c0_111] : memref<2x32x32xf32, #tpu.memory_space<vmem>>, vector<2x16x32xf32>
    %244 = vector.extract_strided_slice %196 {offsets = [7, 0], sizes = [1, 32], strides = [1, 1]} : vector<17x32xf32> to vector<1x32xf32>
    %245 = vector.shape_cast %244 : vector<1x32xf32> to vector<1x1x32xf32>
    %246 = vector.broadcast %245 : vector<1x1x32xf32> to vector<2x16x32xf32>
    %247 = arith.mulf %243, %246 : vector<2x16x32xf32>
    %248 = arith.addf %242, %247 : vector<2x16x32xf32>
    %c0_112 = arith.constant 0 : index
    %c9_113 = arith.constant 9 : index
    %c0_114 = arith.constant 0 : index
    %249 = vector.load %arg16[%c0_112, %c9_113, %c0_114] : memref<2x32x32xf32, #tpu.memory_space<vmem>>, vector<2x16x32xf32>
    %250 = vector.extract_strided_slice %196 {offsets = [9, 0], sizes = [1, 32], strides = [1, 1]} : vector<17x32xf32> to vector<1x32xf32>
    %251 = vector.shape_cast %250 : vector<1x32xf32> to vector<1x1x32xf32>
    %252 = vector.broadcast %251 : vector<1x1x32xf32> to vector<2x16x32xf32>
    %253 = arith.mulf %249, %252 : vector<2x16x32xf32>
    %254 = arith.addf %248, %253 : vector<2x16x32xf32>
    %c0_115 = arith.constant 0 : index
    %c10_116 = arith.constant 10 : index
    %c0_117 = arith.constant 0 : index
    %255 = vector.load %arg16[%c0_115, %c10_116, %c0_117] : memref<2x32x32xf32, #tpu.memory_space<vmem>>, vector<2x16x32xf32>
    %256 = vector.extract_strided_slice %196 {offsets = [10, 0], sizes = [1, 32], strides = [1, 1]} : vector<17x32xf32> to vector<1x32xf32>
    %257 = vector.shape_cast %256 : vector<1x32xf32> to vector<1x1x32xf32>
    %258 = vector.broadcast %257 : vector<1x1x32xf32> to vector<2x16x32xf32>
    %259 = arith.mulf %255, %258 : vector<2x16x32xf32>
    %260 = arith.addf %254, %259 : vector<2x16x32xf32>
    %c0_118 = arith.constant 0 : index
    %c11_119 = arith.constant 11 : index
    %c0_120 = arith.constant 0 : index
    %261 = vector.load %arg16[%c0_118, %c11_119, %c0_120] : memref<2x32x32xf32, #tpu.memory_space<vmem>>, vector<2x16x32xf32>
    %262 = vector.extract_strided_slice %196 {offsets = [11, 0], sizes = [1, 32], strides = [1, 1]} : vector<17x32xf32> to vector<1x32xf32>
    %263 = vector.shape_cast %262 : vector<1x32xf32> to vector<1x1x32xf32>
    %264 = vector.broadcast %263 : vector<1x1x32xf32> to vector<2x16x32xf32>
    %265 = arith.mulf %261, %264 : vector<2x16x32xf32>
    %266 = arith.addf %260, %265 : vector<2x16x32xf32>
    %c0_121 = arith.constant 0 : index
    %c12_122 = arith.constant 12 : index
    %c0_123 = arith.constant 0 : index
    %267 = vector.load %arg16[%c0_121, %c12_122, %c0_123] : memref<2x32x32xf32, #tpu.memory_space<vmem>>, vector<2x16x32xf32>
    %268 = vector.extract_strided_slice %196 {offsets = [12, 0], sizes = [1, 32], strides = [1, 1]} : vector<17x32xf32> to vector<1x32xf32>
    %269 = vector.shape_cast %268 : vector<1x32xf32> to vector<1x1x32xf32>
    %270 = vector.broadcast %269 : vector<1x1x32xf32> to vector<2x16x32xf32>
    %271 = arith.mulf %267, %270 : vector<2x16x32xf32>
    %272 = arith.addf %266, %271 : vector<2x16x32xf32>
    %c0_124 = arith.constant 0 : index
    %c13_125 = arith.constant 13 : index
    %c0_126 = arith.constant 0 : index
    %273 = vector.load %arg16[%c0_124, %c13_125, %c0_126] : memref<2x32x32xf32, #tpu.memory_space<vmem>>, vector<2x16x32xf32>
    %274 = vector.extract_strided_slice %196 {offsets = [13, 0], sizes = [1, 32], strides = [1, 1]} : vector<17x32xf32> to vector<1x32xf32>
    %275 = vector.shape_cast %274 : vector<1x32xf32> to vector<1x1x32xf32>
    %276 = vector.broadcast %275 : vector<1x1x32xf32> to vector<2x16x32xf32>
    %277 = arith.mulf %273, %276 : vector<2x16x32xf32>
    %278 = arith.addf %272, %277 : vector<2x16x32xf32>
    %c0_127 = arith.constant 0 : index
    %c14_128 = arith.constant 14 : index
    %c0_129 = arith.constant 0 : index
    %279 = vector.load %arg16[%c0_127, %c14_128, %c0_129] : memref<2x32x32xf32, #tpu.memory_space<vmem>>, vector<2x16x32xf32>
    %280 = vector.extract_strided_slice %196 {offsets = [14, 0], sizes = [1, 32], strides = [1, 1]} : vector<17x32xf32> to vector<1x32xf32>
    %281 = vector.shape_cast %280 : vector<1x32xf32> to vector<1x1x32xf32>
    %282 = vector.broadcast %281 : vector<1x1x32xf32> to vector<2x16x32xf32>
    %283 = arith.mulf %279, %282 : vector<2x16x32xf32>
    %284 = arith.addf %278, %283 : vector<2x16x32xf32>
    %c0_130 = arith.constant 0 : index
    %c15_131 = arith.constant 15 : index
    %c0_132 = arith.constant 0 : index
    %285 = vector.load %arg16[%c0_130, %c15_131, %c0_132] : memref<2x32x32xf32, #tpu.memory_space<vmem>>, vector<2x16x32xf32>
    %286 = vector.extract_strided_slice %196 {offsets = [15, 0], sizes = [1, 32], strides = [1, 1]} : vector<17x32xf32> to vector<1x32xf32>
    %287 = vector.shape_cast %286 : vector<1x32xf32> to vector<1x1x32xf32>
    %288 = vector.broadcast %287 : vector<1x1x32xf32> to vector<2x16x32xf32>
    %289 = arith.mulf %285, %288 : vector<2x16x32xf32>
    %290 = arith.addf %284, %289 : vector<2x16x32xf32>
    %c0_133 = arith.constant 0 : index
    %c16_134 = arith.constant 16 : index
    %c0_135 = arith.constant 0 : index
    %291 = vector.load %arg16[%c0_133, %c16_134, %c0_135] : memref<2x32x32xf32, #tpu.memory_space<vmem>>, vector<2x16x32xf32>
    %292 = vector.extract_strided_slice %196 {offsets = [16, 0], sizes = [1, 32], strides = [1, 1]} : vector<17x32xf32> to vector<1x32xf32>
    %293 = vector.shape_cast %292 : vector<1x32xf32> to vector<1x1x32xf32>
    %294 = vector.broadcast %293 : vector<1x1x32xf32> to vector<2x16x32xf32>
    %295 = arith.mulf %291, %294 : vector<2x16x32xf32>
    %296 = arith.addf %290, %295 : vector<2x16x32xf32>
    %c1_136 = arith.constant 1 : index
    %c0_137 = arith.constant 0 : index
    %c0_138 = arith.constant 0 : index
    %297 = vector.load %arg5[%c1_136, %c0_137, %c0_138] : memref<9x1x32xf32, #tpu.memory_space<vmem>>, vector<1x1x32xf32>
    %298 = vector.shape_cast %297 : vector<1x1x32xf32> to vector<1x32xf32>
    %299 = vector.shape_cast %298 : vector<1x32xf32> to vector<1x1x32xf32>
    %300 = vector.broadcast %299 : vector<1x1x32xf32> to vector<2x16x32xf32>
    %301 = arith.addf %296, %300 : vector<2x16x32xf32>
    %302 = arith.mulf %301, %301 : vector<2x16x32xf32>
    %303 = arith.mulf %301, %302 : vector<2x16x32xf32>
    %cst_139 = arith.constant 4.471500e-02 : f32
    %304 = vector.broadcast %cst_139 : f32 to vector<2x16x32xf32>
    %305 = arith.mulf %304, %303 : vector<2x16x32xf32>
    %306 = arith.addf %301, %305 : vector<2x16x32xf32>
    %cst_140 = arith.constant 0.797884583 : f32
    %307 = vector.broadcast %cst_140 : f32 to vector<2x16x32xf32>
    %308 = arith.mulf %307, %306 : vector<2x16x32xf32>
    %309 = math.tanh %308 : vector<2x16x32xf32>
    %cst_141 = arith.constant 1.000000e+00 : f32
    %310 = vector.broadcast %cst_141 : f32 to vector<2x16x32xf32>
    %311 = arith.addf %310, %309 : vector<2x16x32xf32>
    %cst_142 = arith.constant 5.000000e-01 : f32
    %312 = vector.broadcast %cst_142 : f32 to vector<2x16x32xf32>
    %313 = arith.mulf %312, %311 : vector<2x16x32xf32>
    %314 = arith.mulf %301, %313 : vector<2x16x32xf32>
    %315 = vector.shape_cast %314 : vector<2x16x32xf32> to vector<32x32xf32>
    %316 = arith.truncf %315 : vector<32x32xf32> to vector<32x32xbf16>
    %c1_143 = arith.constant 1 : index
    %c0_144 = arith.constant 0 : index
    %c0_145 = arith.constant 0 : index
    %317 = vector.load %arg6[%c1_143, %c0_144, %c0_145] : memref<9x32x32xbf16, #tpu.memory_space<vmem>>, vector<1x32x32xbf16>
    %318 = vector.shape_cast %317 : vector<1x32x32xbf16> to vector<32x32xbf16>
    %cst_146 = arith.constant dense<0.000000e+00> : vector<32x32xf32>
    %319 = tpu.matmul %316, %318, %cst_146 {dimension_numbers = #tpu.dot_dimension_numbers<[1], [0], [0], [1], [0, 0, 1, 1], [], []>} : vector<32x32xbf16>, vector<32x32xbf16>, vector<32x32xf32> -> vector<32x32xf32>
    %320 = vector.shape_cast %319 : vector<32x32xf32> to vector<2x16x32xf32>
    %c1_147 = arith.constant 1 : index
    %c0_148 = arith.constant 0 : index
    %c0_149 = arith.constant 0 : index
    %321 = vector.load %arg7[%c1_147, %c0_148, %c0_149] : memref<9x1x32xf32, #tpu.memory_space<vmem>>, vector<1x1x32xf32>
    %322 = vector.shape_cast %321 : vector<1x1x32xf32> to vector<1x32xf32>
    %323 = vector.shape_cast %322 : vector<1x32xf32> to vector<1x1x32xf32>
    %324 = vector.broadcast %323 : vector<1x1x32xf32> to vector<2x16x32xf32>
    %325 = arith.addf %320, %324 : vector<2x16x32xf32>
    %326 = arith.addf %165, %325 : vector<2x16x32xf32>
    %c2_150 = arith.constant 2 : index
    %c0_151 = arith.constant 0 : index
    %c0_152 = arith.constant 0 : index
    %327 = vector.load %arg2[%c2_150, %c0_151, %c0_152] : memref<9x1x32xf32, #tpu.memory_space<vmem>>, vector<1x1x32xf32>
    %328 = vector.shape_cast %327 : vector<1x1x32xf32> to vector<1x32xf32>
    %c2_153 = arith.constant 2 : index
    %c0_154 = arith.constant 0 : index
    %c0_155 = arith.constant 0 : index
    %329 = vector.load %arg3[%c2_153, %c0_154, %c0_155] : memref<9x1x32xf32, #tpu.memory_space<vmem>>, vector<1x1x32xf32>
    %330 = vector.shape_cast %329 : vector<1x1x32xf32> to vector<1x32xf32>
    %cst_156 = arith.constant dense<0.000000e+00> : vector<2x16xf32>
    %331 = vector.multi_reduction <add>, %326, %cst_156 [2] : vector<2x16x32xf32> to vector<2x16xf32>
    %332 = vector.shape_cast %331 : vector<2x16xf32> to vector<2x16x1xf32>
    %cst_157 = arith.constant 3.200000e+01 : f32
    %333 = vector.broadcast %cst_157 : f32 to vector<2x16x1xf32>
    %334 = arith.divf %332, %333 : vector<2x16x1xf32>
    %335 = vector.broadcast %334 : vector<2x16x1xf32> to vector<2x16x32xf32>
    %336 = arith.subf %326, %335 : vector<2x16x32xf32>
    %337 = arith.mulf %336, %336 : vector<2x16x32xf32>
    %cst_158 = arith.constant dense<0.000000e+00> : vector<2x16xf32>
    %338 = vector.multi_reduction <add>, %337, %cst_158 [2] : vector<2x16x32xf32> to vector<2x16xf32>
    %339 = vector.shape_cast %338 : vector<2x16xf32> to vector<2x16x1xf32>
    %cst_159 = arith.constant 3.200000e+01 : f32
    %340 = vector.broadcast %cst_159 : f32 to vector<2x16x1xf32>
    %341 = arith.divf %339, %340 : vector<2x16x1xf32>
    %342 = vector.broadcast %334 : vector<2x16x1xf32> to vector<2x16x32xf32>
    %343 = arith.subf %326, %342 : vector<2x16x32xf32>
    %cst_160 = arith.constant 9.99999974E-6 : f32
    %344 = vector.broadcast %cst_160 : f32 to vector<2x16x1xf32>
    %345 = arith.addf %341, %344 : vector<2x16x1xf32>
    %346 = math.rsqrt %345 : vector<2x16x1xf32>
    %347 = vector.broadcast %346 : vector<2x16x1xf32> to vector<2x16x32xf32>
    %348 = arith.mulf %343, %347 : vector<2x16x32xf32>
    %349 = vector.shape_cast %328 : vector<1x32xf32> to vector<1x1x32xf32>
    %350 = vector.broadcast %349 : vector<1x1x32xf32> to vector<2x16x32xf32>
    %351 = arith.mulf %348, %350 : vector<2x16x32xf32>
    %352 = vector.shape_cast %330 : vector<1x32xf32> to vector<1x1x32xf32>
    %353 = vector.broadcast %352 : vector<1x1x32xf32> to vector<2x16x32xf32>
    %354 = arith.addf %351, %353 : vector<2x16x32xf32>
    %c0_161 = arith.constant 0 : index
    %c8_162 = arith.constant 8 : index
    %c0_163 = arith.constant 0 : index
    %355 = vector.load %arg16[%c0_161, %c8_162, %c0_163] : memref<2x32x32xf32, #tpu.memory_space<vmem>>, vector<2x16x32xf32>
    tpu.vector_store %arg16[%c0_161, %c8_162, %c0_163], %354 {strides = array<i32>} : memref<2x32x32xf32, #tpu.memory_space<vmem>>, vector<2x16x32xf32>,
    %c2_164 = arith.constant 2 : index
    %c0_165 = arith.constant 0 : index
    %c0_166 = arith.constant 0 : index
    %356 = vector.load %arg4[%c2_164, %c0_165, %c0_166] : memref<9x17x32xf32, #tpu.memory_space<vmem>>, vector<1x17x32xf32>
    %357 = vector.shape_cast %356 : vector<1x17x32xf32> to vector<17x32xf32>
    %358 = vector.extract_strided_slice %357 {offsets = [8, 0], sizes = [1, 32], strides = [1, 1]} : vector<17x32xf32> to vector<1x32xf32>
    %359 = vector.shape_cast %358 : vector<1x32xf32> to vector<1x1x32xf32>
    %360 = vector.broadcast %359 : vector<1x1x32xf32> to vector<2x16x32xf32>
    %361 = arith.mulf %354, %360 : vector<2x16x32xf32>
    %c0_167 = arith.constant 0 : index
    %c0_168 = arith.constant 0 : index
    %c0_169 = arith.constant 0 : index
    %362 = vector.load %arg16[%c0_167, %c0_168, %c0_169] : memref<2x32x32xf32, #tpu.memory_space<vmem>>, vector<2x16x32xf32>
    %363 = vector.extract_strided_slice %357 {offsets = [0, 0], sizes = [1, 32], strides = [1, 1]} : vector<17x32xf32> to vector<1x32xf32>
    %364 = vector.shape_cast %363 : vector<1x32xf32> to vector<1x1x32xf32>
    %365 = vector.broadcast %364 : vector<1x1x32xf32> to vector<2x16x32xf32>
    %366 = arith.mulf %362, %365 : vector<2x16x32xf32>
    %367 = arith.addf %361, %366 : vector<2x16x32xf32>
    %c0_170 = arith.constant 0 : index
    %c1_171 = arith.constant 1 : index
    %c0_172 = arith.constant 0 : index
    %368 = vector.load %arg16[%c0_170, %c1_171, %c0_172] : memref<2x32x32xf32, #tpu.memory_space<vmem>>, vector<2x16x32xf32>
    %369 = vector.extract_strided_slice %357 {offsets = [1, 0], sizes = [1, 32], strides = [1, 1]} : vector<17x32xf32> to vector<1x32xf32>
    %370 = vector.shape_cast %369 : vector<1x32xf32> to vector<1x1x32xf32>
    %371 = vector.broadcast %370 : vector<1x1x32xf32> to vector<2x16x32xf32>
    %372 = arith.mulf %368, %371 : vector<2x16x32xf32>
    %373 = arith.addf %367, %372 : vector<2x16x32xf32>
    %c0_173 = arith.constant 0 : index
    %c2_174 = arith.constant 2 : index
    %c0_175 = arith.constant 0 : index
    %374 = vector.load %arg16[%c0_173, %c2_174, %c0_175] : memref<2x32x32xf32, #tpu.memory_space<vmem>>, vector<2x16x32xf32>
    %375 = vector.extract_strided_slice %357 {offsets = [2, 0], sizes = [1, 32], strides = [1, 1]} : vector<17x32xf32> to vector<1x32xf32>
    %376 = vector.shape_cast %375 : vector<1x32xf32> to vector<1x1x32xf32>
    %377 = vector.broadcast %376 : vector<1x1x32xf32> to vector<2x16x32xf32>
    %378 = arith.mulf %374, %377 : vector<2x16x32xf32>
    %379 = arith.addf %373, %378 : vector<2x16x32xf32>
    %c0_176 = arith.constant 0 : index
    %c3_177 = arith.constant 3 : index
    %c0_178 = arith.constant 0 : index
    %380 = vector.load %arg16[%c0_176, %c3_177, %c0_178] : memref<2x32x32xf32, #tpu.memory_space<vmem>>, vector<2x16x32xf32>
    %381 = vector.extract_strided_slice %357 {offsets = [3, 0], sizes = [1, 32], strides = [1, 1]} : vector<17x32xf32> to vector<1x32xf32>
    %382 = vector.shape_cast %381 : vector<1x32xf32> to vector<1x1x32xf32>
    %383 = vector.broadcast %382 : vector<1x1x32xf32> to vector<2x16x32xf32>
    %384 = arith.mulf %380, %383 : vector<2x16x32xf32>
    %385 = arith.addf %379, %384 : vector<2x16x32xf32>
    %c0_179 = arith.constant 0 : index
    %c4_180 = arith.constant 4 : index
    %c0_181 = arith.constant 0 : index
    %386 = vector.load %arg16[%c0_179, %c4_180, %c0_181] : memref<2x32x32xf32, #tpu.memory_space<vmem>>, vector<2x16x32xf32>
    %387 = vector.extract_strided_slice %357 {offsets = [4, 0], sizes = [1, 32], strides = [1, 1]} : vector<17x32xf32> to vector<1x32xf32>
    %388 = vector.shape_cast %387 : vector<1x32xf32> to vector<1x1x32xf32>
    %389 = vector.broadcast %388 : vector<1x1x32xf32> to vector<2x16x32xf32>
    %390 = arith.mulf %386, %389 : vector<2x16x32xf32>
    %391 = arith.addf %385, %390 : vector<2x16x32xf32>
    %c0_182 = arith.constant 0 : index
    %c5_183 = arith.constant 5 : index
    %c0_184 = arith.constant 0 : index
    %392 = vector.load %arg16[%c0_182, %c5_183, %c0_184] : memref<2x32x32xf32, #tpu.memory_space<vmem>>, vector<2x16x32xf32>
    %393 = vector.extract_strided_slice %357 {offsets = [5, 0], sizes = [1, 32], strides = [1, 1]} : vector<17x32xf32> to vector<1x32xf32>
    %394 = vector.shape_cast %393 : vector<1x32xf32> to vector<1x1x32xf32>
    %395 = vector.broadcast %394 : vector<1x1x32xf32> to vector<2x16x32xf32>
    %396 = arith.mulf %392, %395 : vector<2x16x32xf32>
    %397 = arith.addf %391, %396 : vector<2x16x32xf32>
    %c0_185 = arith.constant 0 : index
    %c6_186 = arith.constant 6 : index
    %c0_187 = arith.constant 0 : index
    %398 = vector.load %arg16[%c0_185, %c6_186, %c0_187] : memref<2x32x32xf32, #tpu.memory_space<vmem>>, vector<2x16x32xf32>
    %399 = vector.extract_strided_slice %357 {offsets = [6, 0], sizes = [1, 32], strides = [1, 1]} : vector<17x32xf32> to vector<1x32xf32>
    %400 = vector.shape_cast %399 : vector<1x32xf32> to vector<1x1x32xf32>
    %401 = vector.broadcast %400 : vector<1x1x32xf32> to vector<2x16x32xf32>
    %402 = arith.mulf %398, %401 : vector<2x16x32xf32>
    %403 = arith.addf %397, %402 : vector<2x16x32xf32>
    %c0_188 = arith.constant 0 : index
    %c7_189 = arith.constant 7 : index
    %c0_190 = arith.constant 0 : index
    %404 = vector.load %arg16[%c0_188, %c7_189, %c0_190] : memref<2x32x32xf32, #tpu.memory_space<vmem>>, vector<2x16x32xf32>
    %405 = vector.extract_strided_slice %357 {offsets = [7, 0], sizes = [1, 32], strides = [1, 1]} : vector<17x32xf32> to vector<1x32xf32>
    %406 = vector.shape_cast %405 : vector<1x32xf32> to vector<1x1x32xf32>
    %407 = vector.broadcast %406 : vector<1x1x32xf32> to vector<2x16x32xf32>
    %408 = arith.mulf %404, %407 : vector<2x16x32xf32>
    %409 = arith.addf %403, %408 : vector<2x16x32xf32>
    %c0_191 = arith.constant 0 : index
    %c9_192 = arith.constant 9 : index
    %c0_193 = arith.constant 0 : index
    %410 = vector.load %arg16[%c0_191, %c9_192, %c0_193] : memref<2x32x32xf32, #tpu.memory_space<vmem>>, vector<2x16x32xf32>
    %411 = vector.extract_strided_slice %357 {offsets = [9, 0], sizes = [1, 32], strides = [1, 1]} : vector<17x32xf32> to vector<1x32xf32>
    %412 = vector.shape_cast %411 : vector<1x32xf32> to vector<1x1x32xf32>
    %413 = vector.broadcast %412 : vector<1x1x32xf32> to vector<2x16x32xf32>
    %414 = arith.mulf %410, %413 : vector<2x16x32xf32>
    %415 = arith.addf %409, %414 : vector<2x16x32xf32>
    %c0_194 = arith.constant 0 : index
    %c10_195 = arith.constant 10 : index
    %c0_196 = arith.constant 0 : index
    %416 = vector.load %arg16[%c0_194, %c10_195, %c0_196] : memref<2x32x32xf32, #tpu.memory_space<vmem>>, vector<2x16x32xf32>
    %417 = vector.extract_strided_slice %357 {offsets = [10, 0], sizes = [1, 32], strides = [1, 1]} : vector<17x32xf32> to vector<1x32xf32>
    %418 = vector.shape_cast %417 : vector<1x32xf32> to vector<1x1x32xf32>
    %419 = vector.broadcast %418 : vector<1x1x32xf32> to vector<2x16x32xf32>
    %420 = arith.mulf %416, %419 : vector<2x16x32xf32>
    %421 = arith.addf %415, %420 : vector<2x16x32xf32>
    %c0_197 = arith.constant 0 : index
    %c11_198 = arith.constant 11 : index
    %c0_199 = arith.constant 0 : index
    %422 = vector.load %arg16[%c0_197, %c11_198, %c0_199] : memref<2x32x32xf32, #tpu.memory_space<vmem>>, vector<2x16x32xf32>
    %423 = vector.extract_strided_slice %357 {offsets = [11, 0], sizes = [1, 32], strides = [1, 1]} : vector<17x32xf32> to vector<1x32xf32>
    %424 = vector.shape_cast %423 : vector<1x32xf32> to vector<1x1x32xf32>
    %425 = vector.broadcast %424 : vector<1x1x32xf32> to vector<2x16x32xf32>
    %426 = arith.mulf %422, %425 : vector<2x16x32xf32>
    %427 = arith.addf %421, %426 : vector<2x16x32xf32>
    %c0_200 = arith.constant 0 : index
    %c12_201 = arith.constant 12 : index
    %c0_202 = arith.constant 0 : index
    %428 = vector.load %arg16[%c0_200, %c12_201, %c0_202] : memref<2x32x32xf32, #tpu.memory_space<vmem>>, vector<2x16x32xf32>
    %429 = vector.extract_strided_slice %357 {offsets = [12, 0], sizes = [1, 32], strides = [1, 1]} : vector<17x32xf32> to vector<1x32xf32>
    %430 = vector.shape_cast %429 : vector<1x32xf32> to vector<1x1x32xf32>
    %431 = vector.broadcast %430 : vector<1x1x32xf32> to vector<2x16x32xf32>
    %432 = arith.mulf %428, %431 : vector<2x16x32xf32>
    %433 = arith.addf %427, %432 : vector<2x16x32xf32>
    %c0_203 = arith.constant 0 : index
    %c13_204 = arith.constant 13 : index
    %c0_205 = arith.constant 0 : index
    %434 = vector.load %arg16[%c0_203, %c13_204, %c0_205] : memref<2x32x32xf32, #tpu.memory_space<vmem>>, vector<2x16x32xf32>
    %435 = vector.extract_strided_slice %357 {offsets = [13, 0], sizes = [1, 32], strides = [1, 1]} : vector<17x32xf32> to vector<1x32xf32>
    %436 = vector.shape_cast %435 : vector<1x32xf32> to vector<1x1x32xf32>
    %437 = vector.broadcast %436 : vector<1x1x32xf32> to vector<2x16x32xf32>
    %438 = arith.mulf %434, %437 : vector<2x16x32xf32>
    %439 = arith.addf %433, %438 : vector<2x16x32xf32>
    %c0_206 = arith.constant 0 : index
    %c14_207 = arith.constant 14 : index
    %c0_208 = arith.constant 0 : index
    %440 = vector.load %arg16[%c0_206, %c14_207, %c0_208] : memref<2x32x32xf32, #tpu.memory_space<vmem>>, vector<2x16x32xf32>
    %441 = vector.extract_strided_slice %357 {offsets = [14, 0], sizes = [1, 32], strides = [1, 1]} : vector<17x32xf32> to vector<1x32xf32>
    %442 = vector.shape_cast %441 : vector<1x32xf32> to vector<1x1x32xf32>
    %443 = vector.broadcast %442 : vector<1x1x32xf32> to vector<2x16x32xf32>
    %444 = arith.mulf %440, %443 : vector<2x16x32xf32>
    %445 = arith.addf %439, %444 : vector<2x16x32xf32>
    %c0_209 = arith.constant 0 : index
    %c15_210 = arith.constant 15 : index
    %c0_211 = arith.constant 0 : index
    %446 = vector.load %arg16[%c0_209, %c15_210, %c0_211] : memref<2x32x32xf32, #tpu.memory_space<vmem>>, vector<2x16x32xf32>
    %447 = vector.extract_strided_slice %357 {offsets = [15, 0], sizes = [1, 32], strides = [1, 1]} : vector<17x32xf32> to vector<1x32xf32>
    %448 = vector.shape_cast %447 : vector<1x32xf32> to vector<1x1x32xf32>
    %449 = vector.broadcast %448 : vector<1x1x32xf32> to vector<2x16x32xf32>
    %450 = arith.mulf %446, %449 : vector<2x16x32xf32>
    %451 = arith.addf %445, %450 : vector<2x16x32xf32>
    %c0_212 = arith.constant 0 : index
    %c16_213 = arith.constant 16 : index
    %c0_214 = arith.constant 0 : index
    %452 = vector.load %arg16[%c0_212, %c16_213, %c0_214] : memref<2x32x32xf32, #tpu.memory_space<vmem>>, vector<2x16x32xf32>
    %453 = vector.extract_strided_slice %357 {offsets = [16, 0], sizes = [1, 32], strides = [1, 1]} : vector<17x32xf32> to vector<1x32xf32>
    %454 = vector.shape_cast %453 : vector<1x32xf32> to vector<1x1x32xf32>
    %455 = vector.broadcast %454 : vector<1x1x32xf32> to vector<2x16x32xf32>
    %456 = arith.mulf %452, %455 : vector<2x16x32xf32>
    %457 = arith.addf %451, %456 : vector<2x16x32xf32>
    %c2_215 = arith.constant 2 : index
    %c0_216 = arith.constant 0 : index
    %c0_217 = arith.constant 0 : index
    %458 = vector.load %arg5[%c2_215, %c0_216, %c0_217] : memref<9x1x32xf32, #tpu.memory_space<vmem>>, vector<1x1x32xf32>
    %459 = vector.shape_cast %458 : vector<1x1x32xf32> to vector<1x32xf32>
    %460 = vector.shape_cast %459 : vector<1x32xf32> to vector<1x1x32xf32>
    %461 = vector.broadcast %460 : vector<1x1x32xf32> to vector<2x16x32xf32>
    %462 = arith.addf %457, %461 : vector<2x16x32xf32>
    %463 = arith.mulf %462, %462 : vector<2x16x32xf32>
    %464 = arith.mulf %462, %463 : vector<2x16x32xf32>
    %cst_218 = arith.constant 4.471500e-02 : f32
    %465 = vector.broadcast %cst_218 : f32 to vector<2x16x32xf32>
    %466 = arith.mulf %465, %464 : vector<2x16x32xf32>
    %467 = arith.addf %462, %466 : vector<2x16x32xf32>
    %cst_219 = arith.constant 0.797884583 : f32
    %468 = vector.broadcast %cst_219 : f32 to vector<2x16x32xf32>
    %469 = arith.mulf %468, %467 : vector<2x16x32xf32>
    %470 = math.tanh %469 : vector<2x16x32xf32>
    %cst_220 = arith.constant 1.000000e+00 : f32
    %471 = vector.broadcast %cst_220 : f32 to vector<2x16x32xf32>
    %472 = arith.addf %471, %470 : vector<2x16x32xf32>
    %cst_221 = arith.constant 5.000000e-01 : f32
    %473 = vector.broadcast %cst_221 : f32 to vector<2x16x32xf32>
    %474 = arith.mulf %473, %472 : vector<2x16x32xf32>
    %475 = arith.mulf %462, %474 : vector<2x16x32xf32>
    %476 = vector.shape_cast %475 : vector<2x16x32xf32> to vector<32x32xf32>
    %477 = arith.truncf %476 : vector<32x32xf32> to vector<32x32xbf16>
    %c2_222 = arith.constant 2 : index
    %c0_223 = arith.constant 0 : index
    %c0_224 = arith.constant 0 : index
    %478 = vector.load %arg6[%c2_222, %c0_223, %c0_224] : memref<9x32x32xbf16, #tpu.memory_space<vmem>>, vector<1x32x32xbf16>
    %479 = vector.shape_cast %478 : vector<1x32x32xbf16> to vector<32x32xbf16>
    %cst_225 = arith.constant dense<0.000000e+00> : vector<32x32xf32>
    %480 = tpu.matmul %477, %479, %cst_225 {dimension_numbers = #tpu.dot_dimension_numbers<[1], [0], [0], [1], [0, 0, 1, 1], [], []>} : vector<32x32xbf16>, vector<32x32xbf16>, vector<32x32xf32> -> vector<32x32xf32>
    %481 = vector.shape_cast %480 : vector<32x32xf32> to vector<2x16x32xf32>
    %c2_226 = arith.constant 2 : index
    %c0_227 = arith.constant 0 : index
    %c0_228 = arith.constant 0 : index
    %482 = vector.load %arg7[%c2_226, %c0_227, %c0_228] : memref<9x1x32xf32, #tpu.memory_space<vmem>>, vector<1x1x32xf32>
    %483 = vector.shape_cast %482 : vector<1x1x32xf32> to vector<1x32xf32>
    %484 = vector.shape_cast %483 : vector<1x32xf32> to vector<1x1x32xf32>
    %485 = vector.broadcast %484 : vector<1x1x32xf32> to vector<2x16x32xf32>
    %486 = arith.addf %481, %485 : vector<2x16x32xf32>
    %487 = arith.addf %326, %486 : vector<2x16x32xf32>
    %c0_229 = arith.constant 0 : index
    %c0_230 = arith.constant 0 : index
    %c0_231 = arith.constant 0 : index
    %488 = vector.load %arg8[%c0_229, %c0_230, %c0_231] : memref<2x1x32xf32, #tpu.memory_space<vmem>>, vector<1x1x32xf32>
    %489 = vector.shape_cast %488 : vector<1x1x32xf32> to vector<1x32xf32>
    %c0_232 = arith.constant 0 : index
    %c0_233 = arith.constant 0 : index
    %c0_234 = arith.constant 0 : index
    %490 = vector.load %arg9[%c0_232, %c0_233, %c0_234] : memref<2x1x32xf32, #tpu.memory_space<vmem>>, vector<1x1x32xf32>
    %491 = vector.shape_cast %490 : vector<1x1x32xf32> to vector<1x32xf32>
    %cst_235 = arith.constant dense<0.000000e+00> : vector<2x16xf32>
    %492 = vector.multi_reduction <add>, %487, %cst_235 [2] : vector<2x16x32xf32> to vector<2x16xf32>
    %493 = vector.shape_cast %492 : vector<2x16xf32> to vector<2x16x1xf32>
    %cst_236 = arith.constant 3.200000e+01 : f32
    %494 = vector.broadcast %cst_236 : f32 to vector<2x16x1xf32>
    %495 = arith.divf %493, %494 : vector<2x16x1xf32>
    %496 = vector.broadcast %495 : vector<2x16x1xf32> to vector<2x16x32xf32>
    %497 = arith.subf %487, %496 : vector<2x16x32xf32>
    %498 = arith.mulf %497, %497 : vector<2x16x32xf32>
    %cst_237 = arith.constant dense<0.000000e+00> : vector<2x16xf32>
    %499 = vector.multi_reduction <add>, %498, %cst_237 [2] : vector<2x16x32xf32> to vector<2x16xf32>
    %500 = vector.shape_cast %499 : vector<2x16xf32> to vector<2x16x1xf32>
    %cst_238 = arith.constant 3.200000e+01 : f32
    %501 = vector.broadcast %cst_238 : f32 to vector<2x16x1xf32>
    %502 = arith.divf %500, %501 : vector<2x16x1xf32>
    %503 = vector.broadcast %495 : vector<2x16x1xf32> to vector<2x16x32xf32>
    %504 = arith.subf %487, %503 : vector<2x16x32xf32>
    %cst_239 = arith.constant 9.99999974E-6 : f32
    %505 = vector.broadcast %cst_239 : f32 to vector<2x16x1xf32>
    %506 = arith.addf %502, %505 : vector<2x16x1xf32>
    %507 = math.rsqrt %506 : vector<2x16x1xf32>
    %508 = vector.broadcast %507 : vector<2x16x1xf32> to vector<2x16x32xf32>
    %509 = arith.mulf %504, %508 : vector<2x16x32xf32>
    %510 = vector.shape_cast %489 : vector<1x32xf32> to vector<1x1x32xf32>
    %511 = vector.broadcast %510 : vector<1x1x32xf32> to vector<2x16x32xf32>
    %512 = arith.mulf %509, %511 : vector<2x16x32xf32>
    %513 = vector.shape_cast %491 : vector<1x32xf32> to vector<1x1x32xf32>
    %514 = vector.broadcast %513 : vector<1x1x32xf32> to vector<2x16x32xf32>
    %515 = arith.addf %512, %514 : vector<2x16x32xf32>
    %c3_240 = arith.constant 3 : index
    %c0_241 = arith.constant 0 : index
    %c0_242 = arith.constant 0 : index
    %516 = vector.load %arg2[%c3_240, %c0_241, %c0_242] : memref<9x1x32xf32, #tpu.memory_space<vmem>>, vector<1x1x32xf32>
    %517 = vector.shape_cast %516 : vector<1x1x32xf32> to vector<1x32xf32>
    %c3_243 = arith.constant 3 : index
    %c0_244 = arith.constant 0 : index
    %c0_245 = arith.constant 0 : index
    %518 = vector.load %arg3[%c3_243, %c0_244, %c0_245] : memref<9x1x32xf32, #tpu.memory_space<vmem>>, vector<1x1x32xf32>
    %519 = vector.shape_cast %518 : vector<1x1x32xf32> to vector<1x32xf32>
    %cst_246 = arith.constant dense<0.000000e+00> : vector<2x16xf32>
    %520 = vector.multi_reduction <add>, %515, %cst_246 [2] : vector<2x16x32xf32> to vector<2x16xf32>
    %521 = vector.shape_cast %520 : vector<2x16xf32> to vector<2x16x1xf32>
    %cst_247 = arith.constant 3.200000e+01 : f32
    %522 = vector.broadcast %cst_247 : f32 to vector<2x16x1xf32>
    %523 = arith.divf %521, %522 : vector<2x16x1xf32>
    %524 = vector.broadcast %523 : vector<2x16x1xf32> to vector<2x16x32xf32>
    %525 = arith.subf %515, %524 : vector<2x16x32xf32>
    %526 = arith.mulf %525, %525 : vector<2x16x32xf32>
    %cst_248 = arith.constant dense<0.000000e+00> : vector<2x16xf32>
    %527 = vector.multi_reduction <add>, %526, %cst_248 [2] : vector<2x16x32xf32> to vector<2x16xf32>
    %528 = vector.shape_cast %527 : vector<2x16xf32> to vector<2x16x1xf32>
    %cst_249 = arith.constant 3.200000e+01 : f32
    %529 = vector.broadcast %cst_249 : f32 to vector<2x16x1xf32>
    %530 = arith.divf %528, %529 : vector<2x16x1xf32>
    %531 = vector.broadcast %523 : vector<2x16x1xf32> to vector<2x16x32xf32>
    %532 = arith.subf %515, %531 : vector<2x16x32xf32>
    %cst_250 = arith.constant 9.99999974E-6 : f32
    %533 = vector.broadcast %cst_250 : f32 to vector<2x16x1xf32>
    %534 = arith.addf %530, %533 : vector<2x16x1xf32>
    %535 = math.rsqrt %534 : vector<2x16x1xf32>
    %536 = vector.broadcast %535 : vector<2x16x1xf32> to vector<2x16x32xf32>
    %537 = arith.mulf %532, %536 : vector<2x16x32xf32>
    %538 = vector.shape_cast %517 : vector<1x32xf32> to vector<1x1x32xf32>
    %539 = vector.broadcast %538 : vector<1x1x32xf32> to vector<2x16x32xf32>
    %540 = arith.mulf %537, %539 : vector<2x16x32xf32>
    %541 = vector.shape_cast %519 : vector<1x32xf32> to vector<1x1x32xf32>
    %542 = vector.broadcast %541 : vector<1x1x32xf32> to vector<2x16x32xf32>
    %543 = arith.addf %540, %542 : vector<2x16x32xf32>
    %c0_251 = arith.constant 0 : index
    %c8_252 = arith.constant 8 : index
    %c0_253 = arith.constant 0 : index
    %544 = vector.load %arg16[%c0_251, %c8_252, %c0_253] : memref<2x32x32xf32, #tpu.memory_space<vmem>>, vector<2x16x32xf32>
    tpu.vector_store %arg16[%c0_251, %c8_252, %c0_253], %543 {strides = array<i32>} : memref<2x32x32xf32, #tpu.memory_space<vmem>>, vector<2x16x32xf32>,
    %c3_254 = arith.constant 3 : index
    %c0_255 = arith.constant 0 : index
    %c0_256 = arith.constant 0 : index
    %545 = vector.load %arg4[%c3_254, %c0_255, %c0_256] : memref<9x17x32xf32, #tpu.memory_space<vmem>>, vector<1x17x32xf32>
    %546 = vector.shape_cast %545 : vector<1x17x32xf32> to vector<17x32xf32>
    %547 = vector.extract_strided_slice %546 {offsets = [8, 0], sizes = [1, 32], strides = [1, 1]} : vector<17x32xf32> to vector<1x32xf32>
    %548 = vector.shape_cast %547 : vector<1x32xf32> to vector<1x1x32xf32>
    %549 = vector.broadcast %548 : vector<1x1x32xf32> to vector<2x16x32xf32>
    %550 = arith.mulf %543, %549 : vector<2x16x32xf32>
    %c0_257 = arith.constant 0 : index
    %c7_258 = arith.constant 7 : index
    %c0_259 = arith.constant 0 : index
    %551 = vector.load %arg16[%c0_257, %c7_258, %c0_259] : memref<2x32x32xf32, #tpu.memory_space<vmem>>, vector<2x16x32xf32>
    %552 = vector.extract_strided_slice %546 {offsets = [7, 0], sizes = [1, 32], strides = [1, 1]} : vector<17x32xf32> to vector<1x32xf32>
    %553 = vector.shape_cast %552 : vector<1x32xf32> to vector<1x1x32xf32>
    %554 = vector.broadcast %553 : vector<1x1x32xf32> to vector<2x16x32xf32>
    %555 = arith.mulf %551, %554 : vector<2x16x32xf32>
    %556 = arith.addf %550, %555 : vector<2x16x32xf32>
    %c0_260 = arith.constant 0 : index
    %c9_261 = arith.constant 9 : index
    %c0_262 = arith.constant 0 : index
    %557 = vector.load %arg16[%c0_260, %c9_261, %c0_262] : memref<2x32x32xf32, #tpu.memory_space<vmem>>, vector<2x16x32xf32>
    %558 = vector.extract_strided_slice %546 {offsets = [9, 0], sizes = [1, 32], strides = [1, 1]} : vector<17x32xf32> to vector<1x32xf32>
    %559 = vector.shape_cast %558 : vector<1x32xf32> to vector<1x1x32xf32>
    %560 = vector.broadcast %559 : vector<1x1x32xf32> to vector<2x16x32xf32>
    %561 = arith.mulf %557, %560 : vector<2x16x32xf32>
    %562 = arith.addf %556, %561 : vector<2x16x32xf32>
    %c3_263 = arith.constant 3 : index
    %c0_264 = arith.constant 0 : index
    %c0_265 = arith.constant 0 : index
    %563 = vector.load %arg5[%c3_263, %c0_264, %c0_265] : memref<9x1x32xf32, #tpu.memory_space<vmem>>, vector<1x1x32xf32>
    %564 = vector.shape_cast %563 : vector<1x1x32xf32> to vector<1x32xf32>
    %565 = vector.shape_cast %564 : vector<1x32xf32> to vector<1x1x32xf32>
    %566 = vector.broadcast %565 : vector<1x1x32xf32> to vector<2x16x32xf32>
    %567 = arith.addf %562, %566 : vector<2x16x32xf32>
    %568 = arith.mulf %567, %567 : vector<2x16x32xf32>
    %569 = arith.mulf %567, %568 : vector<2x16x32xf32>
    %cst_266 = arith.constant 4.471500e-02 : f32
    %570 = vector.broadcast %cst_266 : f32 to vector<2x16x32xf32>
    %571 = arith.mulf %570, %569 : vector<2x16x32xf32>
    %572 = arith.addf %567, %571 : vector<2x16x32xf32>
    %cst_267 = arith.constant 0.797884583 : f32
    %573 = vector.broadcast %cst_267 : f32 to vector<2x16x32xf32>
    %574 = arith.mulf %573, %572 : vector<2x16x32xf32>
    %575 = math.tanh %574 : vector<2x16x32xf32>
    %cst_268 = arith.constant 1.000000e+00 : f32
    %576 = vector.broadcast %cst_268 : f32 to vector<2x16x32xf32>
    %577 = arith.addf %576, %575 : vector<2x16x32xf32>
    %cst_269 = arith.constant 5.000000e-01 : f32
    %578 = vector.broadcast %cst_269 : f32 to vector<2x16x32xf32>
    %579 = arith.mulf %578, %577 : vector<2x16x32xf32>
    %580 = arith.mulf %567, %579 : vector<2x16x32xf32>
    %581 = vector.shape_cast %580 : vector<2x16x32xf32> to vector<32x32xf32>
    %582 = arith.truncf %581 : vector<32x32xf32> to vector<32x32xbf16>
    %c3_270 = arith.constant 3 : index
    %c0_271 = arith.constant 0 : index
    %c0_272 = arith.constant 0 : index
    %583 = vector.load %arg6[%c3_270, %c0_271, %c0_272] : memref<9x32x32xbf16, #tpu.memory_space<vmem>>, vector<1x32x32xbf16>
    %584 = vector.shape_cast %583 : vector<1x32x32xbf16> to vector<32x32xbf16>
    %cst_273 = arith.constant dense<0.000000e+00> : vector<32x32xf32>
    %585 = tpu.matmul %582, %584, %cst_273 {dimension_numbers = #tpu.dot_dimension_numbers<[1], [0], [0], [1], [0, 0, 1, 1], [], []>} : vector<32x32xbf16>, vector<32x32xbf16>, vector<32x32xf32> -> vector<32x32xf32>
    %586 = vector.shape_cast %585 : vector<32x32xf32> to vector<2x16x32xf32>
    %c3_274 = arith.constant 3 : index
    %c0_275 = arith.constant 0 : index
    %c0_276 = arith.constant 0 : index
    %587 = vector.load %arg7[%c3_274, %c0_275, %c0_276] : memref<9x1x32xf32, #tpu.memory_space<vmem>>, vector<1x1x32xf32>
    %588 = vector.shape_cast %587 : vector<1x1x32xf32> to vector<1x32xf32>
    %589 = vector.shape_cast %588 : vector<1x32xf32> to vector<1x1x32xf32>
    %590 = vector.broadcast %589 : vector<1x1x32xf32> to vector<2x16x32xf32>
    %591 = arith.addf %586, %590 : vector<2x16x32xf32>
    %592 = arith.addf %515, %591 : vector<2x16x32xf32>
    %c4_277 = arith.constant 4 : index
    %c0_278 = arith.constant 0 : index
    %c0_279 = arith.constant 0 : index
    %593 = vector.load %arg2[%c4_277, %c0_278, %c0_279] : memref<9x1x32xf32, #tpu.memory_space<vmem>>, vector<1x1x32xf32>
    %594 = vector.shape_cast %593 : vector<1x1x32xf32> to vector<1x32xf32>
    %c4_280 = arith.constant 4 : index
    %c0_281 = arith.constant 0 : index
    %c0_282 = arith.constant 0 : index
    %595 = vector.load %arg3[%c4_280, %c0_281, %c0_282] : memref<9x1x32xf32, #tpu.memory_space<vmem>>, vector<1x1x32xf32>
    %596 = vector.shape_cast %595 : vector<1x1x32xf32> to vector<1x32xf32>
    %cst_283 = arith.constant dense<0.000000e+00> : vector<2x16xf32>
    %597 = vector.multi_reduction <add>, %592, %cst_283 [2] : vector<2x16x32xf32> to vector<2x16xf32>
    %598 = vector.shape_cast %597 : vector<2x16xf32> to vector<2x16x1xf32>
    %cst_284 = arith.constant 3.200000e+01 : f32
    %599 = vector.broadcast %cst_284 : f32 to vector<2x16x1xf32>
    %600 = arith.divf %598, %599 : vector<2x16x1xf32>
    %601 = vector.broadcast %600 : vector<2x16x1xf32> to vector<2x16x32xf32>
    %602 = arith.subf %592, %601 : vector<2x16x32xf32>
    %603 = arith.mulf %602, %602 : vector<2x16x32xf32>
    %cst_285 = arith.constant dense<0.000000e+00> : vector<2x16xf32>
    %604 = vector.multi_reduction <add>, %603, %cst_285 [2] : vector<2x16x32xf32> to vector<2x16xf32>
    %605 = vector.shape_cast %604 : vector<2x16xf32> to vector<2x16x1xf32>
    %cst_286 = arith.constant 3.200000e+01 : f32
    %606 = vector.broadcast %cst_286 : f32 to vector<2x16x1xf32>
    %607 = arith.divf %605, %606 : vector<2x16x1xf32>
    %608 = vector.broadcast %600 : vector<2x16x1xf32> to vector<2x16x32xf32>
    %609 = arith.subf %592, %608 : vector<2x16x32xf32>
    %cst_287 = arith.constant 9.99999974E-6 : f32
    %610 = vector.broadcast %cst_287 : f32 to vector<2x16x1xf32>
    %611 = arith.addf %607, %610 : vector<2x16x1xf32>
    %612 = math.rsqrt %611 : vector<2x16x1xf32>
    %613 = vector.broadcast %612 : vector<2x16x1xf32> to vector<2x16x32xf32>
    %614 = arith.mulf %609, %613 : vector<2x16x32xf32>
    %615 = vector.shape_cast %594 : vector<1x32xf32> to vector<1x1x32xf32>
    %616 = vector.broadcast %615 : vector<1x1x32xf32> to vector<2x16x32xf32>
    %617 = arith.mulf %614, %616 : vector<2x16x32xf32>
    %618 = vector.shape_cast %596 : vector<1x32xf32> to vector<1x1x32xf32>
    %619 = vector.broadcast %618 : vector<1x1x32xf32> to vector<2x16x32xf32>
    %620 = arith.addf %617, %619 : vector<2x16x32xf32>
    %c0_288 = arith.constant 0 : index
    %c8_289 = arith.constant 8 : index
    %c0_290 = arith.constant 0 : index
    %621 = vector.load %arg16[%c0_288, %c8_289, %c0_290] : memref<2x32x32xf32, #tpu.memory_space<vmem>>, vector<2x16x32xf32>
    tpu.vector_store %arg16[%c0_288, %c8_289, %c0_290], %620 {strides = array<i32>} : memref<2x32x32xf32, #tpu.memory_space<vmem>>, vector<2x16x32xf32>,
    %c4_291 = arith.constant 4 : index
    %c0_292 = arith.constant 0 : index
    %c0_293 = arith.constant 0 : index
    %622 = vector.load %arg4[%c4_291, %c0_292, %c0_293] : memref<9x17x32xf32, #tpu.memory_space<vmem>>, vector<1x17x32xf32>
    %623 = vector.shape_cast %622 : vector<1x17x32xf32> to vector<17x32xf32>
    %624 = vector.extract_strided_slice %623 {offsets = [8, 0], sizes = [1, 32], strides = [1, 1]} : vector<17x32xf32> to vector<1x32xf32>
    %625 = vector.shape_cast %624 : vector<1x32xf32> to vector<1x1x32xf32>
    %626 = vector.broadcast %625 : vector<1x1x32xf32> to vector<2x16x32xf32>
    %627 = arith.mulf %620, %626 : vector<2x16x32xf32>
    %c0_294 = arith.constant 0 : index
    %c7_295 = arith.constant 7 : index
    %c0_296 = arith.constant 0 : index
    %628 = vector.load %arg16[%c0_294, %c7_295, %c0_296] : memref<2x32x32xf32, #tpu.memory_space<vmem>>, vector<2x16x32xf32>
    %629 = vector.extract_strided_slice %623 {offsets = [7, 0], sizes = [1, 32], strides = [1, 1]} : vector<17x32xf32> to vector<1x32xf32>
    %630 = vector.shape_cast %629 : vector<1x32xf32> to vector<1x1x32xf32>
    %631 = vector.broadcast %630 : vector<1x1x32xf32> to vector<2x16x32xf32>
    %632 = arith.mulf %628, %631 : vector<2x16x32xf32>
    %633 = arith.addf %627, %632 : vector<2x16x32xf32>
    %c0_297 = arith.constant 0 : index
    %c9_298 = arith.constant 9 : index
    %c0_299 = arith.constant 0 : index
    %634 = vector.load %arg16[%c0_297, %c9_298, %c0_299] : memref<2x32x32xf32, #tpu.memory_space<vmem>>, vector<2x16x32xf32>
    %635 = vector.extract_strided_slice %623 {offsets = [9, 0], sizes = [1, 32], strides = [1, 1]} : vector<17x32xf32> to vector<1x32xf32>
    %636 = vector.shape_cast %635 : vector<1x32xf32> to vector<1x1x32xf32>
    %637 = vector.broadcast %636 : vector<1x1x32xf32> to vector<2x16x32xf32>
    %638 = arith.mulf %634, %637 : vector<2x16x32xf32>
    %639 = arith.addf %633, %638 : vector<2x16x32xf32>
    %c4_300 = arith.constant 4 : index
    %c0_301 = arith.constant 0 : index
    %c0_302 = arith.constant 0 : index
    %640 = vector.load %arg5[%c4_300, %c0_301, %c0_302] : memref<9x1x32xf32, #tpu.memory_space<vmem>>, vector<1x1x32xf32>
    %641 = vector.shape_cast %640 : vector<1x1x32xf32> to vector<1x32xf32>
    %642 = vector.shape_cast %641 : vector<1x32xf32> to vector<1x1x32xf32>
    %643 = vector.broadcast %642 : vector<1x1x32xf32> to vector<2x16x32xf32>
    %644 = arith.addf %639, %643 : vector<2x16x32xf32>
    %645 = arith.mulf %644, %644 : vector<2x16x32xf32>
    %646 = arith.mulf %644, %645 : vector<2x16x32xf32>
    %cst_303 = arith.constant 4.471500e-02 : f32
    %647 = vector.broadcast %cst_303 : f32 to vector<2x16x32xf32>
    %648 = arith.mulf %647, %646 : vector<2x16x32xf32>
    %649 = arith.addf %644, %648 : vector<2x16x32xf32>
    %cst_304 = arith.constant 0.797884583 : f32
    %650 = vector.broadcast %cst_304 : f32 to vector<2x16x32xf32>
    %651 = arith.mulf %650, %649 : vector<2x16x32xf32>
    %652 = math.tanh %651 : vector<2x16x32xf32>
    %cst_305 = arith.constant 1.000000e+00 : f32
    %653 = vector.broadcast %cst_305 : f32 to vector<2x16x32xf32>
    %654 = arith.addf %653, %652 : vector<2x16x32xf32>
    %cst_306 = arith.constant 5.000000e-01 : f32
    %655 = vector.broadcast %cst_306 : f32 to vector<2x16x32xf32>
    %656 = arith.mulf %655, %654 : vector<2x16x32xf32>
    %657 = arith.mulf %644, %656 : vector<2x16x32xf32>
    %658 = vector.shape_cast %657 : vector<2x16x32xf32> to vector<32x32xf32>
    %659 = arith.truncf %658 : vector<32x32xf32> to vector<32x32xbf16>
    %c4_307 = arith.constant 4 : index
    %c0_308 = arith.constant 0 : index
    %c0_309 = arith.constant 0 : index
    %660 = vector.load %arg6[%c4_307, %c0_308, %c0_309] : memref<9x32x32xbf16, #tpu.memory_space<vmem>>, vector<1x32x32xbf16>
    %661 = vector.shape_cast %660 : vector<1x32x32xbf16> to vector<32x32xbf16>
    %cst_310 = arith.constant dense<0.000000e+00> : vector<32x32xf32>
    %662 = tpu.matmul %659, %661, %cst_310 {dimension_numbers = #tpu.dot_dimension_numbers<[1], [0], [0], [1], [0, 0, 1, 1], [], []>} : vector<32x32xbf16>, vector<32x32xbf16>, vector<32x32xf32> -> vector<32x32xf32>
    %663 = vector.shape_cast %662 : vector<32x32xf32> to vector<2x16x32xf32>
    %c4_311 = arith.constant 4 : index
    %c0_312 = arith.constant 0 : index
    %c0_313 = arith.constant 0 : index
    %664 = vector.load %arg7[%c4_311, %c0_312, %c0_313] : memref<9x1x32xf32, #tpu.memory_space<vmem>>, vector<1x1x32xf32>
    %665 = vector.shape_cast %664 : vector<1x1x32xf32> to vector<1x32xf32>
    %666 = vector.shape_cast %665 : vector<1x32xf32> to vector<1x1x32xf32>
    %667 = vector.broadcast %666 : vector<1x1x32xf32> to vector<2x16x32xf32>
    %668 = arith.addf %663, %667 : vector<2x16x32xf32>
    %669 = arith.addf %592, %668 : vector<2x16x32xf32>
    %c5_314 = arith.constant 5 : index
    %c0_315 = arith.constant 0 : index
    %c0_316 = arith.constant 0 : index
    %670 = vector.load %arg2[%c5_314, %c0_315, %c0_316] : memref<9x1x32xf32, #tpu.memory_space<vmem>>, vector<1x1x32xf32>
    %671 = vector.shape_cast %670 : vector<1x1x32xf32> to vector<1x32xf32>
    %c5_317 = arith.constant 5 : index
    %c0_318 = arith.constant 0 : index
    %c0_319 = arith.constant 0 : index
    %672 = vector.load %arg3[%c5_317, %c0_318, %c0_319] : memref<9x1x32xf32, #tpu.memory_space<vmem>>, vector<1x1x32xf32>
    %673 = vector.shape_cast %672 : vector<1x1x32xf32> to vector<1x32xf32>
    %cst_320 = arith.constant dense<0.000000e+00> : vector<2x16xf32>
    %674 = vector.multi_reduction <add>, %669, %cst_320 [2] : vector<2x16x32xf32> to vector<2x16xf32>
    %675 = vector.shape_cast %674 : vector<2x16xf32> to vector<2x16x1xf32>
    %cst_321 = arith.constant 3.200000e+01 : f32
    %676 = vector.broadcast %cst_321 : f32 to vector<2x16x1xf32>
    %677 = arith.divf %675, %676 : vector<2x16x1xf32>
    %678 = vector.broadcast %677 : vector<2x16x1xf32> to vector<2x16x32xf32>
    %679 = arith.subf %669, %678 : vector<2x16x32xf32>
    %680 = arith.mulf %679, %679 : vector<2x16x32xf32>
    %cst_322 = arith.constant dense<0.000000e+00> : vector<2x16xf32>
    %681 = vector.multi_reduction <add>, %680, %cst_322 [2] : vector<2x16x32xf32> to vector<2x16xf32>
    %682 = vector.shape_cast %681 : vector<2x16xf32> to vector<2x16x1xf32>
    %cst_323 = arith.constant 3.200000e+01 : f32
    %683 = vector.broadcast %cst_323 : f32 to vector<2x16x1xf32>
    %684 = arith.divf %682, %683 : vector<2x16x1xf32>
    %685 = vector.broadcast %677 : vector<2x16x1xf32> to vector<2x16x32xf32>
    %686 = arith.subf %669, %685 : vector<2x16x32xf32>
    %cst_324 = arith.constant 9.99999974E-6 : f32
    %687 = vector.broadcast %cst_324 : f32 to vector<2x16x1xf32>
    %688 = arith.addf %684, %687 : vector<2x16x1xf32>
    %689 = math.rsqrt %688 : vector<2x16x1xf32>
    %690 = vector.broadcast %689 : vector<2x16x1xf32> to vector<2x16x32xf32>
    %691 = arith.mulf %686, %690 : vector<2x16x32xf32>
    %692 = vector.shape_cast %671 : vector<1x32xf32> to vector<1x1x32xf32>
    %693 = vector.broadcast %692 : vector<1x1x32xf32> to vector<2x16x32xf32>
    %694 = arith.mulf %691, %693 : vector<2x16x32xf32>
    %695 = vector.shape_cast %673 : vector<1x32xf32> to vector<1x1x32xf32>
    %696 = vector.broadcast %695 : vector<1x1x32xf32> to vector<2x16x32xf32>
    %697 = arith.addf %694, %696 : vector<2x16x32xf32>
    %c0_325 = arith.constant 0 : index
    %c8_326 = arith.constant 8 : index
    %c0_327 = arith.constant 0 : index
    %698 = vector.load %arg16[%c0_325, %c8_326, %c0_327] : memref<2x32x32xf32, #tpu.memory_space<vmem>>, vector<2x16x32xf32>
    tpu.vector_store %arg16[%c0_325, %c8_326, %c0_327], %697 {strides = array<i32>} : memref<2x32x32xf32, #tpu.memory_space<vmem>>, vector<2x16x32xf32>,
    %c5_328 = arith.constant 5 : index
    %c0_329 = arith.constant 0 : index
    %c0_330 = arith.constant 0 : index
    %699 = vector.load %arg4[%c5_328, %c0_329, %c0_330] : memref<9x17x32xf32, #tpu.memory_space<vmem>>, vector<1x17x32xf32>
    %700 = vector.shape_cast %699 : vector<1x17x32xf32> to vector<17x32xf32>
    %701 = vector.extract_strided_slice %700 {offsets = [8, 0], sizes = [1, 32], strides = [1, 1]} : vector<17x32xf32> to vector<1x32xf32>
    %702 = vector.shape_cast %701 : vector<1x32xf32> to vector<1x1x32xf32>
    %703 = vector.broadcast %702 : vector<1x1x32xf32> to vector<2x16x32xf32>
    %704 = arith.mulf %697, %703 : vector<2x16x32xf32>
    %c0_331 = arith.constant 0 : index
    %c7_332 = arith.constant 7 : index
    %c0_333 = arith.constant 0 : index
    %705 = vector.load %arg16[%c0_331, %c7_332, %c0_333] : memref<2x32x32xf32, #tpu.memory_space<vmem>>, vector<2x16x32xf32>
    %706 = vector.extract_strided_slice %700 {offsets = [7, 0], sizes = [1, 32], strides = [1, 1]} : vector<17x32xf32> to vector<1x32xf32>
    %707 = vector.shape_cast %706 : vector<1x32xf32> to vector<1x1x32xf32>
    %708 = vector.broadcast %707 : vector<1x1x32xf32> to vector<2x16x32xf32>
    %709 = arith.mulf %705, %708 : vector<2x16x32xf32>
    %710 = arith.addf %704, %709 : vector<2x16x32xf32>
    %c0_334 = arith.constant 0 : index
    %c9_335 = arith.constant 9 : index
    %c0_336 = arith.constant 0 : index
    %711 = vector.load %arg16[%c0_334, %c9_335, %c0_336] : memref<2x32x32xf32, #tpu.memory_space<vmem>>, vector<2x16x32xf32>
    %712 = vector.extract_strided_slice %700 {offsets = [9, 0], sizes = [1, 32], strides = [1, 1]} : vector<17x32xf32> to vector<1x32xf32>
    %713 = vector.shape_cast %712 : vector<1x32xf32> to vector<1x1x32xf32>
    %714 = vector.broadcast %713 : vector<1x1x32xf32> to vector<2x16x32xf32>
    %715 = arith.mulf %711, %714 : vector<2x16x32xf32>
    %716 = arith.addf %710, %715 : vector<2x16x32xf32>
    %c5_337 = arith.constant 5 : index
    %c0_338 = arith.constant 0 : index
    %c0_339 = arith.constant 0 : index
    %717 = vector.load %arg5[%c5_337, %c0_338, %c0_339] : memref<9x1x32xf32, #tpu.memory_space<vmem>>, vector<1x1x32xf32>
    %718 = vector.shape_cast %717 : vector<1x1x32xf32> to vector<1x32xf32>
    %719 = vector.shape_cast %718 : vector<1x32xf32> to vector<1x1x32xf32>
    %720 = vector.broadcast %719 : vector<1x1x32xf32> to vector<2x16x32xf32>
    %721 = arith.addf %716, %720 : vector<2x16x32xf32>
    %722 = arith.mulf %721, %721 : vector<2x16x32xf32>
    %723 = arith.mulf %721, %722 : vector<2x16x32xf32>
    %cst_340 = arith.constant 4.471500e-02 : f32
    %724 = vector.broadcast %cst_340 : f32 to vector<2x16x32xf32>
    %725 = arith.mulf %724, %723 : vector<2x16x32xf32>
    %726 = arith.addf %721, %725 : vector<2x16x32xf32>
    %cst_341 = arith.constant 0.797884583 : f32
    %727 = vector.broadcast %cst_341 : f32 to vector<2x16x32xf32>
    %728 = arith.mulf %727, %726 : vector<2x16x32xf32>
    %729 = math.tanh %728 : vector<2x16x32xf32>
    %cst_342 = arith.constant 1.000000e+00 : f32
    %730 = vector.broadcast %cst_342 : f32 to vector<2x16x32xf32>
    %731 = arith.addf %730, %729 : vector<2x16x32xf32>
    %cst_343 = arith.constant 5.000000e-01 : f32
    %732 = vector.broadcast %cst_343 : f32 to vector<2x16x32xf32>
    %733 = arith.mulf %732, %731 : vector<2x16x32xf32>
    %734 = arith.mulf %721, %733 : vector<2x16x32xf32>
    %735 = vector.shape_cast %734 : vector<2x16x32xf32> to vector<32x32xf32>
    %736 = arith.truncf %735 : vector<32x32xf32> to vector<32x32xbf16>
    %c5_344 = arith.constant 5 : index
    %c0_345 = arith.constant 0 : index
    %c0_346 = arith.constant 0 : index
    %737 = vector.load %arg6[%c5_344, %c0_345, %c0_346] : memref<9x32x32xbf16, #tpu.memory_space<vmem>>, vector<1x32x32xbf16>
    %738 = vector.shape_cast %737 : vector<1x32x32xbf16> to vector<32x32xbf16>
    %cst_347 = arith.constant dense<0.000000e+00> : vector<32x32xf32>
    %739 = tpu.matmul %736, %738, %cst_347 {dimension_numbers = #tpu.dot_dimension_numbers<[1], [0], [0], [1], [0, 0, 1, 1], [], []>} : vector<32x32xbf16>, vector<32x32xbf16>, vector<32x32xf32> -> vector<32x32xf32>
    %740 = vector.shape_cast %739 : vector<32x32xf32> to vector<2x16x32xf32>
    %c5_348 = arith.constant 5 : index
    %c0_349 = arith.constant 0 : index
    %c0_350 = arith.constant 0 : index
    %741 = vector.load %arg7[%c5_348, %c0_349, %c0_350] : memref<9x1x32xf32, #tpu.memory_space<vmem>>, vector<1x1x32xf32>
    %742 = vector.shape_cast %741 : vector<1x1x32xf32> to vector<1x32xf32>
    %743 = vector.shape_cast %742 : vector<1x32xf32> to vector<1x1x32xf32>
    %744 = vector.broadcast %743 : vector<1x1x32xf32> to vector<2x16x32xf32>
    %745 = arith.addf %740, %744 : vector<2x16x32xf32>
    %746 = arith.addf %669, %745 : vector<2x16x32xf32>
    %c6_351 = arith.constant 6 : index
    %c0_352 = arith.constant 0 : index
    %c0_353 = arith.constant 0 : index
    %747 = vector.load %arg2[%c6_351, %c0_352, %c0_353] : memref<9x1x32xf32, #tpu.memory_space<vmem>>, vector<1x1x32xf32>
    %748 = vector.shape_cast %747 : vector<1x1x32xf32> to vector<1x32xf32>
    %c6_354 = arith.constant 6 : index
    %c0_355 = arith.constant 0 : index
    %c0_356 = arith.constant 0 : index
    %749 = vector.load %arg3[%c6_354, %c0_355, %c0_356] : memref<9x1x32xf32, #tpu.memory_space<vmem>>, vector<1x1x32xf32>
    %750 = vector.shape_cast %749 : vector<1x1x32xf32> to vector<1x32xf32>
    %cst_357 = arith.constant dense<0.000000e+00> : vector<2x16xf32>
    %751 = vector.multi_reduction <add>, %746, %cst_357 [2] : vector<2x16x32xf32> to vector<2x16xf32>
    %752 = vector.shape_cast %751 : vector<2x16xf32> to vector<2x16x1xf32>
    %cst_358 = arith.constant 3.200000e+01 : f32
    %753 = vector.broadcast %cst_358 : f32 to vector<2x16x1xf32>
    %754 = arith.divf %752, %753 : vector<2x16x1xf32>
    %755 = vector.broadcast %754 : vector<2x16x1xf32> to vector<2x16x32xf32>
    %756 = arith.subf %746, %755 : vector<2x16x32xf32>
    %757 = arith.mulf %756, %756 : vector<2x16x32xf32>
    %cst_359 = arith.constant dense<0.000000e+00> : vector<2x16xf32>
    %758 = vector.multi_reduction <add>, %757, %cst_359 [2] : vector<2x16x32xf32> to vector<2x16xf32>
    %759 = vector.shape_cast %758 : vector<2x16xf32> to vector<2x16x1xf32>
    %cst_360 = arith.constant 3.200000e+01 : f32
    %760 = vector.broadcast %cst_360 : f32 to vector<2x16x1xf32>
    %761 = arith.divf %759, %760 : vector<2x16x1xf32>
    %762 = vector.broadcast %754 : vector<2x16x1xf32> to vector<2x16x32xf32>
    %763 = arith.subf %746, %762 : vector<2x16x32xf32>
    %cst_361 = arith.constant 9.99999974E-6 : f32
    %764 = vector.broadcast %cst_361 : f32 to vector<2x16x1xf32>
    %765 = arith.addf %761, %764 : vector<2x16x1xf32>
    %766 = math.rsqrt %765 : vector<2x16x1xf32>
    %767 = vector.broadcast %766 : vector<2x16x1xf32> to vector<2x16x32xf32>
    %768 = arith.mulf %763, %767 : vector<2x16x32xf32>
    %769 = vector.shape_cast %748 : vector<1x32xf32> to vector<1x1x32xf32>
    %770 = vector.broadcast %769 : vector<1x1x32xf32> to vector<2x16x32xf32>
    %771 = arith.mulf %768, %770 : vector<2x16x32xf32>
    %772 = vector.shape_cast %750 : vector<1x32xf32> to vector<1x1x32xf32>
    %773 = vector.broadcast %772 : vector<1x1x32xf32> to vector<2x16x32xf32>
    %774 = arith.addf %771, %773 : vector<2x16x32xf32>
    %c0_362 = arith.constant 0 : index
    %c8_363 = arith.constant 8 : index
    %c0_364 = arith.constant 0 : index
    %775 = vector.load %arg16[%c0_362, %c8_363, %c0_364] : memref<2x32x32xf32, #tpu.memory_space<vmem>>, vector<2x16x32xf32>
    tpu.vector_store %arg16[%c0_362, %c8_363, %c0_364], %774 {strides = array<i32>} : memref<2x32x32xf32, #tpu.memory_space<vmem>>, vector<2x16x32xf32>,
    %c6_365 = arith.constant 6 : index
    %c0_366 = arith.constant 0 : index
    %c0_367 = arith.constant 0 : index
    %776 = vector.load %arg4[%c6_365, %c0_366, %c0_367] : memref<9x17x32xf32, #tpu.memory_space<vmem>>, vector<1x17x32xf32>
    %777 = vector.shape_cast %776 : vector<1x17x32xf32> to vector<17x32xf32>
    %778 = vector.extract_strided_slice %777 {offsets = [8, 0], sizes = [1, 32], strides = [1, 1]} : vector<17x32xf32> to vector<1x32xf32>
    %779 = vector.shape_cast %778 : vector<1x32xf32> to vector<1x1x32xf32>
    %780 = vector.broadcast %779 : vector<1x1x32xf32> to vector<2x16x32xf32>
    %781 = arith.mulf %774, %780 : vector<2x16x32xf32>
    %c0_368 = arith.constant 0 : index
    %c7_369 = arith.constant 7 : index
    %c0_370 = arith.constant 0 : index
    %782 = vector.load %arg16[%c0_368, %c7_369, %c0_370] : memref<2x32x32xf32, #tpu.memory_space<vmem>>, vector<2x16x32xf32>
    %783 = vector.extract_strided_slice %777 {offsets = [7, 0], sizes = [1, 32], strides = [1, 1]} : vector<17x32xf32> to vector<1x32xf32>
    %784 = vector.shape_cast %783 : vector<1x32xf32> to vector<1x1x32xf32>
    %785 = vector.broadcast %784 : vector<1x1x32xf32> to vector<2x16x32xf32>
    %786 = arith.mulf %782, %785 : vector<2x16x32xf32>
    %787 = arith.addf %781, %786 : vector<2x16x32xf32>
    %c0_371 = arith.constant 0 : index
    %c9_372 = arith.constant 9 : index
    %c0_373 = arith.constant 0 : index
    %788 = vector.load %arg16[%c0_371, %c9_372, %c0_373] : memref<2x32x32xf32, #tpu.memory_space<vmem>>, vector<2x16x32xf32>
    %789 = vector.extract_strided_slice %777 {offsets = [9, 0], sizes = [1, 32], strides = [1, 1]} : vector<17x32xf32> to vector<1x32xf32>
    %790 = vector.shape_cast %789 : vector<1x32xf32> to vector<1x1x32xf32>
    %791 = vector.broadcast %790 : vector<1x1x32xf32> to vector<2x16x32xf32>
    %792 = arith.mulf %788, %791 : vector<2x16x32xf32>
    %793 = arith.addf %787, %792 : vector<2x16x32xf32>
    %c6_374 = arith.constant 6 : index
    %c0_375 = arith.constant 0 : index
    %c0_376 = arith.constant 0 : index
    %794 = vector.load %arg5[%c6_374, %c0_375, %c0_376] : memref<9x1x32xf32, #tpu.memory_space<vmem>>, vector<1x1x32xf32>
    %795 = vector.shape_cast %794 : vector<1x1x32xf32> to vector<1x32xf32>
    %796 = vector.shape_cast %795 : vector<1x32xf32> to vector<1x1x32xf32>
    %797 = vector.broadcast %796 : vector<1x1x32xf32> to vector<2x16x32xf32>
    %798 = arith.addf %793, %797 : vector<2x16x32xf32>
    %799 = arith.mulf %798, %798 : vector<2x16x32xf32>
    %800 = arith.mulf %798, %799 : vector<2x16x32xf32>
    %cst_377 = arith.constant 4.471500e-02 : f32
    %801 = vector.broadcast %cst_377 : f32 to vector<2x16x32xf32>
    %802 = arith.mulf %801, %800 : vector<2x16x32xf32>
    %803 = arith.addf %798, %802 : vector<2x16x32xf32>
    %cst_378 = arith.constant 0.797884583 : f32
    %804 = vector.broadcast %cst_378 : f32 to vector<2x16x32xf32>
    %805 = arith.mulf %804, %803 : vector<2x16x32xf32>
    %806 = math.tanh %805 : vector<2x16x32xf32>
    %cst_379 = arith.constant 1.000000e+00 : f32
    %807 = vector.broadcast %cst_379 : f32 to vector<2x16x32xf32>
    %808 = arith.addf %807, %806 : vector<2x16x32xf32>
    %cst_380 = arith.constant 5.000000e-01 : f32
    %809 = vector.broadcast %cst_380 : f32 to vector<2x16x32xf32>
    %810 = arith.mulf %809, %808 : vector<2x16x32xf32>
    %811 = arith.mulf %798, %810 : vector<2x16x32xf32>
    %812 = vector.shape_cast %811 : vector<2x16x32xf32> to vector<32x32xf32>
    %813 = arith.truncf %812 : vector<32x32xf32> to vector<32x32xbf16>
    %c6_381 = arith.constant 6 : index
    %c0_382 = arith.constant 0 : index
    %c0_383 = arith.constant 0 : index
    %814 = vector.load %arg6[%c6_381, %c0_382, %c0_383] : memref<9x32x32xbf16, #tpu.memory_space<vmem>>, vector<1x32x32xbf16>
    %815 = vector.shape_cast %814 : vector<1x32x32xbf16> to vector<32x32xbf16>
    %cst_384 = arith.constant dense<0.000000e+00> : vector<32x32xf32>
    %816 = tpu.matmul %813, %815, %cst_384 {dimension_numbers = #tpu.dot_dimension_numbers<[1], [0], [0], [1], [0, 0, 1, 1], [], []>} : vector<32x32xbf16>, vector<32x32xbf16>, vector<32x32xf32> -> vector<32x32xf32>
    %817 = vector.shape_cast %816 : vector<32x32xf32> to vector<2x16x32xf32>
    %c6_385 = arith.constant 6 : index
    %c0_386 = arith.constant 0 : index
    %c0_387 = arith.constant 0 : index
    %818 = vector.load %arg7[%c6_385, %c0_386, %c0_387] : memref<9x1x32xf32, #tpu.memory_space<vmem>>, vector<1x1x32xf32>
    %819 = vector.shape_cast %818 : vector<1x1x32xf32> to vector<1x32xf32>
    %820 = vector.shape_cast %819 : vector<1x32xf32> to vector<1x1x32xf32>
    %821 = vector.broadcast %820 : vector<1x1x32xf32> to vector<2x16x32xf32>
    %822 = arith.addf %817, %821 : vector<2x16x32xf32>
    %823 = arith.addf %746, %822 : vector<2x16x32xf32>
    %c7_388 = arith.constant 7 : index
    %c0_389 = arith.constant 0 : index
    %c0_390 = arith.constant 0 : index
    %824 = vector.load %arg2[%c7_388, %c0_389, %c0_390] : memref<9x1x32xf32, #tpu.memory_space<vmem>>, vector<1x1x32xf32>
    %825 = vector.shape_cast %824 : vector<1x1x32xf32> to vector<1x32xf32>
    %c7_391 = arith.constant 7 : index
    %c0_392 = arith.constant 0 : index
    %c0_393 = arith.constant 0 : index
    %826 = vector.load %arg3[%c7_391, %c0_392, %c0_393] : memref<9x1x32xf32, #tpu.memory_space<vmem>>, vector<1x1x32xf32>
    %827 = vector.shape_cast %826 : vector<1x1x32xf32> to vector<1x32xf32>
    %cst_394 = arith.constant dense<0.000000e+00> : vector<2x16xf32>
    %828 = vector.multi_reduction <add>, %823, %cst_394 [2] : vector<2x16x32xf32> to vector<2x16xf32>
    %829 = vector.shape_cast %828 : vector<2x16xf32> to vector<2x16x1xf32>
    %cst_395 = arith.constant 3.200000e+01 : f32
    %830 = vector.broadcast %cst_395 : f32 to vector<2x16x1xf32>
    %831 = arith.divf %829, %830 : vector<2x16x1xf32>
    %832 = vector.broadcast %831 : vector<2x16x1xf32> to vector<2x16x32xf32>
    %833 = arith.subf %823, %832 : vector<2x16x32xf32>
    %834 = arith.mulf %833, %833 : vector<2x16x32xf32>
    %cst_396 = arith.constant dense<0.000000e+00> : vector<2x16xf32>
    %835 = vector.multi_reduction <add>, %834, %cst_396 [2] : vector<2x16x32xf32> to vector<2x16xf32>
    %836 = vector.shape_cast %835 : vector<2x16xf32> to vector<2x16x1xf32>
    %cst_397 = arith.constant 3.200000e+01 : f32
    %837 = vector.broadcast %cst_397 : f32 to vector<2x16x1xf32>
    %838 = arith.divf %836, %837 : vector<2x16x1xf32>
    %839 = vector.broadcast %831 : vector<2x16x1xf32> to vector<2x16x32xf32>
    %840 = arith.subf %823, %839 : vector<2x16x32xf32>
    %cst_398 = arith.constant 9.99999974E-6 : f32
    %841 = vector.broadcast %cst_398 : f32 to vector<2x16x1xf32>
    %842 = arith.addf %838, %841 : vector<2x16x1xf32>
    %843 = math.rsqrt %842 : vector<2x16x1xf32>
    %844 = vector.broadcast %843 : vector<2x16x1xf32> to vector<2x16x32xf32>
    %845 = arith.mulf %840, %844 : vector<2x16x32xf32>
    %846 = vector.shape_cast %825 : vector<1x32xf32> to vector<1x1x32xf32>
    %847 = vector.broadcast %846 : vector<1x1x32xf32> to vector<2x16x32xf32>
    %848 = arith.mulf %845, %847 : vector<2x16x32xf32>
    %849 = vector.shape_cast %827 : vector<1x32xf32> to vector<1x1x32xf32>
    %850 = vector.broadcast %849 : vector<1x1x32xf32> to vector<2x16x32xf32>
    %851 = arith.addf %848, %850 : vector<2x16x32xf32>
    %c0_399 = arith.constant 0 : index
    %c8_400 = arith.constant 8 : index
    %c0_401 = arith.constant 0 : index
    %852 = vector.load %arg16[%c0_399, %c8_400, %c0_401] : memref<2x32x32xf32, #tpu.memory_space<vmem>>, vector<2x16x32xf32>
    tpu.vector_store %arg16[%c0_399, %c8_400, %c0_401], %851 {strides = array<i32>} : memref<2x32x32xf32, #tpu.memory_space<vmem>>, vector<2x16x32xf32>,
    %c7_402 = arith.constant 7 : index
    %c0_403 = arith.constant 0 : index
    %c0_404 = arith.constant 0 : index
    %853 = vector.load %arg4[%c7_402, %c0_403, %c0_404] : memref<9x17x32xf32, #tpu.memory_space<vmem>>, vector<1x17x32xf32>
    %854 = vector.shape_cast %853 : vector<1x17x32xf32> to vector<17x32xf32>
    %855 = vector.extract_strided_slice %854 {offsets = [8, 0], sizes = [1, 32], strides = [1, 1]} : vector<17x32xf32> to vector<1x32xf32>
    %856 = vector.shape_cast %855 : vector<1x32xf32> to vector<1x1x32xf32>
    %857 = vector.broadcast %856 : vector<1x1x32xf32> to vector<2x16x32xf32>
    %858 = arith.mulf %851, %857 : vector<2x16x32xf32>
    %c0_405 = arith.constant 0 : index
    %c7_406 = arith.constant 7 : index
    %c0_407 = arith.constant 0 : index
    %859 = vector.load %arg16[%c0_405, %c7_406, %c0_407] : memref<2x32x32xf32, #tpu.memory_space<vmem>>, vector<2x16x32xf32>
    %860 = vector.extract_strided_slice %854 {offsets = [7, 0], sizes = [1, 32], strides = [1, 1]} : vector<17x32xf32> to vector<1x32xf32>
    %861 = vector.shape_cast %860 : vector<1x32xf32> to vector<1x1x32xf32>
    %862 = vector.broadcast %861 : vector<1x1x32xf32> to vector<2x16x32xf32>
    %863 = arith.mulf %859, %862 : vector<2x16x32xf32>
    %864 = arith.addf %858, %863 : vector<2x16x32xf32>
    %c0_408 = arith.constant 0 : index
    %c9_409 = arith.constant 9 : index
    %c0_410 = arith.constant 0 : index
    %865 = vector.load %arg16[%c0_408, %c9_409, %c0_410] : memref<2x32x32xf32, #tpu.memory_space<vmem>>, vector<2x16x32xf32>
    %866 = vector.extract_strided_slice %854 {offsets = [9, 0], sizes = [1, 32], strides = [1, 1]} : vector<17x32xf32> to vector<1x32xf32>
    %867 = vector.shape_cast %866 : vector<1x32xf32> to vector<1x1x32xf32>
    %868 = vector.broadcast %867 : vector<1x1x32xf32> to vector<2x16x32xf32>
    %869 = arith.mulf %865, %868 : vector<2x16x32xf32>
    %870 = arith.addf %864, %869 : vector<2x16x32xf32>
    %c7_411 = arith.constant 7 : index
    %c0_412 = arith.constant 0 : index
    %c0_413 = arith.constant 0 : index
    %871 = vector.load %arg5[%c7_411, %c0_412, %c0_413] : memref<9x1x32xf32, #tpu.memory_space<vmem>>, vector<1x1x32xf32>
    %872 = vector.shape_cast %871 : vector<1x1x32xf32> to vector<1x32xf32>
    %873 = vector.shape_cast %872 : vector<1x32xf32> to vector<1x1x32xf32>
    %874 = vector.broadcast %873 : vector<1x1x32xf32> to vector<2x16x32xf32>
    %875 = arith.addf %870, %874 : vector<2x16x32xf32>
    %876 = arith.mulf %875, %875 : vector<2x16x32xf32>
    %877 = arith.mulf %875, %876 : vector<2x16x32xf32>
    %cst_414 = arith.constant 4.471500e-02 : f32
    %878 = vector.broadcast %cst_414 : f32 to vector<2x16x32xf32>
    %879 = arith.mulf %878, %877 : vector<2x16x32xf32>
    %880 = arith.addf %875, %879 : vector<2x16x32xf32>
    %cst_415 = arith.constant 0.797884583 : f32
    %881 = vector.broadcast %cst_415 : f32 to vector<2x16x32xf32>
    %882 = arith.mulf %881, %880 : vector<2x16x32xf32>
    %883 = math.tanh %882 : vector<2x16x32xf32>
    %cst_416 = arith.constant 1.000000e+00 : f32
    %884 = vector.broadcast %cst_416 : f32 to vector<2x16x32xf32>
    %885 = arith.addf %884, %883 : vector<2x16x32xf32>
    %cst_417 = arith.constant 5.000000e-01 : f32
    %886 = vector.broadcast %cst_417 : f32 to vector<2x16x32xf32>
    %887 = arith.mulf %886, %885 : vector<2x16x32xf32>
    %888 = arith.mulf %875, %887 : vector<2x16x32xf32>
    %889 = vector.shape_cast %888 : vector<2x16x32xf32> to vector<32x32xf32>
    %890 = arith.truncf %889 : vector<32x32xf32> to vector<32x32xbf16>
    %c7_418 = arith.constant 7 : index
    %c0_419 = arith.constant 0 : index
    %c0_420 = arith.constant 0 : index
    %891 = vector.load %arg6[%c7_418, %c0_419, %c0_420] : memref<9x32x32xbf16, #tpu.memory_space<vmem>>, vector<1x32x32xbf16>
    %892 = vector.shape_cast %891 : vector<1x32x32xbf16> to vector<32x32xbf16>
    %cst_421 = arith.constant dense<0.000000e+00> : vector<32x32xf32>
    %893 = tpu.matmul %890, %892, %cst_421 {dimension_numbers = #tpu.dot_dimension_numbers<[1], [0], [0], [1], [0, 0, 1, 1], [], []>} : vector<32x32xbf16>, vector<32x32xbf16>, vector<32x32xf32> -> vector<32x32xf32>
    %894 = vector.shape_cast %893 : vector<32x32xf32> to vector<2x16x32xf32>
    %c7_422 = arith.constant 7 : index
    %c0_423 = arith.constant 0 : index
    %c0_424 = arith.constant 0 : index
    %895 = vector.load %arg7[%c7_422, %c0_423, %c0_424] : memref<9x1x32xf32, #tpu.memory_space<vmem>>, vector<1x1x32xf32>
    %896 = vector.shape_cast %895 : vector<1x1x32xf32> to vector<1x32xf32>
    %897 = vector.shape_cast %896 : vector<1x32xf32> to vector<1x1x32xf32>
    %898 = vector.broadcast %897 : vector<1x1x32xf32> to vector<2x16x32xf32>
    %899 = arith.addf %894, %898 : vector<2x16x32xf32>
    %900 = arith.addf %823, %899 : vector<2x16x32xf32>
    %c8_425 = arith.constant 8 : index
    %c0_426 = arith.constant 0 : index
    %c0_427 = arith.constant 0 : index
    %901 = vector.load %arg2[%c8_425, %c0_426, %c0_427] : memref<9x1x32xf32, #tpu.memory_space<vmem>>, vector<1x1x32xf32>
    %902 = vector.shape_cast %901 : vector<1x1x32xf32> to vector<1x32xf32>
    %c8_428 = arith.constant 8 : index
    %c0_429 = arith.constant 0 : index
    %c0_430 = arith.constant 0 : index
    %903 = vector.load %arg3[%c8_428, %c0_429, %c0_430] : memref<9x1x32xf32, #tpu.memory_space<vmem>>, vector<1x1x32xf32>
    %904 = vector.shape_cast %903 : vector<1x1x32xf32> to vector<1x32xf32>
    %cst_431 = arith.constant dense<0.000000e+00> : vector<2x16xf32>
    %905 = vector.multi_reduction <add>, %900, %cst_431 [2] : vector<2x16x32xf32> to vector<2x16xf32>
    %906 = vector.shape_cast %905 : vector<2x16xf32> to vector<2x16x1xf32>
    %cst_432 = arith.constant 3.200000e+01 : f32
    %907 = vector.broadcast %cst_432 : f32 to vector<2x16x1xf32>
    %908 = arith.divf %906, %907 : vector<2x16x1xf32>
    %909 = vector.broadcast %908 : vector<2x16x1xf32> to vector<2x16x32xf32>
    %910 = arith.subf %900, %909 : vector<2x16x32xf32>
    %911 = arith.mulf %910, %910 : vector<2x16x32xf32>
    %cst_433 = arith.constant dense<0.000000e+00> : vector<2x16xf32>
    %912 = vector.multi_reduction <add>, %911, %cst_433 [2] : vector<2x16x32xf32> to vector<2x16xf32>
    %913 = vector.shape_cast %912 : vector<2x16xf32> to vector<2x16x1xf32>
    %cst_434 = arith.constant 3.200000e+01 : f32
    %914 = vector.broadcast %cst_434 : f32 to vector<2x16x1xf32>
    %915 = arith.divf %913, %914 : vector<2x16x1xf32>
    %916 = vector.broadcast %908 : vector<2x16x1xf32> to vector<2x16x32xf32>
    %917 = arith.subf %900, %916 : vector<2x16x32xf32>
    %cst_435 = arith.constant 9.99999974E-6 : f32
    %918 = vector.broadcast %cst_435 : f32 to vector<2x16x1xf32>
    %919 = arith.addf %915, %918 : vector<2x16x1xf32>
    %920 = math.rsqrt %919 : vector<2x16x1xf32>
    %921 = vector.broadcast %920 : vector<2x16x1xf32> to vector<2x16x32xf32>
    %922 = arith.mulf %917, %921 : vector<2x16x32xf32>
    %923 = vector.shape_cast %902 : vector<1x32xf32> to vector<1x1x32xf32>
    %924 = vector.broadcast %923 : vector<1x1x32xf32> to vector<2x16x32xf32>
    %925 = arith.mulf %922, %924 : vector<2x16x32xf32>
    %926 = vector.shape_cast %904 : vector<1x32xf32> to vector<1x1x32xf32>
    %927 = vector.broadcast %926 : vector<1x1x32xf32> to vector<2x16x32xf32>
    %928 = arith.addf %925, %927 : vector<2x16x32xf32>
    %c0_436 = arith.constant 0 : index
    %c8_437 = arith.constant 8 : index
    %c0_438 = arith.constant 0 : index
    %929 = vector.load %arg16[%c0_436, %c8_437, %c0_438] : memref<2x32x32xf32, #tpu.memory_space<vmem>>, vector<2x16x32xf32>
    tpu.vector_store %arg16[%c0_436, %c8_437, %c0_438], %928 {strides = array<i32>} : memref<2x32x32xf32, #tpu.memory_space<vmem>>, vector<2x16x32xf32>,
    %c8_439 = arith.constant 8 : index
    %c0_440 = arith.constant 0 : index
    %c0_441 = arith.constant 0 : index
    %930 = vector.load %arg4[%c8_439, %c0_440, %c0_441] : memref<9x17x32xf32, #tpu.memory_space<vmem>>, vector<1x17x32xf32>
    %931 = vector.shape_cast %930 : vector<1x17x32xf32> to vector<17x32xf32>
    %932 = vector.extract_strided_slice %931 {offsets = [8, 0], sizes = [1, 32], strides = [1, 1]} : vector<17x32xf32> to vector<1x32xf32>
    %933 = vector.shape_cast %932 : vector<1x32xf32> to vector<1x1x32xf32>
    %934 = vector.broadcast %933 : vector<1x1x32xf32> to vector<2x16x32xf32>
    %935 = arith.mulf %928, %934 : vector<2x16x32xf32>
    %c0_442 = arith.constant 0 : index
    %c7_443 = arith.constant 7 : index
    %c0_444 = arith.constant 0 : index
    %936 = vector.load %arg16[%c0_442, %c7_443, %c0_444] : memref<2x32x32xf32, #tpu.memory_space<vmem>>, vector<2x16x32xf32>
    %937 = vector.extract_strided_slice %931 {offsets = [7, 0], sizes = [1, 32], strides = [1, 1]} : vector<17x32xf32> to vector<1x32xf32>
    %938 = vector.shape_cast %937 : vector<1x32xf32> to vector<1x1x32xf32>
    %939 = vector.broadcast %938 : vector<1x1x32xf32> to vector<2x16x32xf32>
    %940 = arith.mulf %936, %939 : vector<2x16x32xf32>
    %941 = arith.addf %935, %940 : vector<2x16x32xf32>
    %c0_445 = arith.constant 0 : index
    %c9_446 = arith.constant 9 : index
    %c0_447 = arith.constant 0 : index
    %942 = vector.load %arg16[%c0_445, %c9_446, %c0_447] : memref<2x32x32xf32, #tpu.memory_space<vmem>>, vector<2x16x32xf32>
    %943 = vector.extract_strided_slice %931 {offsets = [9, 0], sizes = [1, 32], strides = [1, 1]} : vector<17x32xf32> to vector<1x32xf32>
    %944 = vector.shape_cast %943 : vector<1x32xf32> to vector<1x1x32xf32>
    %945 = vector.broadcast %944 : vector<1x1x32xf32> to vector<2x16x32xf32>
    %946 = arith.mulf %942, %945 : vector<2x16x32xf32>
    %947 = arith.addf %941, %946 : vector<2x16x32xf32>
    %c8_448 = arith.constant 8 : index
    %c0_449 = arith.constant 0 : index
    %c0_450 = arith.constant 0 : index
    %948 = vector.load %arg5[%c8_448, %c0_449, %c0_450] : memref<9x1x32xf32, #tpu.memory_space<vmem>>, vector<1x1x32xf32>
    %949 = vector.shape_cast %948 : vector<1x1x32xf32> to vector<1x32xf32>
    %950 = vector.shape_cast %949 : vector<1x32xf32> to vector<1x1x32xf32>
    %951 = vector.broadcast %950 : vector<1x1x32xf32> to vector<2x16x32xf32>
    %952 = arith.addf %947, %951 : vector<2x16x32xf32>
    %953 = arith.mulf %952, %952 : vector<2x16x32xf32>
    %954 = arith.mulf %952, %953 : vector<2x16x32xf32>
    %cst_451 = arith.constant 4.471500e-02 : f32
    %955 = vector.broadcast %cst_451 : f32 to vector<2x16x32xf32>
    %956 = arith.mulf %955, %954 : vector<2x16x32xf32>
    %957 = arith.addf %952, %956 : vector<2x16x32xf32>
    %cst_452 = arith.constant 0.797884583 : f32
    %958 = vector.broadcast %cst_452 : f32 to vector<2x16x32xf32>
    %959 = arith.mulf %958, %957 : vector<2x16x32xf32>
    %960 = math.tanh %959 : vector<2x16x32xf32>
    %cst_453 = arith.constant 1.000000e+00 : f32
    %961 = vector.broadcast %cst_453 : f32 to vector<2x16x32xf32>
    %962 = arith.addf %961, %960 : vector<2x16x32xf32>
    %cst_454 = arith.constant 5.000000e-01 : f32
    %963 = vector.broadcast %cst_454 : f32 to vector<2x16x32xf32>
    %964 = arith.mulf %963, %962 : vector<2x16x32xf32>
    %965 = arith.mulf %952, %964 : vector<2x16x32xf32>
    %966 = vector.shape_cast %965 : vector<2x16x32xf32> to vector<32x32xf32>
    %967 = arith.truncf %966 : vector<32x32xf32> to vector<32x32xbf16>
    %c8_455 = arith.constant 8 : index
    %c0_456 = arith.constant 0 : index
    %c0_457 = arith.constant 0 : index
    %968 = vector.load %arg6[%c8_455, %c0_456, %c0_457] : memref<9x32x32xbf16, #tpu.memory_space<vmem>>, vector<1x32x32xbf16>
    %969 = vector.shape_cast %968 : vector<1x32x32xbf16> to vector<32x32xbf16>
    %cst_458 = arith.constant dense<0.000000e+00> : vector<32x32xf32>
    %970 = tpu.matmul %967, %969, %cst_458 {dimension_numbers = #tpu.dot_dimension_numbers<[1], [0], [0], [1], [0, 0, 1, 1], [], []>} : vector<32x32xbf16>, vector<32x32xbf16>, vector<32x32xf32> -> vector<32x32xf32>
    %971 = vector.shape_cast %970 : vector<32x32xf32> to vector<2x16x32xf32>
    %c8_459 = arith.constant 8 : index
    %c0_460 = arith.constant 0 : index
    %c0_461 = arith.constant 0 : index
    %972 = vector.load %arg7[%c8_459, %c0_460, %c0_461] : memref<9x1x32xf32, #tpu.memory_space<vmem>>, vector<1x1x32xf32>
    %973 = vector.shape_cast %972 : vector<1x1x32xf32> to vector<1x32xf32>
    %974 = vector.shape_cast %973 : vector<1x32xf32> to vector<1x1x32xf32>
    %975 = vector.broadcast %974 : vector<1x1x32xf32> to vector<2x16x32xf32>
    %976 = arith.addf %971, %975 : vector<2x16x32xf32>
    %977 = arith.addf %900, %976 : vector<2x16x32xf32>
    %c1_462 = arith.constant 1 : index
    %c0_463 = arith.constant 0 : index
    %c0_464 = arith.constant 0 : index
    %978 = vector.load %arg8[%c1_462, %c0_463, %c0_464] : memref<2x1x32xf32, #tpu.memory_space<vmem>>, vector<1x1x32xf32>
    %979 = vector.shape_cast %978 : vector<1x1x32xf32> to vector<1x32xf32>
    %c1_465 = arith.constant 1 : index
    %c0_466 = arith.constant 0 : index
    %c0_467 = arith.constant 0 : index
    %980 = vector.load %arg9[%c1_465, %c0_466, %c0_467] : memref<2x1x32xf32, #tpu.memory_space<vmem>>, vector<1x1x32xf32>
    %981 = vector.shape_cast %980 : vector<1x1x32xf32> to vector<1x32xf32>
    %cst_468 = arith.constant dense<0.000000e+00> : vector<2x16xf32>
    %982 = vector.multi_reduction <add>, %977, %cst_468 [2] : vector<2x16x32xf32> to vector<2x16xf32>
    %983 = vector.shape_cast %982 : vector<2x16xf32> to vector<2x16x1xf32>
    %cst_469 = arith.constant 3.200000e+01 : f32
    %984 = vector.broadcast %cst_469 : f32 to vector<2x16x1xf32>
    %985 = arith.divf %983, %984 : vector<2x16x1xf32>
    %986 = vector.broadcast %985 : vector<2x16x1xf32> to vector<2x16x32xf32>
    %987 = arith.subf %977, %986 : vector<2x16x32xf32>
    %988 = arith.mulf %987, %987 : vector<2x16x32xf32>
    %cst_470 = arith.constant dense<0.000000e+00> : vector<2x16xf32>
    %989 = vector.multi_reduction <add>, %988, %cst_470 [2] : vector<2x16x32xf32> to vector<2x16xf32>
    %990 = vector.shape_cast %989 : vector<2x16xf32> to vector<2x16x1xf32>
    %cst_471 = arith.constant 3.200000e+01 : f32
    %991 = vector.broadcast %cst_471 : f32 to vector<2x16x1xf32>
    %992 = arith.divf %990, %991 : vector<2x16x1xf32>
    %993 = vector.broadcast %985 : vector<2x16x1xf32> to vector<2x16x32xf32>
    %994 = arith.subf %977, %993 : vector<2x16x32xf32>
    %cst_472 = arith.constant 9.99999974E-6 : f32
    %995 = vector.broadcast %cst_472 : f32 to vector<2x16x1xf32>
    %996 = arith.addf %992, %995 : vector<2x16x1xf32>
    %997 = math.rsqrt %996 : vector<2x16x1xf32>
    %998 = vector.broadcast %997 : vector<2x16x1xf32> to vector<2x16x32xf32>
    %999 = arith.mulf %994, %998 : vector<2x16x32xf32>
    %1000 = vector.shape_cast %979 : vector<1x32xf32> to vector<1x1x32xf32>
    %1001 = vector.broadcast %1000 : vector<1x1x32xf32> to vector<2x16x32xf32>
    %1002 = arith.mulf %999, %1001 : vector<2x16x32xf32>
    %1003 = vector.shape_cast %981 : vector<1x32xf32> to vector<1x1x32xf32>
    %1004 = vector.broadcast %1003 : vector<1x1x32xf32> to vector<2x16x32xf32>
    %1005 = arith.addf %1002, %1004 : vector<2x16x32xf32>
    %1006 = vector.shape_cast %1005 : vector<2x16x32xf32> to vector<32x32xf32>
    %1007 = arith.truncf %1006 : vector<32x32xf32> to vector<32x32xbf16>
    %c0_473 = arith.constant 0 : index
    %c0_474 = arith.constant 0 : index
    %1008 = vector.load %arg10[%c0_473, %c0_474] : memref<32x32xbf16, #tpu.memory_space<vmem>>, vector<32x32xbf16>
    %cst_475 = arith.constant dense<0.000000e+00> : vector<32x32xf32>
    %1009 = tpu.matmul %1007, %1008, %cst_475 {dimension_numbers = #tpu.dot_dimension_numbers<[1], [0], [0], [1], [0, 0, 1, 1], [], []>} : vector<32x32xbf16>, vector<32x32xbf16>, vector<32x32xf32> -> vector<32x32xf32>
    %c0_476 = arith.constant 0 : index
    %c0_477 = arith.constant 0 : index
    %1010 = vector.load %arg12[%c0_476, %c0_477] : memref<1x32xf32, #tpu.memory_space<vmem>>, vector<1x32xf32>
    %1011 = vector.broadcast %1010 : vector<1x32xf32> to vector<32x32xf32>
    %1012 = arith.addf %1009, %1011 : vector<32x32xf32>
    %c0_478 = arith.constant 0 : index
    %c0_479 = arith.constant 0 : index
    %1013 = vector.load %arg11[%c0_478, %c0_479] : memref<32x32xbf16, #tpu.memory_space<vmem>>, vector<32x32xbf16>
    %cst_480 = arith.constant dense<0.000000e+00> : vector<32x32xf32>
    %1014 = tpu.matmul %1007, %1013, %cst_480 {dimension_numbers = #tpu.dot_dimension_numbers<[1], [0], [0], [1], [0, 0, 1, 1], [], []>} : vector<32x32xbf16>, vector<32x32xbf16>, vector<32x32xf32> -> vector<32x32xf32>
    %c0_481 = arith.constant 0 : index
    %c0_482 = arith.constant 0 : index
    %1015 = vector.load %arg13[%c0_481, %c0_482] : memref<1x32xf32, #tpu.memory_space<vmem>>, vector<1x32xf32>
    %1016 = vector.broadcast %1015 : vector<1x32xf32> to vector<32x32xf32>
    %1017 = arith.addf %1014, %1016 : vector<32x32xf32>
    %1018 = vector.shape_cast %1012 : vector<32x32xf32> to vector<2x16x32xf32>
    %c0_483 = arith.constant 0 : index
    %c0_484 = arith.constant 0 : index
    %c0_485 = arith.constant 0 : index
    %1019 = vector.load %arg15[%c0_483, %c0_484, %c0_485] : memref<2x16x32xf32, #tpu.memory_space<vmem>>, vector<2x16x32xf32>
    tpu.vector_store %arg15[%c0_483, %c0_484, %c0_485], %1018 {strides = array<i32>} : memref<2x16x32xf32, #tpu.memory_space<vmem>>, vector<2x16x32xf32>,
    %1020 = vector.shape_cast %1017 : vector<32x32xf32> to vector<2x16x32xf32>
    %c0_486 = arith.constant 0 : index
    %c0_487 = arith.constant 0 : index
    %c0_488 = arith.constant 0 : index
    %1021 = vector.load %arg14[%c0_486, %c0_487, %c0_488] : memref<2x16x32xf32, #tpu.memory_space<vmem>>, vector<2x16x32xf32>
    tpu.vector_store %arg14[%c0_486, %c0_487, %c0_488], %1020 {strides = array<i32>} : memref<2x16x32xf32, #tpu.memory_space<vmem>>, vector<2x16x32xf32>,
    return
  }
  func.func @transform_0(%arg0: i32) -> (i32, i32, i32) {
    %c0_i32 = arith.constant 0 : i32
    %c0_i32_0 = arith.constant 0 : i32
    %c0_i32_1 = arith.constant 0 : i32
    return %arg0, %c0_i32, %c0_i32_0 : i32, i32, i32
  }
  func.func @transform_1(%arg0: i32) -> (i32, i32, i32) {
    %c0_i32 = arith.constant 0 : i32
    %c0_i32_0 = arith.constant 0 : i32
    %c0_i32_1 = arith.constant 0 : i32
    %c0_i32_2 = arith.constant 0 : i32
    return %c0_i32, %c0_i32_0, %c0_i32_1 : i32, i32, i32
  }
  func.func @transform_2(%arg0: i32) -> (i32, i32, i32) {
    %c0_i32 = arith.constant 0 : i32
    %c0_i32_0 = arith.constant 0 : i32
    %c0_i32_1 = arith.constant 0 : i32
    %c0_i32_2 = arith.constant 0 : i32
    return %c0_i32, %c0_i32_0, %c0_i32_1 : i32, i32, i32
  }
  func.func @transform_3(%arg0: i32) -> (i32, i32, i32) {
    %c0_i32 = arith.constant 0 : i32
    %c0_i32_0 = arith.constant 0 : i32
    %c0_i32_1 = arith.constant 0 : i32
    %c0_i32_2 = arith.constant 0 : i32
    return %c0_i32, %c0_i32_0, %c0_i32_1 : i32, i32, i32
  }
  func.func @transform_4(%arg0: i32) -> (i32, i32, i32) {
    %c0_i32 = arith.constant 0 : i32
    %c0_i32_0 = arith.constant 0 : i32
    %c0_i32_1 = arith.constant 0 : i32
    %c0_i32_2 = arith.constant 0 : i32
    return %c0_i32, %c0_i32_0, %c0_i32_1 : i32, i32, i32
  }
  func.func @transform_5(%arg0: i32) -> (i32, i32, i32) {
    %c0_i32 = arith.constant 0 : i32
    %c0_i32_0 = arith.constant 0 : i32
    %c0_i32_1 = arith.constant 0 : i32
    %c0_i32_2 = arith.constant 0 : i32
    return %c0_i32, %c0_i32_0, %c0_i32_1 : i32, i32, i32
  }
  func.func @transform_6(%arg0: i32) -> (i32, i32, i32) {
    %c0_i32 = arith.constant 0 : i32
    %c0_i32_0 = arith.constant 0 : i32
    %c0_i32_1 = arith.constant 0 : i32
    %c0_i32_2 = arith.constant 0 : i32
    return %c0_i32, %c0_i32_0, %c0_i32_1 : i32, i32, i32
  }
  func.func @transform_7(%arg0: i32) -> (i32, i32, i32) {
    %c0_i32 = arith.constant 0 : i32
    %c0_i32_0 = arith.constant 0 : i32
    %c0_i32_1 = arith.constant 0 : i32
    %c0_i32_2 = arith.constant 0 : i32
    return %c0_i32, %c0_i32_0, %c0_i32_1 : i32, i32, i32
  }
  func.func @transform_8(%arg0: i32) -> (i32, i32, i32) {
    %c0_i32 = arith.constant 0 : i32
    %c0_i32_0 = arith.constant 0 : i32
    %c0_i32_1 = arith.constant 0 : i32
    %c0_i32_2 = arith.constant 0 : i32
    return %c0_i32, %c0_i32_0, %c0_i32_1 : i32, i32, i32
  }
  func.func @transform_9(%arg0: i32) -> (i32, i32) {
    %c0_i32 = arith.constant 0 : i32
    %c0_i32_0 = arith.constant 0 : i32
    %c0_i32_1 = arith.constant 0 : i32
    return %c0_i32, %c0_i32_0 : i32, i32
  }
  func.func @transform_10(%arg0: i32) -> (i32, i32) {
    %c0_i32 = arith.constant 0 : i32
    %c0_i32_0 = arith.constant 0 : i32
    %c0_i32_1 = arith.constant 0 : i32
    return %c0_i32, %c0_i32_0 : i32, i32
  }
  func.func @transform_11(%arg0: i32) -> (i32, i32) {
    %c0_i32 = arith.constant 0 : i32
    %c0_i32_0 = arith.constant 0 : i32
    %c0_i32_1 = arith.constant 0 : i32
    return %c0_i32, %c0_i32_0 : i32, i32
  }
  func.func @transform_12(%arg0: i32) -> (i32, i32) {
    %c0_i32 = arith.constant 0 : i32
    %c0_i32_0 = arith.constant 0 : i32
    %c0_i32_1 = arith.constant 0 : i32
    return %c0_i32, %c0_i32_0 : i32, i32
  }
  func.func @transform_13(%arg0: i32) -> (i32, i32, i32) {
    %c0_i32 = arith.constant 0 : i32
    %c0_i32_0 = arith.constant 0 : i32
    %c0_i32_1 = arith.constant 0 : i32
    return %arg0, %c0_i32, %c0_i32_0 : i32, i32, i32
  }
  func.func @transform_14(%arg0: i32) -> (i32, i32, i32) {
    %c0_i32 = arith.constant 0 : i32
    %c0_i32_0 = arith.constant 0 : i32
    %c0_i32_1 = arith.constant 0 : i32
    return %arg0, %c0_i32, %c0_i32_0 : i32, i32, i32
  }
}

</mosaic_0001>

<llo_original>
// kernel: tpu_custom_call.1
$region0: #{tpu_custom_call.1}
  #allocation0 [shape = 'u32[]', space=smem, size = 0x4, offset = 0x4, fixed_abs, tag = 'smem constant byte address 0x4 - core index']
  #allocation1 [shape = 'u32[72,128]{1,0:T(1,128)}', space=vmem, size = 0x9000, scoped, tag = 'internal scratch']
  #allocation2 [shape = 'f32[2,32,32]{2,1,0:T(8,128)}', space=vmem, size = 0x8000, scoped, tag = 'scratch operand']
  %s0 = inlined_call_operand.hbm [shape: f32[2,16,32], index: 0, kind: input, shape index: {}]
  %s1 = inlined_call_operand.hbm [shape: f32[9,1,32], index: 1, kind: input, shape index: {}]
  %s2 = inlined_call_operand.hbm [shape: f32[9,1,32], index: 2, kind: input, shape index: {}]
  %s3 = inlined_call_operand.hbm [shape: f32[9,17,32], index: 3, kind: input, shape index: {}]
  %s4 = inlined_call_operand.hbm [shape: f32[9,1,32], index: 4, kind: input, shape index: {}]
  %s5 = inlined_call_operand.hbm [shape: bf16[9,32,32], index: 5, kind: input, shape index: {}]
  %s6 = inlined_call_operand.hbm [shape: f32[9,1,32], index: 6, kind: input, shape index: {}]
  %s7 = inlined_call_operand.vmem [shape: f32[2,1,32], index: 7, kind: input, shape index: {}]
  %s8 = inlined_call_operand.vmem [shape: f32[2,1,32], index: 8, kind: input, shape index: {}]
  %s9 = inlined_call_operand.hbm [shape: bf16[32,32], index: 9, kind: input, shape index: {}]
  %s10 = inlined_call_operand.hbm [shape: bf16[32,32], index: 10, kind: input, shape index: {}]
  %s11 = inlined_call_operand.vmem [shape: f32[1,32], index: 11, kind: input, shape index: {}]
  %s12 = inlined_call_operand.vmem [shape: f32[1,32], index: 12, kind: input, shape index: {}]
  %s13 = inlined_call_operand.hbm [shape: f32[2,16,32], index: 13, kind: output, shape index: {0}]
  %s14 = inlined_call_operand.hbm [shape: f32[2,16,32], index: 14, kind: output, shape index: {1}]
  %15 = xla_tuple %s13, %s14
  %s16 = sld [smem:[#allocation0]]
  $region106: #{tpu_custom_call.1} parent=0
    _
  %s18 = ssub.s32 1, %s16
  %s19 = scalar_select 0, %s18, %s16
  $region1: #{tpu_custom_call.1} parent=0
    #allocation3 [shape = 'u8[16384]{0}', space=vmem, size = 0x4000, scoped, tag = 'input window, operand 0, single buffered']
    #allocation4 [shape = 's32[1]{0}', space=sflag, size = 0x4, scoped, tag = 'scoped memory for tpu_custom_call.1']
    #allocation5 [shape = 's32[1]{0}', space=sflag, size = 0x4, scoped, tag = 'scoped memory for tpu_custom_call.1']
    #allocation6 [shape = 'u8[4608]{0}', space=vmem, size = 0x1400, scoped, tag = 'input window, operand 1, single buffered']
    #allocation7 [shape = 's32[1]{0}', space=sflag, size = 0x4, scoped, tag = 'scoped memory for tpu_custom_call.1']
    #allocation8 [shape = 'u8[4608]{0}', space=vmem, size = 0x1400, scoped, tag = 'input window, operand 2, single buffered']
    #allocation9 [shape = 'u8[110592]{0}', space=vmem, size = 0x1b000, scoped, tag = 'input window, operand 3, single buffered']
    #allocation10 [shape = 's32[1]{0}', space=sflag, size = 0x4, scoped, tag = 'scoped memory for tpu_custom_call.1']
    #allocation11 [shape = 'u8[4608]{0}', space=vmem, size = 0x1400, scoped, tag = 'input window, operand 4, single buffered']
    #allocation12 [shape = 'u8[73728]{0}', space=vmem, size = 0x12000, scoped, tag = 'input window, operand 5, single buffered']
    #allocation13 [shape = 's32[1]{0}', space=sflag, size = 0x4, scoped, tag = 'scoped memory for tpu_custom_call.1']
    #allocation14 [shape = 'u8[4608]{0}', space=vmem, size = 0x1400, scoped, tag = 'input window, operand 6, single buffered']
    #allocation15 [shape = 'u8[8192]{0}', space=vmem, size = 0x2000, scoped, tag = 'input window, operand 9, single buffered']
    #allocation16 [shape = 's32[1]{0}', space=sflag, size = 0x4, scoped, tag = 'scoped memory for tpu_custom_call.1']
    #allocation17 [shape = 'u8[8192]{0}', space=vmem, size = 0x2000, scoped, tag = 'input window, operand 10, single buffered']
    #allocation18 [shape = 'u8[16384]{0}', space=vmem, size = 0x4000, scoped, tag = 'output window, operand 0, single buffered']
    #allocation19 [shape = 'u8[16384]{0}', space=vmem, size = 0x4000, scoped, tag = 'output window, operand 1, single buffered']
    #allocation20 [shape = 's32[1]{0}', space=sflag, size = 0x4, scoped, tag = 'scoped memory for tpu_custom_call.1']
    %20 = vsyncpa [#allocation4], 0
    %21 = vsyncpa [#allocation7], 0
    %22 = vsyncpa [#allocation10], 0
    %23 = vsyncpa [#allocation13], 0
    %24 = vsyncpa [#allocation16], 0
    %25 = vsyncpa [#allocation5], 0
    %26 = vsyncpa [#allocation20], 0
    // Predicated region
    $region2: #{tpu_custom_call.1} parent=1 // pred_check
      _
    $region3: #{tpu_custom_call.1} parent=1 // pred_check_branch
      %28 = sbr.rel (0) target = $region5
    $region4: #{tpu_custom_call.1} parent=1 // pred_region
      %30 = vsyncadd [#allocation4], 0
      %s31 = sshll.u32 %s0, 4
      %s32 = int_to_ptr.hbm [resolvable:$true] %s31
      %s33 = sshll.u32 [#allocation3], 4
      %s34 = int_to_ptr.vmem [resolvable:$true] %s33
      %39 = dma.hbm_to_vmem [thread:$0]  %s32, 512, %s34, [#allocation4], 128, 128, 8
    $region5: #{tpu_custom_call.1} parent=1 // pred_fallthru
      _
    // Predicated region
    $region6: #{tpu_custom_call.1} parent=1 // pred_check
      _
    $region7: #{tpu_custom_call.1} parent=1 // pred_check_branch
      %41 = sbr.rel (0) target = $region9
    $region8: #{tpu_custom_call.1} parent=1 // pred_region
      %43 = vsyncadd [#allocation7], 0
      %s44 = sshll.u32 %s1, 4
      %s45 = int_to_ptr.hbm [resolvable:$true] %s44
      %s46 = sshll.u32 [#allocation6], 4
      %s47 = int_to_ptr.vmem [resolvable:$true] %s46
      %52 = dma.hbm_to_vmem [thread:$0]  %s45, 144, %s47, [#allocation7], 16, 16, 1
    $region9: #{tpu_custom_call.1} parent=1 // pred_fallthru
      _
    // Predicated region
    $region10: #{tpu_custom_call.1} parent=1 // pred_check
      _
    $region11: #{tpu_custom_call.1} parent=1 // pred_check_branch
      %54 = sbr.rel (0) target = $region13
    $region12: #{tpu_custom_call.1} parent=1 // pred_region
      %56 = vsyncadd [#allocation7], 0
      %s57 = sshll.u32 %s2, 4
      %s58 = int_to_ptr.hbm [resolvable:$true] %s57
      %s59 = sshll.u32 [#allocation8], 4
      %s60 = int_to_ptr.vmem [resolvable:$true] %s59
      %65 = dma.hbm_to_vmem [thread:$0]  %s58, 144, %s60, [#allocation7], 16, 16, 1
    $region13: #{tpu_custom_call.1} parent=1 // pred_fallthru
      _
    // Predicated region
    $region14: #{tpu_custom_call.1} parent=1 // pred_check
      _
    $region15: #{tpu_custom_call.1} parent=1 // pred_check_branch
      %67 = sbr.rel (0) target = $region17
    $region16: #{tpu_custom_call.1} parent=1 // pred_region
      %69 = vsyncadd [#allocation10], 0
      %s70 = sshll.u32 %s3, 4
      %s71 = int_to_ptr.hbm [resolvable:$true] %s70
      %s72 = sshll.u32 [#allocation9], 4
      %s73 = int_to_ptr.vmem [resolvable:$true] %s72
      %78 = dma.hbm_to_vmem [thread:$0]  %s71, 3456, %s73, [#allocation10], 128, 128, 8
    $region17: #{tpu_custom_call.1} parent=1 // pred_fallthru
      _
    // Predicated region
    $region18: #{tpu_custom_call.1} parent=1 // pred_check
      _
    $region19: #{tpu_custom_call.1} parent=1 // pred_check_branch
      %80 = sbr.rel (0) target = $region21
    $region20: #{tpu_custom_call.1} parent=1 // pred_region
      %82 = vsyncadd [#allocation10], 0
      %s83 = sshll.u32 %s4, 4
      %s84 = int_to_ptr.hbm [resolvable:$true] %s83
      %s85 = sshll.u32 [#allocation11], 4
      %s86 = int_to_ptr.vmem [resolvable:$true] %s85
      %91 = dma.hbm_to_vmem [thread:$0]  %s84, 144, %s86, [#allocation10], 16, 16, 1
    $region21: #{tpu_custom_call.1} parent=1 // pred_fallthru
      _
    // Predicated region
    $region22: #{tpu_custom_call.1} parent=1 // pred_check
      _
    $region23: #{tpu_custom_call.1} parent=1 // pred_check_branch
      %93 = sbr.rel (0) target = $region25
    $region24: #{tpu_custom_call.1} parent=1 // pred_region
      %95 = vsyncadd [#allocation13], 0
      %s96 = sshll.u32 %s5, 4
      %s97 = int_to_ptr.hbm [resolvable:$true] %s96
      %s98 = sshll.u32 [#allocation12], 4
      %s99 = int_to_ptr.vmem [resolvable:$true] %s98
      %104 = dma.hbm_to_vmem [thread:$0]  %s97, 2304, %s99, [#allocation13], 64, 64, 4
    $region25: #{tpu_custom_call.1} parent=1 // pred_fallthru
      _
    // Predicated region
    $region26: #{tpu_custom_call.1} parent=1 // pred_check
      _
    $region27: #{tpu_custom_call.1} parent=1 // pred_check_branch
      %106 = sbr.rel (0) target = $region29
    $region28: #{tpu_custom_call.1} parent=1 // pred_region
      %108 = vsyncadd [#allocation13], 0
      %s109 = sshll.u32 %s6, 4
      %s110 = int_to_ptr.hbm [resolvable:$true] %s109
      %s111 = sshll.u32 [#allocation14], 4
      %s112 = int_to_ptr.vmem [resolvable:$true] %s111
      %117 = dma.hbm_to_vmem [thread:$0]  %s110, 144, %s112, [#allocation13], 16, 16, 1
    $region29: #{tpu_custom_call.1} parent=1 // pred_fallthru
      _
    // Predicated region
    $region30: #{tpu_custom_call.1} parent=1 // pred_check
      _
    $region31: #{tpu_custom_call.1} parent=1 // pred_check_branch
      %119 = sbr.rel (0) target = $region33
    $region32: #{tpu_custom_call.1} parent=1 // pred_region
      _
    $region33: #{tpu_custom_call.1} parent=1 // pred_fallthru
      _
    // Predicated region
    $region34: #{tpu_custom_call.1} parent=1 // pred_check
      _
    $region35: #{tpu_custom_call.1} parent=1 // pred_check_branch
      %121 = sbr.rel (0) target = $region37
    $region36: #{tpu_custom_call.1} parent=1 // pred_region
      _
    $region37: #{tpu_custom_call.1} parent=1 // pred_fallthru
      _
    // Predicated region
    $region38: #{tpu_custom_call.1} parent=1 // pred_check
      _
    $region39: #{tpu_custom_call.1} parent=1 // pred_check_branch
      %123 = sbr.rel (0) target = $region41
    $region40: #{tpu_custom_call.1} parent=1 // pred_region
      %125 = vsyncadd [#allocation16], 0
      %s126 = sshll.u32 %s9, 4
      %s127 = int_to_ptr.hbm [resolvable:$true] %s126
      %s128 = sshll.u32 [#allocation15], 4
      %s129 = int_to_ptr.vmem [resolvable:$true] %s128
      %134 = dma.hbm_to_vmem [thread:$0]  %s127, 256, %s129, [#allocation16], 64, 64, 4
    $region41: #{tpu_custom_call.1} parent=1 // pred_fallthru
      _
    // Predicated region
    $region42: #{tpu_custom_call.1} parent=1 // pred_check
      _
    $region43: #{tpu_custom_call.1} parent=1 // pred_check_branch
      %136 = sbr.rel (0) target = $region45
    $region44: #{tpu_custom_call.1} parent=1 // pred_region
      %138 = vsyncadd [#allocation16], 0
      %s139 = sshll.u32 %s10, 4
      %s140 = int_to_ptr.hbm [resolvable:$true] %s139
      %s141 = sshll.u32 [#allocation17], 4
      %s142 = int_to_ptr.vmem [resolvable:$true] %s141
      %147 = dma.hbm_to_vmem [thread:$0]  %s140, 256, %s142, [#allocation16], 64, 64, 4
    $region45: #{tpu_custom_call.1} parent=1 // pred_fallthru
      _
    // Predicated region
    $region46: #{tpu_custom_call.1} parent=1 // pred_check
      _
    $region47: #{tpu_custom_call.1} parent=1 // pred_check_branch
      %149 = sbr.rel (0) target = $region49
    $region48: #{tpu_custom_call.1} parent=1 // pred_region
      _
    $region49: #{tpu_custom_call.1} parent=1 // pred_fallthru
      _
    // Predicated region
    $region50: #{tpu_custom_call.1} parent=1 // pred_check
      _
    $region51: #{tpu_custom_call.1} parent=1 // pred_check_branch
      %151 = sbr.rel (0) target = $region53
    $region52: #{tpu_custom_call.1} parent=1 // pred_region
      _
    $region53: #{tpu_custom_call.1} parent=1 // pred_fallthru
      _
    // Predicated region
    $region54: #{tpu_custom_call.1} parent=1 // pred_check
      _
    $region55: #{tpu_custom_call.1} parent=1 // pred_check_branch
      %153 = sbr.rel (0) target = $region57
    $region56: #{tpu_custom_call.1} parent=1 // pred_region
      %155 = dma.done [#allocation4], 512
    $region57: #{tpu_custom_call.1} parent=1 // pred_fallthru
      _
    // Predicated region
    $region58: #{tpu_custom_call.1} parent=1 // pred_check
      _
    $region59: #{tpu_custom_call.1} parent=1 // pred_check_branch
      %157 = sbr.rel (0) target = $region61
    $region60: #{tpu_custom_call.1} parent=1 // pred_region
      %159 = dma.done [#allocation7], 144
    $region61: #{tpu_custom_call.1} parent=1 // pred_fallthru
      _
    // Predicated region
    $region62: #{tpu_custom_call.1} parent=1 // pred_check
      _
    $region63: #{tpu_custom_call.1} parent=1 // pred_check_branch
      %161 = sbr.rel (0) target = $region65
    $region64: #{tpu_custom_call.1} parent=1 // pred_region
      %163 = dma.done [#allocation7], 144
    $region65: #{tpu_custom_call.1} parent=1 // pred_fallthru
      _
    // Predicated region
    $region66: #{tpu_custom_call.1} parent=1 // pred_check
      _
    $region67: #{tpu_custom_call.1} parent=1 // pred_check_branch
      %165 = sbr.rel (0) target = $region69
    $region68: #{tpu_custom_call.1} parent=1 // pred_region
      %167 = dma.done [#allocation10], 3456
    $region69: #{tpu_custom_call.1} parent=1 // pred_fallthru
      _
    // Predicated region
    $region70: #{tpu_custom_call.1} parent=1 // pred_check
      _
    $region71: #{tpu_custom_call.1} parent=1 // pred_check_branch
      %169 = sbr.rel (0) target = $region73
    $region72: #{tpu_custom_call.1} parent=1 // pred_region
      %171 = dma.done [#allocation10], 144
    $region73: #{tpu_custom_call.1} parent=1 // pred_fallthru
      _
    // Predicated region
    $region74: #{tpu_custom_call.1} parent=1 // pred_check
      _
    $region75: #{tpu_custom_call.1} parent=1 // pred_check_branch
      %173 = sbr.rel (0) target = $region77
    $region76: #{tpu_custom_call.1} parent=1 // pred_region
      %175 = dma.done [#allocation13], 2304
    $region77: #{tpu_custom_call.1} parent=1 // pred_fallthru
      _
    // Predicated region
    $region78: #{tpu_custom_call.1} parent=1 // pred_check
      _
    $region79: #{tpu_custom_call.1} parent=1 // pred_check_branch
      %177 = sbr.rel (0) target = $region81
    $region80: #{tpu_custom_call.1} parent=1 // pred_region
      %179 = dma.done [#allocation13], 144
    $region81: #{tpu_custom_call.1} parent=1 // pred_fallthru
      _
    // Predicated region
    $region82: #{tpu_custom_call.1} parent=1 // pred_check
      _
    $region83: #{tpu_custom_call.1} parent=1 // pred_check_branch
      %181 = sbr.rel (0) target = $region85
    $region84: #{tpu_custom_call.1} parent=1 // pred_region
      %183 = dma.done [#allocation16], 256
    $region85: #{tpu_custom_call.1} parent=1 // pred_fallthru
      _
    // Predicated region
    $region86: #{tpu_custom_call.1} parent=1 // pred_check
      _
    $region87: #{tpu_custom_call.1} parent=1 // pred_check_branch
      %185 = sbr.rel (0) target = $region89
    $region88: #{tpu_custom_call.1} parent=1 // pred_region
      %187 = dma.done [#allocation16], 256
    $region89: #{tpu_custom_call.1} parent=1 // pred_fallthru
      _
    %vm189 = vcmask 261120
    %190 = vst.msk [vmem:[#allocation2] sm:$0xff] %vm189, 0.0
    %191 = vst.msk [vmem:[#allocation2 + $0x20] sm:$0xff] %vm189, 0.0
    %192 = vst.msk [vmem:[#allocation2 + $0x18] sm:$0xff] %vm189, 0.0
    %193 = vst.msk [vmem:[#allocation2 + $0x38] sm:$0xff] %vm189, 0.0
    %v194 = vld [vmem:[#allocation3] sm:$0xff]
    %v195 = vld [vmem:[#allocation3 + $0x8] sm:$0xff]
    %v196 = vld [vmem:[#allocation3 + $0x10] sm:$0xff]
    %v197 = vld [vmem:[#allocation3 + $0x18] sm:$0xff]
    %v198 = vld [vmem:[#allocation6] sm:$0x1]
    %v199 = vld [vmem:[#allocation8] sm:$0x1]
    %v200 = vsel %vm189, %v194, 0.0
    %201 = vadd.xlane.f32.xlu0 %v200
    %v202 = vpop.xlane.xlu0 %201
    %v203 = vsel %vm189, %v195, 0.0
    %204 = vadd.xlane.f32.xlu0 %v203
    %v205 = vpop.xlane.xlu0 %204
    %v206 = vsel %vm189, %v196, 0.0
    %207 = vadd.xlane.f32.xlu0 %v206
    %v208 = vpop.xlane.xlu0 %207
    %v209 = vsel %vm189, %v197, 0.0
    %210 = vadd.xlane.f32.xlu0 %v209
    %v211 = vpop.xlane.xlu0 %210
    %v212 = vrcp.pop 32.0
    %v213 = vmul.f32 32.0, %v212
    %v214 = vsub.f32 1.0, %v213
    %v215 = vmul.f32 %v212, %v214
    %v216 = vadd.f32 %v212, %v215
    %vm217 = vweird.f32 %v212
    %v218 = vsel %vm217, %v212, %v216
    %v219 = vmul.f32 %v202, %v218
    %v220 = vmul.f32 %v205, %v218
    %v221 = vmul.f32 %v208, %v218
    %v222 = vmul.f32 %v211, %v218
    %v223 = vsub.f32 %v194, %v219
    %v224 = vsub.f32 %v195, %v220
    %v225 = vsub.f32 %v196, %v221
    %v226 = vsub.f32 %v197, %v222
    %v227 = vmul.f32 %v223, %v223
    %v228 = vmul.f32 %v224, %v224
    %v229 = vmul.f32 %v225, %v225
    %v230 = vmul.f32 %v226, %v226
    %v231 = vsel %vm189, %v227, 0.0
    %232 = vadd.xlane.f32.xlu0 %v231
    %v233 = vpop.xlane.xlu0 %232
    %v234 = vsel %vm189, %v228, 0.0
    %235 = vadd.xlane.f32.xlu0 %v234
    %v236 = vpop.xlane.xlu0 %235
    %v237 = vsel %vm189, %v229, 0.0
    %238 = vadd.xlane.f32.xlu0 %v237
    %v239 = vpop.xlane.xlu0 %238
    %v240 = vsel %vm189, %v230, 0.0
    %241 = vadd.xlane.f32.xlu0 %v240
    %v242 = vpop.xlane.xlu0 %241
    %v243 = vmul.f32 %v233, %v218
    %v244 = vmul.f32 %v236, %v218
    %v245 = vmul.f32 %v239, %v218
    %v246 = vmul.f32 %v242, %v218
    %v247 = vadd.f32 %v243, 1e-05
    %v248 = vadd.f32 %v244, 1e-05
    %v249 = vadd.f32 %v245, 1e-05
    %v250 = vadd.f32 %v246, 1e-05
    %v251 = vrsqrt.pop %v247
    %v252 = vmul.f32 %v251, %v247
    %v253 = vmul.f32 %v252, %v251
    %v254 = vmul.f32 0.5, %v253
    %v255 = vsub.f32 1.5, %v254
    %v256 = vmul.f32 %v251, %v255
    %vm257 = vweird.f32 %v247
    %vm258 = vweird.f32 %v251
    %vm259 = vmor %vm257, %vm258
    %v260 = vsel %vm259, %v251, %v256
    %v261 = vrsqrt.pop %v248
    %v262 = vmul.f32 %v261, %v248
    %v263 = vmul.f32 %v262, %v261
    %v264 = vmul.f32 0.5, %v263
    %v265 = vsub.f32 1.5, %v264
    %v266 = vmul.f32 %v261, %v265
    %vm267 = vweird.f32 %v248
    %vm268 = vweird.f32 %v261
    %vm269 = vmor %vm267, %vm268
    %v270 = vsel %vm269, %v261, %v266
    %v271 = vrsqrt.pop %v249
    %v272 = vmul.f32 %v271, %v249
    %v273 = vmul.f32 %v272, %v271
    %v274 = vmul.f32 0.5, %v273
    %v275 = vsub.f32 1.5, %v274
    %v276 = vmul.f32 %v271, %v275
    %vm277 = vweird.f32 %v249
    %vm278 = vweird.f32 %v271
    %vm279 = vmor %vm277, %vm278
    %v280 = vsel %vm279, %v271, %v276
    %v281 = vrsqrt.pop %v250
    %v282 = vmul.f32 %v281, %v250
    %v283 = vmul.f32 %v282, %v281
    %v284 = vmul.f32 0.5, %v283
    %v285 = vsub.f32 1.5, %v284
    %v286 = vmul.f32 %v281, %v285
    %vm287 = vweird.f32 %v250
    %vm288 = vweird.f32 %v281
    %vm289 = vmor %vm287, %vm288
    %v290 = vsel %vm289, %v281, %v286
    %v291 = vmul.f32 %v223, %v260
    %v292 = vmul.f32 %v224, %v270
    %v293 = vmul.f32 %v225, %v280
    %v294 = vmul.f32 %v226, %v290
    %v296 = vperm.slane %v198, 0
    %v298 = vmul.f32 %v291, %v296
    %v299 = vmul.f32 %v292, %v296
    %v300 = vmul.f32 %v293, %v296
    %v301 = vmul.f32 %v294, %v296
    %v303 = vperm.slane %v199, 0
    %v305 = vadd.f32 %v298, %v303
    %v306 = vadd.f32 %v299, %v303
    %v307 = vadd.f32 %v300, %v303
    %v308 = vadd.f32 %v301, %v303
    %309 = vst.msk [vmem:[#allocation2 + $0x8] sm:$0xff] %vm189, %v305
    %310 = vst.msk [vmem:[#allocation2 + $0x10] sm:$0xff] %vm189, %v306
    %311 = vst.msk [vmem:[#allocation2 + $0x28] sm:$0xff] %vm189, %v307
    %312 = vst.msk [vmem:[#allocation2 + $0x30] sm:$0xff] %vm189, %v308
    %v313 = vld [vmem:[#allocation9] sm:$0xff]
    %v314 = vld [vmem:[#allocation9 + $0x8] sm:$0xff]
    %v315 = vld [vmem:[#allocation9 + $0x10] sm:$0x1]
    %v316 = vperm.slane %v314, 0
    %v317 = vmul.f32 %v305, %v316
    %v318 = vmul.f32 %v306, %v316
    %v319 = vmul.f32 %v307, %v316
    %v320 = vmul.f32 %v308, %v316
    %v321 = vld [vmem:[#allocation2] sm:$0xff]
    %v322 = vld [vmem:[#allocation2 + $0x8] sm:$0xff]
    %v323 = vld [vmem:[#allocation2 + $0x20] sm:$0xff]
    %v324 = vld [vmem:[#allocation2 + $0x28] sm:$0xff]
    %v325 = vperm.slane %v313, 0
    %v326 = vmul.f32 %v321, %v325
    %v327 = vmul.f32 %v322, %v325
    %v328 = vmul.f32 %v323, %v325
    %v329 = vmul.f32 %v324, %v325
    %v330 = vadd.f32 %v317, %v326
    %v331 = vadd.f32 %v318, %v327
    %v332 = vadd.f32 %v319, %v328
    %v333 = vadd.f32 %v320, %v329
    %v334 = vld [vmem:[#allocation2 + $0x1] sm:$0xff]
    %v335 = vld [vmem:[#allocation2 + $0x9] sm:$0xff]
    %v336 = vld [vmem:[#allocation2 + $0x21] sm:$0xff]
    %v337 = vld [vmem:[#allocation2 + $0x29] sm:$0xff]
    %v338 = vperm.slane %v313, 1
    %v339 = vmul.f32 %v334, %v338
    %v340 = vmul.f32 %v335, %v338
    %v341 = vmul.f32 %v336, %v338
    %v342 = vmul.f32 %v337, %v338
    %v343 = vadd.f32 %v330, %v339
    %v344 = vadd.f32 %v331, %v340
    %v345 = vadd.f32 %v332, %v341
    %v346 = vadd.f32 %v333, %v342
    %v347 = vld [vmem:[#allocation2 + $0x2] sm:$0xff]
    %v348 = vld [vmem:[#allocation2 + $0xa] sm:$0xff]
    %v349 = vld [vmem:[#allocation2 + $0x22] sm:$0xff]
    %v350 = vld [vmem:[#allocation2 + $0x2a] sm:$0xff]
    %v351 = vperm.slane %v313, 2
    %v352 = vmul.f32 %v347, %v351
    %v353 = vmul.f32 %v348, %v351
    %v354 = vmul.f32 %v349, %v351
    %v355 = vmul.f32 %v350, %v351
    %v356 = vadd.f32 %v343, %v352
    %v357 = vadd.f32 %v344, %v353
    %v358 = vadd.f32 %v345, %v354
    %v359 = vadd.f32 %v346, %v355
    %v360 = vld [vmem:[#allocation2 + $0x3] sm:$0xff]
    %v361 = vld [vmem:[#allocation2 + $0xb] sm:$0xff]
    %v362 = vld [vmem:[#allocation2 + $0x23] sm:$0xff]
    %v363 = vld [vmem:[#allocation2 + $0x2b] sm:$0xff]
    %v364 = vperm.slane %v313, 3
    %v365 = vmul.f32 %v360, %v364
    %v366 = vmul.f32 %v361, %v364
    %v367 = vmul.f32 %v362, %v364
    %v368 = vmul.f32 %v363, %v364
    %v369 = vadd.f32 %v356, %v365
    %v370 = vadd.f32 %v357, %v366
    %v371 = vadd.f32 %v358, %v367
    %v372 = vadd.f32 %v359, %v368
    %v373 = vld [vmem:[#allocation2 + $0x4] sm:$0xff]
    %v374 = vld [vmem:[#allocation2 + $0xc] sm:$0xff]
    %v375 = vld [vmem:[#allocation2 + $0x24] sm:$0xff]
    %v376 = vld [vmem:[#allocation2 + $0x2c] sm:$0xff]
    %v377 = vperm.slane %v313, 4
    %v378 = vmul.f32 %v373, %v377
    %v379 = vmul.f32 %v374, %v377
    %v380 = vmul.f32 %v375, %v377
    %v381 = vmul.f32 %v376, %v377
    %v382 = vadd.f32 %v369, %v378
    %v383 = vadd.f32 %v370, %v379
    %v384 = vadd.f32 %v371, %v380
    %v385 = vadd.f32 %v372, %v381
    %v386 = vld [vmem:[#allocation2 + $0x5] sm:$0xff]
    %v387 = vld [vmem:[#allocation2 + $0xd] sm:$0xff]
    %v388 = vld [vmem:[#allocation2 + $0x25] sm:$0xff]
    %v389 = vld [vmem:[#allocation2 + $0x2d] sm:$0xff]
    %v390 = vperm.slane %v313, 5
    %v391 = vmul.f32 %v386, %v390
    %v392 = vmul.f32 %v387, %v390
    %v393 = vmul.f32 %v388, %v390
    %v394 = vmul.f32 %v389, %v390
    %v395 = vadd.f32 %v382, %v391
    %v396 = vadd.f32 %v383, %v392
    %v397 = vadd.f32 %v384, %v393
    %v398 = vadd.f32 %v385, %v394
    %v399 = vld [vmem:[#allocation2 + $0x6] sm:$0xff]
    %v400 = vld [vmem:[#allocation2 + $0xe] sm:$0xff]
    %v401 = vld [vmem:[#allocation2 + $0x26] sm:$0xff]
    %v402 = vld [vmem:[#allocation2 + $0x2e] sm:$0xff]
    %v403 = vperm.slane %v313, 6
    %v404 = vmul.f32 %v399, %v403
    %v405 = vmul.f32 %v400, %v403
    %v406 = vmul.f32 %v401, %v403
    %v407 = vmul.f32 %v402, %v403
    %v408 = vadd.f32 %v395, %v404
    %v409 = vadd.f32 %v396, %v405
    %v410 = vadd.f32 %v397, %v406
    %v411 = vadd.f32 %v398, %v407
    %v412 = vld [vmem:[#allocation2 + $0x7] sm:$0xff]
    %v413 = vld [vmem:[#allocation2 + $0xf] sm:$0xff]
    %v414 = vld [vmem:[#allocation2 + $0x27] sm:$0xff]
    %v415 = vld [vmem:[#allocation2 + $0x2f] sm:$0xff]
    %v416 = vperm.slane %v313, 7
    %v417 = vmul.f32 %v412, %v416
    %v418 = vmul.f32 %v413, %v416
    %v419 = vmul.f32 %v414, %v416
    %v420 = vmul.f32 %v415, %v416
    %v421 = vadd.f32 %v408, %v417
    %v422 = vadd.f32 %v409, %v418
    %v423 = vadd.f32 %v410, %v419
    %v424 = vadd.f32 %v411, %v420
    %v425 = vld [vmem:[#allocation2 + $0x11] sm:$0xff]
    %v426 = vld [vmem:[#allocation2 + $0x31] sm:$0xff]
    %v427 = vperm.slane %v314, 1
    %v428 = vmul.f32 %v335, %v427
    %v429 = vmul.f32 %v425, %v427
    %v430 = vmul.f32 %v337, %v427
    %v431 = vmul.f32 %v426, %v427
    %v432 = vadd.f32 %v421, %v428
    %v433 = vadd.f32 %v422, %v429
    %v434 = vadd.f32 %v423, %v430
    %v435 = vadd.f32 %v424, %v431
    %v436 = vld [vmem:[#allocation2 + $0x12] sm:$0xff]
    %v437 = vld [vmem:[#allocation2 + $0x32] sm:$0xff]
    %v438 = vperm.slane %v314, 2
    %v439 = vmul.f32 %v348, %v438
    %v440 = vmul.f32 %v436, %v438
    %v441 = vmul.f32 %v350, %v438
    %v442 = vmul.f32 %v437, %v438
    %v443 = vadd.f32 %v432, %v439
    %v444 = vadd.f32 %v433, %v440
    %v445 = vadd.f32 %v434, %v441
    %v446 = vadd.f32 %v435, %v442
    %v447 = vld [vmem:[#allocation2 + $0x13] sm:$0xff]
    %v448 = vld [vmem:[#allocation2 + $0x33] sm:$0xff]
    %v449 = vperm.slane %v314, 3
    %v450 = vmul.f32 %v361, %v449
    %v451 = vmul.f32 %v447, %v449
    %v452 = vmul.f32 %v363, %v449
    %v453 = vmul.f32 %v448, %v449
    %v454 = vadd.f32 %v443, %v450
    %v455 = vadd.f32 %v444, %v451
    %v456 = vadd.f32 %v445, %v452
    %v457 = vadd.f32 %v446, %v453
    %v458 = vld [vmem:[#allocation2 + $0x14] sm:$0xff]
    %v459 = vld [vmem:[#allocation2 + $0x34] sm:$0xff]
    %v460 = vperm.slane %v314, 4
    %v461 = vmul.f32 %v374, %v460
    %v462 = vmul.f32 %v458, %v460
    %v463 = vmul.f32 %v376, %v460
    %v464 = vmul.f32 %v459, %v460
    %v465 = vadd.f32 %v454, %v461
    %v466 = vadd.f32 %v455, %v462
    %v467 = vadd.f32 %v456, %v463
    %v468 = vadd.f32 %v457, %v464
    %v469 = vld [vmem:[#allocation2 + $0x15] sm:$0xff]
    %v470 = vld [vmem:[#allocation2 + $0x35] sm:$0xff]
    %v471 = vperm.slane %v314, 5
    %v472 = vmul.f32 %v387, %v471
    %v473 = vmul.f32 %v469, %v471
    %v474 = vmul.f32 %v389, %v471
    %v475 = vmul.f32 %v470, %v471
    %v476 = vadd.f32 %v465, %v472
    %v477 = vadd.f32 %v466, %v473
    %v478 = vadd.f32 %v467, %v474
    %v479 = vadd.f32 %v468, %v475
    %v480 = vld [vmem:[#allocation2 + $0x16] sm:$0xff]
    %v481 = vld [vmem:[#allocation2 + $0x36] sm:$0xff]
    %v482 = vperm.slane %v314, 6
    %v483 = vmul.f32 %v400, %v482
    %v484 = vmul.f32 %v480, %v482
    %v485 = vmul.f32 %v402, %v482
    %v486 = vmul.f32 %v481, %v482
    %v487 = vadd.f32 %v476, %v483
    %v488 = vadd.f32 %v477, %v484
    %v489 = vadd.f32 %v478, %v485
    %v490 = vadd.f32 %v479, %v486
    %v491 = vld [vmem:[#allocation2 + $0x17] sm:$0xff]
    %v492 = vld [vmem:[#allocation2 + $0x37] sm:$0xff]
    %v493 = vperm.slane %v314, 7
    %v494 = vmul.f32 %v413, %v493
    %v495 = vmul.f32 %v491, %v493
    %v496 = vmul.f32 %v415, %v493
    %v497 = vmul.f32 %v492, %v493
    %v498 = vadd.f32 %v487, %v494
    %v499 = vadd.f32 %v488, %v495
    %v500 = vadd.f32 %v489, %v496
    %v501 = vadd.f32 %v490, %v497
    %v502 = vld [vmem:[#allocation2 + $0x10] sm:$0xff]
    %v503 = vld [vmem:[#allocation2 + $0x18] sm:$0xff]
    %v504 = vld [vmem:[#allocation2 + $0x30] sm:$0xff]
    %v505 = vld [vmem:[#allocation2 + $0x38] sm:$0xff]
    %v506 = vperm.slane %v315, 0
    %v507 = vmul.f32 %v502, %v506
    %v508 = vmul.f32 %v503, %v506
    %v509 = vmul.f32 %v504, %v506
    %v510 = vmul.f32 %v505, %v506
    %v511 = vadd.f32 %v498, %v507
    %v512 = vadd.f32 %v499, %v508
    %v513 = vadd.f32 %v500, %v509
    %v514 = vadd.f32 %v501, %v510
    %v515 = vld [vmem:[#allocation11] sm:$0x1]
    %v517 = vperm.slane %v515, 0
    %v519 = vadd.f32 %v511, %v517
    %v520 = vadd.f32 %v512, %v517
    %v521 = vadd.f32 %v513, %v517
    %v522 = vadd.f32 %v514, %v517
    %v523 = vmul.f32 %v519, %v519
    %v524 = vmul.f32 %v520, %v520
    %v525 = vmul.f32 %v521, %v521
    %v526 = vmul.f32 %v522, %v522
    %v527 = vmul.f32 %v519, %v523
    %v528 = vmul.f32 %v520, %v524
    %v529 = vmul.f32 %v521, %v525
    %v530 = vmul.f32 %v522, %v526
    %v531 = vmul.f32 %v527, 0.044715
    %v532 = vmul.f32 %v528, 0.044715
    %v533 = vmul.f32 %v529, 0.044715
    %v534 = vmul.f32 %v530, 0.044715
    %v535 = vadd.f32 %v519, %v531
    %v536 = vadd.f32 %v520, %v532
    %v537 = vadd.f32 %v521, %v533
    %v538 = vadd.f32 %v522, %v534
    %v539 = vmul.f32 %v535, 0.7978846
    %v540 = vmul.f32 %v536, 0.7978846
    %v541 = vmul.f32 %v537, 0.7978846
    %v542 = vmul.f32 %v538, 0.7978846
    %v543 = vtanh.pop %v539
    %v544 = vtanh.pop %v540
    %v545 = vtanh.pop %v541
    %v546 = vtanh.pop %v542
    %v547 = vadd.f32 %v543, 1.0
    %v548 = vadd.f32 %v544, 1.0
    %v549 = vadd.f32 %v545, 1.0
    %v550 = vadd.f32 %v546, 1.0
    %v551 = vmul.f32 %v547, 0.5
    %v552 = vmul.f32 %v548, 0.5
    %v553 = vmul.f32 %v549, 0.5
    %v554 = vmul.f32 %v550, 0.5
    %v555 = vmul.f32 %v519, %v551
    %v556 = vmul.f32 %v520, %v552
    %v557 = vmul.f32 %v521, %v553
    %v558 = vmul.f32 %v522, %v554
    %v559 = vpack.c.bf16 %v556, %v555
    %v560 = vpack.c.bf16 %v558, %v557
    %v561 = vld [vmem:[#allocation12] sm:$0xf]
    %v562 = vld [vmem:[#allocation12 + $0x4] sm:$0xf]
    %v563 = vld [vmem:[#allocation12 + $0x8] sm:$0xf]
    %v564 = vld [vmem:[#allocation12 + $0xc] sm:$0xf]
    %v569 = vunpack.c.l.b16 %v561
    %v570 = vunpack.c.l.b16 %v562
    %v571 = vunpack.c.l.b16 %v563
    %v572 = vunpack.c.l.b16 %v564
    %v573 = vpack.c.b16 %v570, %v569
    %v574 = vpack.c.b16 %v572, %v571
    %v578 = vsel %vm189, %v559, 0
    %v581 = vsel %vm189, %v560, 0
    %583 = vmatpush.bf16.msra.mxu0 0
    %584 = vmatpush.bf16.msra.mxu0 0
    %585 = vmatpush.bf16.msra.mxu0 0
    %586 = vmatpush.bf16.msra.mxu0 0
    %587 = vmatpush.bf16.msra.mxu0 0
    %588 = vmatpush.bf16.msra.mxu0 0
    %589 = vmatpush.bf16.msra.mxu0 %v574
    %590 = vmatpush.bf16.msra.mxu0 %v573
    %591 = vmatmul.bf16.gmra.mxu0 %v578
    %v592 = vpop.f32.mrf.mxu0
    %v593 = vadd.f32 0.0, %v592
    %v594 = vpop.f32.mrf.mxu0
    %v595 = vadd.f32 0.0, %v594
    %596 = vmatmul.bf16.gmra.mxu0 %v581
    %v597 = vpop.f32.mrf.mxu0
    %v598 = vadd.f32 0.0, %v597
    %v599 = vpop.f32.mrf.mxu0
    %v600 = vadd.f32 0.0, %v599
    %601 = vdwg.mxu0
    %v602 = vld [vmem:[#allocation14] sm:$0x1]
    %v604 = vperm.slane %v602, 0
    %v606 = vadd.f32 %v593, %v604
    %v607 = vadd.f32 %v595, %v604
    %v608 = vadd.f32 %v598, %v604
    %v609 = vadd.f32 %v600, %v604
    %v610 = vadd.f32 %v194, %v606
    %v611 = vadd.f32 %v195, %v607
    %v612 = vadd.f32 %v196, %v608
    %v613 = vadd.f32 %v197, %v609
    %s614 = scalar_lea.vmem [#allocation6], 1
    %v615 = vld [vmem:[%s614] sm:$0x1]
    %s616 = scalar_lea.vmem [#allocation8], 1
    %v617 = vld [vmem:[%s616] sm:$0x1]
    %v618 = vsel %vm189, %v610, 0.0
    %619 = vadd.xlane.f32.xlu0 %v618
    %v620 = vpop.xlane.xlu0 %619
    %v621 = vsel %vm189, %v611, 0.0
    %622 = vadd.xlane.f32.xlu0 %v621
    %v623 = vpop.xlane.xlu0 %622
    %v624 = vsel %vm189, %v612, 0.0
    %625 = vadd.xlane.f32.xlu0 %v624
    %v626 = vpop.xlane.xlu0 %625
    %v627 = vsel %vm189, %v613, 0.0
    %628 = vadd.xlane.f32.xlu0 %v627
    %v629 = vpop.xlane.xlu0 %628
    %v630 = vmul.f32 %v620, %v218
    %v631 = vmul.f32 %v623, %v218
    %v632 = vmul.f32 %v626, %v218
    %v633 = vmul.f32 %v629, %v218
    %v634 = vsub.f32 %v610, %v630
    %v635 = vsub.f32 %v611, %v631
    %v636 = vsub.f32 %v612, %v632
    %v637 = vsub.f32 %v613, %v633
    %v638 = vmul.f32 %v634, %v634
    %v639 = vmul.f32 %v635, %v635
    %v640 = vmul.f32 %v636, %v636
    %v641 = vmul.f32 %v637, %v637
    %v642 = vsel %vm189, %v638, 0.0
    %643 = vadd.xlane.f32.xlu0 %v642
    %v644 = vpop.xlane.xlu0 %643
    %v645 = vsel %vm189, %v639, 0.0
    %646 = vadd.xlane.f32.xlu0 %v645
    %v647 = vpop.xlane.xlu0 %646
    %v648 = vsel %vm189, %v640, 0.0
    %649 = vadd.xlane.f32.xlu0 %v648
    %v650 = vpop.xlane.xlu0 %649
    %v651 = vsel %vm189, %v641, 0.0
    %652 = vadd.xlane.f32.xlu0 %v651
    %v653 = vpop.xlane.xlu0 %652
    %v654 = vmul.f32 %v644, %v218
    %v655 = vmul.f32 %v647, %v218
    %v656 = vmul.f32 %v650, %v218
    %v657 = vmul.f32 %v653, %v218
    %v658 = vadd.f32 %v654, 1e-05
    %v659 = vadd.f32 %v655, 1e-05
    %v660 = vadd.f32 %v656, 1e-05
    %v661 = vadd.f32 %v657, 1e-05
    %v662 = vrsqrt.pop %v658
    %v663 = vmul.f32 %v662, %v658
    %v664 = vmul.f32 %v663, %v662
    %v665 = vmul.f32 0.5, %v664
    %v666 = vsub.f32 1.5, %v665
    %v667 = vmul.f32 %v662, %v666
    %vm668 = vweird.f32 %v658
    %vm669 = vweird.f32 %v662
    %vm670 = vmor %vm668, %vm669
    %v671 = vsel %vm670, %v662, %v667
    %v672 = vrsqrt.pop %v659
    %v673 = vmul.f32 %v672, %v659
    %v674 = vmul.f32 %v673, %v672
    %v675 = vmul.f32 0.5, %v674
    %v676 = vsub.f32 1.5, %v675
    %v677 = vmul.f32 %v672, %v676
    %vm678 = vweird.f32 %v659
    %vm679 = vweird.f32 %v672
    %vm680 = vmor %vm678, %vm679
    %v681 = vsel %vm680, %v672, %v677
    %v682 = vrsqrt.pop %v660
    %v683 = vmul.f32 %v682, %v660
    %v684 = vmul.f32 %v683, %v682
    %v685 = vmul.f32 0.5, %v684
    %v686 = vsub.f32 1.5, %v685
    %v687 = vmul.f32 %v682, %v686
    %vm688 = vweird.f32 %v660
    %vm689 = vweird.f32 %v682
    %vm690 = vmor %vm688, %vm689
    %v691 = vsel %vm690, %v682, %v687
    %v692 = vrsqrt.pop %v661
    %v693 = vmul.f32 %v692, %v661
    %v694 = vmul.f32 %v693, %v692
    %v695 = vmul.f32 0.5, %v694
    %v696 = vsub.f32 1.5, %v695
    %v697 = vmul.f32 %v692, %v696
    %vm698 = vweird.f32 %v661
    %vm699 = vweird.f32 %v692
    %vm700 = vmor %vm698, %vm699
    %v701 = vsel %vm700, %v692, %v697
    %v702 = vmul.f32 %v634, %v671
    %v703 = vmul.f32 %v635, %v681
    %v704 = vmul.f32 %v636, %v691
    %v705 = vmul.f32 %v637, %v701
    %v707 = vperm.slane %v615, 0
    %v709 = vmul.f32 %v702, %v707
    %v710 = vmul.f32 %v703, %v707
    %v711 = vmul.f32 %v704, %v707
    %v712 = vmul.f32 %v705, %v707
    %v714 = vperm.slane %v617, 0
    %v716 = vadd.f32 %v709, %v714
    %v717 = vadd.f32 %v710, %v714
    %v718 = vadd.f32 %v711, %v714
    %v719 = vadd.f32 %v712, %v714
    %720 = vst.msk [vmem:[#allocation2 + $0x8] sm:$0xff] %vm189, %v716
    %721 = vst.msk [vmem:[#allocation2 + $0x10] sm:$0xff] %vm189, %v717
    %722 = vst.msk [vmem:[#allocation2 + $0x28] sm:$0xff] %vm189, %v718
    %723 = vst.msk [vmem:[#allocation2 + $0x30] sm:$0xff] %vm189, %v719
    %s724 = scalar_lea.vmem [#allocation9], 24
    %v725 = vld [vmem:[%s724] sm:$0xff]
    %v726 = vld [vmem:[%s724 + $0x8] sm:$0xff]
    %v727 = vld [vmem:[%s724 + $0x10] sm:$0x1]
    %v728 = vperm.slane %v726, 0
    %v729 = vmul.f32 %v716, %v728
    %v730 = vmul.f32 %v717, %v728
    %v731 = vmul.f32 %v718, %v728
    %v732 = vmul.f32 %v719, %v728
    %v733 = vld [vmem:[#allocation2] sm:$0xff]
    %v734 = vld [vmem:[#allocation2 + $0x8] sm:$0xff]
    %v735 = vld [vmem:[#allocation2 + $0x20] sm:$0xff]
    %v736 = vld [vmem:[#allocation2 + $0x28] sm:$0xff]
    %v737 = vperm.slane %v725, 0
    %v738 = vmul.f32 %v733, %v737
    %v739 = vmul.f32 %v734, %v737
    %v740 = vmul.f32 %v735, %v737
    %v741 = vmul.f32 %v736, %v737
    %v742 = vadd.f32 %v729, %v738
    %v743 = vadd.f32 %v730, %v739
    %v744 = vadd.f32 %v731, %v740
    %v745 = vadd.f32 %v732, %v741
    %v746 = vld [vmem:[#allocation2 + $0x1] sm:$0xff]
    %v747 = vld [vmem:[#allocation2 + $0x9] sm:$0xff]
    %v748 = vld [vmem:[#allocation2 + $0x21] sm:$0xff]
    %v749 = vld [vmem:[#allocation2 + $0x29] sm:$0xff]
    %v750 = vperm.slane %v725, 1
    %v751 = vmul.f32 %v746, %v750
    %v752 = vmul.f32 %v747, %v750
    %v753 = vmul.f32 %v748, %v750
    %v754 = vmul.f32 %v749, %v750
    %v755 = vadd.f32 %v742, %v751
    %v756 = vadd.f32 %v743, %v752
    %v757 = vadd.f32 %v744, %v753
    %v758 = vadd.f32 %v745, %v754
    %v759 = vld [vmem:[#allocation2 + $0x2] sm:$0xff]
    %v760 = vld [vmem:[#allocation2 + $0xa] sm:$0xff]
    %v761 = vld [vmem:[#allocation2 + $0x22] sm:$0xff]
    %v762 = vld [vmem:[#allocation2 + $0x2a] sm:$0xff]
    %v763 = vperm.slane %v725, 2
    %v764 = vmul.f32 %v759, %v763
    %v765 = vmul.f32 %v760, %v763
    %v766 = vmul.f32 %v761, %v763
    %v767 = vmul.f32 %v762, %v763
    %v768 = vadd.f32 %v755, %v764
    %v769 = vadd.f32 %v756, %v765
    %v770 = vadd.f32 %v757, %v766
    %v771 = vadd.f32 %v758, %v767
    %v772 = vld [vmem:[#allocation2 + $0x3] sm:$0xff]
    %v773 = vld [vmem:[#allocation2 + $0xb] sm:$0xff]
    %v774 = vld [vmem:[#allocation2 + $0x23] sm:$0xff]
    %v775 = vld [vmem:[#allocation2 + $0x2b] sm:$0xff]
    %v776 = vperm.slane %v725, 3
    %v777 = vmul.f32 %v772, %v776
    %v778 = vmul.f32 %v773, %v776
    %v779 = vmul.f32 %v774, %v776
    %v780 = vmul.f32 %v775, %v776
    %v781 = vadd.f32 %v768, %v777
    %v782 = vadd.f32 %v769, %v778
    %v783 = vadd.f32 %v770, %v779
    %v784 = vadd.f32 %v771, %v780
    %v785 = vld [vmem:[#allocation2 + $0x4] sm:$0xff]
    %v786 = vld [vmem:[#allocation2 + $0xc] sm:$0xff]
    %v787 = vld [vmem:[#allocation2 + $0x24] sm:$0xff]
    %v788 = vld [vmem:[#allocation2 + $0x2c] sm:$0xff]
    %v789 = vperm.slane %v725, 4
    %v790 = vmul.f32 %v785, %v789
    %v791 = vmul.f32 %v786, %v789
    %v792 = vmul.f32 %v787, %v789
    %v793 = vmul.f32 %v788, %v789
    %v794 = vadd.f32 %v781, %v790
    %v795 = vadd.f32 %v782, %v791
    %v796 = vadd.f32 %v783, %v792
    %v797 = vadd.f32 %v784, %v793
    %v798 = vld [vmem:[#allocation2 + $0x5] sm:$0xff]
    %v799 = vld [vmem:[#allocation2 + $0xd] sm:$0xff]
    %v800 = vld [vmem:[#allocation2 + $0x25] sm:$0xff]
    %v801 = vld [vmem:[#allocation2 + $0x2d] sm:$0xff]
    %v802 = vperm.slane %v725, 5
    %v803 = vmul.f32 %v798, %v802
    %v804 = vmul.f32 %v799, %v802
    %v805 = vmul.f32 %v800, %v802
    %v806 = vmul.f32 %v801, %v802
    %v807 = vadd.f32 %v794, %v803
    %v808 = vadd.f32 %v795, %v804
    %v809 = vadd.f32 %v796, %v805
    %v810 = vadd.f32 %v797, %v806
    %v811 = vld [vmem:[#allocation2 + $0x6] sm:$0xff]
    %v812 = vld [vmem:[#allocation2 + $0xe] sm:$0xff]
    %v813 = vld [vmem:[#allocation2 + $0x26] sm:$0xff]
    %v814 = vld [vmem:[#allocation2 + $0x2e] sm:$0xff]
    %v815 = vperm.slane %v725, 6
    %v816 = vmul.f32 %v811, %v815
    %v817 = vmul.f32 %v812, %v815
    %v818 = vmul.f32 %v813, %v815
    %v819 = vmul.f32 %v814, %v815
    %v820 = vadd.f32 %v807, %v816
    %v821 = vadd.f32 %v808, %v817
    %v822 = vadd.f32 %v809, %v818
    %v823 = vadd.f32 %v810, %v819
    %v824 = vld [vmem:[#allocation2 + $0x7] sm:$0xff]
    %v825 = vld [vmem:[#allocation2 + $0xf] sm:$0xff]
    %v826 = vld [vmem:[#allocation2 + $0x27] sm:$0xff]
    %v827 = vld [vmem:[#allocation2 + $0x2f] sm:$0xff]
    %v828 = vperm.slane %v725, 7
    %v829 = vmul.f32 %v824, %v828
    %v830 = vmul.f32 %v825, %v828
    %v831 = vmul.f32 %v826, %v828
    %v832 = vmul.f32 %v827, %v828
    %v833 = vadd.f32 %v820, %v829
    %v834 = vadd.f32 %v821, %v830
    %v835 = vadd.f32 %v822, %v831
    %v836 = vadd.f32 %v823, %v832
    %v837 = vld [vmem:[#allocation2 + $0x11] sm:$0xff]
    %v838 = vld [vmem:[#allocation2 + $0x31] sm:$0xff]
    %v839 = vperm.slane %v726, 1
    %v840 = vmul.f32 %v747, %v839
    %v841 = vmul.f32 %v837, %v839
    %v842 = vmul.f32 %v749, %v839
    %v843 = vmul.f32 %v838, %v839
    %v844 = vadd.f32 %v833, %v840
    %v845 = vadd.f32 %v834, %v841
    %v846 = vadd.f32 %v835, %v842
    %v847 = vadd.f32 %v836, %v843
    %v848 = vld [vmem:[#allocation2 + $0x12] sm:$0xff]
    %v849 = vld [vmem:[#allocation2 + $0x32] sm:$0xff]
    %v850 = vperm.slane %v726, 2
    %v851 = vmul.f32 %v760, %v850
    %v852 = vmul.f32 %v848, %v850
    %v853 = vmul.f32 %v762, %v850
    %v854 = vmul.f32 %v849, %v850
    %v855 = vadd.f32 %v844, %v851
    %v856 = vadd.f32 %v845, %v852
    %v857 = vadd.f32 %v846, %v853
    %v858 = vadd.f32 %v847, %v854
    %v859 = vld [vmem:[#allocation2 + $0x13] sm:$0xff]
    %v860 = vld [vmem:[#allocation2 + $0x33] sm:$0xff]
    %v861 = vperm.slane %v726, 3
    %v862 = vmul.f32 %v773, %v861
    %v863 = vmul.f32 %v859, %v861
    %v864 = vmul.f32 %v775, %v861
    %v865 = vmul.f32 %v860, %v861
    %v866 = vadd.f32 %v855, %v862
    %v867 = vadd.f32 %v856, %v863
    %v868 = vadd.f32 %v857, %v864
    %v869 = vadd.f32 %v858, %v865
    %v870 = vld [vmem:[#allocation2 + $0x14] sm:$0xff]
    %v871 = vld [vmem:[#allocation2 + $0x34] sm:$0xff]
    %v872 = vperm.slane %v726, 4
    %v873 = vmul.f32 %v786, %v872
    %v874 = vmul.f32 %v870, %v872
    %v875 = vmul.f32 %v788, %v872
    %v876 = vmul.f32 %v871, %v872
    %v877 = vadd.f32 %v866, %v873
    %v878 = vadd.f32 %v867, %v874
    %v879 = vadd.f32 %v868, %v875
    %v880 = vadd.f32 %v869, %v876
    %v881 = vld [vmem:[#allocation2 + $0x15] sm:$0xff]
    %v882 = vld [vmem:[#allocation2 + $0x35] sm:$0xff]
    %v883 = vperm.slane %v726, 5
    %v884 = vmul.f32 %v799, %v883
    %v885 = vmul.f32 %v881, %v883
    %v886 = vmul.f32 %v801, %v883
    %v887 = vmul.f32 %v882, %v883
    %v888 = vadd.f32 %v877, %v884
    %v889 = vadd.f32 %v878, %v885
    %v890 = vadd.f32 %v879, %v886
    %v891 = vadd.f32 %v880, %v887
    %v892 = vld [vmem:[#allocation2 + $0x16] sm:$0xff]
    %v893 = vld [vmem:[#allocation2 + $0x36] sm:$0xff]
    %v894 = vperm.slane %v726, 6
    %v895 = vmul.f32 %v812, %v894
    %v896 = vmul.f32 %v892, %v894
    %v897 = vmul.f32 %v814, %v894
    %v898 = vmul.f32 %v893, %v894
    %v899 = vadd.f32 %v888, %v895
    %v900 = vadd.f32 %v889, %v896
    %v901 = vadd.f32 %v890, %v897
    %v902 = vadd.f32 %v891, %v898
    %v903 = vld [vmem:[#allocation2 + $0x17] sm:$0xff]
    %v904 = vld [vmem:[#allocation2 + $0x37] sm:$0xff]
    %v905 = vperm.slane %v726, 7
    %v906 = vmul.f32 %v825, %v905
    %v907 = vmul.f32 %v903, %v905
    %v908 = vmul.f32 %v827, %v905
    %v909 = vmul.f32 %v904, %v905
    %v910 = vadd.f32 %v899, %v906
    %v911 = vadd.f32 %v900, %v907
    %v912 = vadd.f32 %v901, %v908
    %v913 = vadd.f32 %v902, %v909
    %v914 = vld [vmem:[#allocation2 + $0x10] sm:$0xff]
    %v915 = vld [vmem:[#allocation2 + $0x18] sm:$0xff]
    %v916 = vld [vmem:[#allocation2 + $0x30] sm:$0xff]
    %v917 = vld [vmem:[#allocation2 + $0x38] sm:$0xff]
    %v918 = vperm.slane %v727, 0
    %v919 = vmul.f32 %v914, %v918
    %v920 = vmul.f32 %v915, %v918
    %v921 = vmul.f32 %v916, %v918
    %v922 = vmul.f32 %v917, %v918
    %v923 = vadd.f32 %v910, %v919
    %v924 = vadd.f32 %v911, %v920
    %v925 = vadd.f32 %v912, %v921
    %v926 = vadd.f32 %v913, %v922
    %s927 = scalar_lea.vmem [#allocation11], 1
    %v928 = vld [vmem:[%s927] sm:$0x1]
    %v930 = vperm.slane %v928, 0
    %v932 = vadd.f32 %v923, %v930
    %v933 = vadd.f32 %v924, %v930
    %v934 = vadd.f32 %v925, %v930
    %v935 = vadd.f32 %v926, %v930
    %v936 = vmul.f32 %v932, %v932
    %v937 = vmul.f32 %v933, %v933
    %v938 = vmul.f32 %v934, %v934
    %v939 = vmul.f32 %v935, %v935
    %v940 = vmul.f32 %v932, %v936
    %v941 = vmul.f32 %v933, %v937
    %v942 = vmul.f32 %v934, %v938
    %v943 = vmul.f32 %v935, %v939
    %v944 = vmul.f32 %v940, 0.044715
    %v945 = vmul.f32 %v941, 0.044715
    %v946 = vmul.f32 %v942, 0.044715
    %v947 = vmul.f32 %v943, 0.044715
    %v948 = vadd.f32 %v932, %v944
    %v949 = vadd.f32 %v933, %v945
    %v950 = vadd.f32 %v934, %v946
    %v951 = vadd.f32 %v935, %v947
    %v952 = vmul.f32 %v948, 0.7978846
    %v953 = vmul.f32 %v949, 0.7978846
    %v954 = vmul.f32 %v950, 0.7978846
    %v955 = vmul.f32 %v951, 0.7978846
    %v956 = vtanh.pop %v952
    %v957 = vtanh.pop %v953
    %v958 = vtanh.pop %v954
    %v959 = vtanh.pop %v955
    %v960 = vadd.f32 %v956, 1.0
    %v961 = vadd.f32 %v957, 1.0
    %v962 = vadd.f32 %v958, 1.0
    %v963 = vadd.f32 %v959, 1.0
    %v964 = vmul.f32 %v960, 0.5
    %v965 = vmul.f32 %v961, 0.5
    %v966 = vmul.f32 %v962, 0.5
    %v967 = vmul.f32 %v963, 0.5
    %v968 = vmul.f32 %v932, %v964
    %v969 = vmul.f32 %v933, %v965
    %v970 = vmul.f32 %v934, %v966
    %v971 = vmul.f32 %v935, %v967
    %v972 = vpack.c.bf16 %v969, %v968
    %v973 = vpack.c.bf16 %v971, %v970
    %s974 = scalar_lea.vmem [#allocation12], 16
    %v975 = vld [vmem:[%s974] sm:$0xf]
    %v976 = vld [vmem:[%s974 + $0x4] sm:$0xf]
    %v977 = vld [vmem:[%s974 + $0x8] sm:$0xf]
    %v978 = vld [vmem:[%s974 + $0xc] sm:$0xf]
    %v983 = vunpack.c.l.b16 %v975
    %v984 = vunpack.c.l.b16 %v976
    %v985 = vunpack.c.l.b16 %v977
    %v986 = vunpack.c.l.b16 %v978
    %v987 = vpack.c.b16 %v984, %v983
    %v988 = vpack.c.b16 %v986, %v985
    %v992 = vsel %vm189, %v972, 0
    %v995 = vsel %vm189, %v973, 0
    %997 = vmatpush.bf16.msra.mxu0 0
    %998 = vmatpush.bf16.msra.mxu0 0
    %999 = vmatpush.bf16.msra.mxu0 0
    %1000 = vmatpush.bf16.msra.mxu0 0
    %1001 = vmatpush.bf16.msra.mxu0 0
    %1002 = vmatpush.bf16.msra.mxu0 0
    %1003 = vmatpush.bf16.msra.mxu0 %v988
    %1004 = vmatpush.bf16.msra.mxu0 %v987
    %1005 = vmatmul.bf16.gmra.mxu0 %v992
    %v1006 = vpop.f32.mrf.mxu0
    %v1007 = vadd.f32 0.0, %v1006
    %v1008 = vpop.f32.mrf.mxu0
    %v1009 = vadd.f32 0.0, %v1008
    %1010 = vmatmul.bf16.gmra.mxu0 %v995
    %v1011 = vpop.f32.mrf.mxu0
    %v1012 = vadd.f32 0.0, %v1011
    %v1013 = vpop.f32.mrf.mxu0
    %v1014 = vadd.f32 0.0, %v1013
    %1015 = vdwg.mxu0
    %s1016 = scalar_lea.vmem [#allocation14], 1
    %v1017 = vld [vmem:[%s1016] sm:$0x1]
    %v1019 = vperm.slane %v1017, 0
    %v1021 = vadd.f32 %v1007, %v1019
    %v1022 = vadd.f32 %v1009, %v1019
    %v1023 = vadd.f32 %v1012, %v1019
    %v1024 = vadd.f32 %v1014, %v1019
    %v1025 = vadd.f32 %v610, %v1021
    %v1026 = vadd.f32 %v611, %v1022
    %v1027 = vadd.f32 %v612, %v1023
    %v1028 = vadd.f32 %v613, %v1024
    %s1029 = scalar_lea.vmem [#allocation6], 2
    %v1030 = vld [vmem:[%s1029] sm:$0x1]
    %s1031 = scalar_lea.vmem [#allocation8], 2
    %v1032 = vld [vmem:[%s1031] sm:$0x1]
    %v1033 = vsel %vm189, %v1025, 0.0
    %1034 = vadd.xlane.f32.xlu0 %v1033
    %v1035 = vpop.xlane.xlu0 %1034
    %v1036 = vsel %vm189, %v1026, 0.0
    %1037 = vadd.xlane.f32.xlu0 %v1036
    %v1038 = vpop.xlane.xlu0 %1037
    %v1039 = vsel %vm189, %v1027, 0.0
    %1040 = vadd.xlane.f32.xlu0 %v1039
    %v1041 = vpop.xlane.xlu0 %1040
    %v1042 = vsel %vm189, %v1028, 0.0
    %1043 = vadd.xlane.f32.xlu0 %v1042
    %v1044 = vpop.xlane.xlu0 %1043
    %v1045 = vmul.f32 %v1035, %v218
    %v1046 = vmul.f32 %v1038, %v218
    %v1047 = vmul.f32 %v1041, %v218
    %v1048 = vmul.f32 %v1044, %v218
    %v1049 = vsub.f32 %v1025, %v1045
    %v1050 = vsub.f32 %v1026, %v1046
    %v1051 = vsub.f32 %v1027, %v1047
    %v1052 = vsub.f32 %v1028, %v1048
    %v1053 = vmul.f32 %v1049, %v1049
    %v1054 = vmul.f32 %v1050, %v1050
    %v1055 = vmul.f32 %v1051, %v1051
    %v1056 = vmul.f32 %v1052, %v1052
    %v1057 = vsel %vm189, %v1053, 0.0
    %1058 = vadd.xlane.f32.xlu0 %v1057
    %v1059 = vpop.xlane.xlu0 %1058
    %v1060 = vsel %vm189, %v1054, 0.0
    %1061 = vadd.xlane.f32.xlu0 %v1060
    %v1062 = vpop.xlane.xlu0 %1061
    %v1063 = vsel %vm189, %v1055, 0.0
    %1064 = vadd.xlane.f32.xlu0 %v1063
    %v1065 = vpop.xlane.xlu0 %1064
    %v1066 = vsel %vm189, %v1056, 0.0
    %1067 = vadd.xlane.f32.xlu0 %v1066
    %v1068 = vpop.xlane.xlu0 %1067
    %v1069 = vmul.f32 %v1059, %v218
    %v1070 = vmul.f32 %v1062, %v218
    %v1071 = vmul.f32 %v1065, %v218
    %v1072 = vmul.f32 %v1068, %v218
    %v1073 = vadd.f32 %v1069, 1e-05
    %v1074 = vadd.f32 %v1070, 1e-05
    %v1075 = vadd.f32 %v1071, 1e-05
    %v1076 = vadd.f32 %v1072, 1e-05
    %v1077 = vrsqrt.pop %v1073
    %v1078 = vmul.f32 %v1077, %v1073
    %v1079 = vmul.f32 %v1078, %v1077
    %v1080 = vmul.f32 0.5, %v1079
    %v1081 = vsub.f32 1.5, %v1080
    %v1082 = vmul.f32 %v1077, %v1081
    %vm1083 = vweird.f32 %v1073
    %vm1084 = vweird.f32 %v1077
    %vm1085 = vmor %vm1083, %vm1084
    %v1086 = vsel %vm1085, %v1077, %v1082
    %v1087 = vrsqrt.pop %v1074
    %v1088 = vmul.f32 %v1087, %v1074
    %v1089 = vmul.f32 %v1088, %v1087
    %v1090 = vmul.f32 0.5, %v1089
    %v1091 = vsub.f32 1.5, %v1090
    %v1092 = vmul.f32 %v1087, %v1091
    %vm1093 = vweird.f32 %v1074
    %vm1094 = vweird.f32 %v1087
    %vm1095 = vmor %vm1093, %vm1094
    %v1096 = vsel %vm1095, %v1087, %v1092
    %v1097 = vrsqrt.pop %v1075
    %v1098 = vmul.f32 %v1097, %v1075
    %v1099 = vmul.f32 %v1098, %v1097
    %v1100 = vmul.f32 0.5, %v1099
    %v1101 = vsub.f32 1.5, %v1100
    %v1102 = vmul.f32 %v1097, %v1101
    %vm1103 = vweird.f32 %v1075
    %vm1104 = vweird.f32 %v1097
    %vm1105 = vmor %vm1103, %vm1104
    %v1106 = vsel %vm1105, %v1097, %v1102
    %v1107 = vrsqrt.pop %v1076
    %v1108 = vmul.f32 %v1107, %v1076
    %v1109 = vmul.f32 %v1108, %v1107
    %v1110 = vmul.f32 0.5, %v1109
    %v1111 = vsub.f32 1.5, %v1110
    %v1112 = vmul.f32 %v1107, %v1111
    %vm1113 = vweird.f32 %v1076
    %vm1114 = vweird.f32 %v1107
    %vm1115 = vmor %vm1113, %vm1114
    %v1116 = vsel %vm1115, %v1107, %v1112
    %v1117 = vmul.f32 %v1049, %v1086
    %v1118 = vmul.f32 %v1050, %v1096
    %v1119 = vmul.f32 %v1051, %v1106
    %v1120 = vmul.f32 %v1052, %v1116
    %v1122 = vperm.slane %v1030, 0
    %v1124 = vmul.f32 %v1117, %v1122
    %v1125 = vmul.f32 %v1118, %v1122
    %v1126 = vmul.f32 %v1119, %v1122
    %v1127 = vmul.f32 %v1120, %v1122
    %v1129 = vperm.slane %v1032, 0
    %v1131 = vadd.f32 %v1124, %v1129
    %v1132 = vadd.f32 %v1125, %v1129
    %v1133 = vadd.f32 %v1126, %v1129
    %v1134 = vadd.f32 %v1127, %v1129
    %1135 = vst.msk [vmem:[#allocation2 + $0x8] sm:$0xff] %vm189, %v1131
    %1136 = vst.msk [vmem:[#allocation2 + $0x10] sm:$0xff] %vm189, %v1132
    %1137 = vst.msk [vmem:[#allocation2 + $0x28] sm:$0xff] %vm189, %v1133
    %1138 = vst.msk [vmem:[#allocation2 + $0x30] sm:$0xff] %vm189, %v1134
    %s1139 = scalar_lea.vmem [#allocation9], 48
    %v1140 = vld [vmem:[%s1139] sm:$0xff]
    %v1141 = vld [vmem:[%s1139 + $0x8] sm:$0xff]
    %v1142 = vld [vmem:[%s1139 + $0x10] sm:$0x1]
    %v1143 = vperm.slane %v1141, 0
    %v1144 = vmul.f32 %v1131, %v1143
    %v1145 = vmul.f32 %v1132, %v1143
    %v1146 = vmul.f32 %v1133, %v1143
    %v1147 = vmul.f32 %v1134, %v1143
    %v1148 = vld [vmem:[#allocation2] sm:$0xff]
    %v1149 = vld [vmem:[#allocation2 + $0x8] sm:$0xff]
    %v1150 = vld [vmem:[#allocation2 + $0x20] sm:$0xff]
    %v1151 = vld [vmem:[#allocation2 + $0x28] sm:$0xff]
    %v1152 = vperm.slane %v1140, 0
    %v1153 = vmul.f32 %v1148, %v1152
    %v1154 = vmul.f32 %v1149, %v1152
    %v1155 = vmul.f32 %v1150, %v1152
    %v1156 = vmul.f32 %v1151, %v1152
    %v1157 = vadd.f32 %v1144, %v1153
    %v1158 = vadd.f32 %v1145, %v1154
    %v1159 = vadd.f32 %v1146, %v1155
    %v1160 = vadd.f32 %v1147, %v1156
    %v1161 = vld [vmem:[#allocation2 + $0x1] sm:$0xff]
    %v1162 = vld [vmem:[#allocation2 + $0x9] sm:$0xff]
    %v1163 = vld [vmem:[#allocation2 + $0x21] sm:$0xff]
    %v1164 = vld [vmem:[#allocation2 + $0x29] sm:$0xff]
    %v1165 = vperm.slane %v1140, 1
    %v1166 = vmul.f32 %v1161, %v1165
    %v1167 = vmul.f32 %v1162, %v1165
    %v1168 = vmul.f32 %v1163, %v1165
    %v1169 = vmul.f32 %v1164, %v1165
    %v1170 = vadd.f32 %v1157, %v1166
    %v1171 = vadd.f32 %v1158, %v1167
    %v1172 = vadd.f32 %v1159, %v1168
    %v1173 = vadd.f32 %v1160, %v1169
    %v1174 = vld [vmem:[#allocation2 + $0x2] sm:$0xff]
    %v1175 = vld [vmem:[#allocation2 + $0xa] sm:$0xff]
    %v1176 = vld [vmem:[#allocation2 + $0x22] sm:$0xff]
    %v1177 = vld [vmem:[#allocation2 + $0x2a] sm:$0xff]
    %v1178 = vperm.slane %v1140, 2
    %v1179 = vmul.f32 %v1174, %v1178
    %v1180 = vmul.f32 %v1175, %v1178
    %v1181 = vmul.f32 %v1176, %v1178
    %v1182 = vmul.f32 %v1177, %v1178
    %v1183 = vadd.f32 %v1170, %v1179
    %v1184 = vadd.f32 %v1171, %v1180
    %v1185 = vadd.f32 %v1172, %v1181
    %v1186 = vadd.f32 %v1173, %v1182
    %v1187 = vld [vmem:[#allocation2 + $0x3] sm:$0xff]
    %v1188 = vld [vmem:[#allocation2 + $0xb] sm:$0xff]
    %v1189 = vld [vmem:[#allocation2 + $0x23] sm:$0xff]
    %v1190 = vld [vmem:[#allocation2 + $0x2b] sm:$0xff]
    %v1191 = vperm.slane %v1140, 3
    %v1192 = vmul.f32 %v1187, %v1191
    %v1193 = vmul.f32 %v1188, %v1191
    %v1194 = vmul.f32 %v1189, %v1191
    %v1195 = vmul.f32 %v1190, %v1191
    %v1196 = vadd.f32 %v1183, %v1192
    %v1197 = vadd.f32 %v1184, %v1193
    %v1198 = vadd.f32 %v1185, %v1194
    %v1199 = vadd.f32 %v1186, %v1195
    %v1200 = vld [vmem:[#allocation2 + $0x4] sm:$0xff]
    %v1201 = vld [vmem:[#allocation2 + $0xc] sm:$0xff]
    %v1202 = vld [vmem:[#allocation2 + $0x24] sm:$0xff]
    %v1203 = vld [vmem:[#allocation2 + $0x2c] sm:$0xff]
    %v1204 = vperm.slane %v1140, 4
    %v1205 = vmul.f32 %v1200, %v1204
    %v1206 = vmul.f32 %v1201, %v1204
    %v1207 = vmul.f32 %v1202, %v1204
    %v1208 = vmul.f32 %v1203, %v1204
    %v1209 = vadd.f32 %v1196, %v1205
    %v1210 = vadd.f32 %v1197, %v1206
    %v1211 = vadd.f32 %v1198, %v1207
    %v1212 = vadd.f32 %v1199, %v1208
    %v1213 = vld [vmem:[#allocation2 + $0x5] sm:$0xff]
    %v1214 = vld [vmem:[#allocation2 + $0xd] sm:$0xff]
    %v1215 = vld [vmem:[#allocation2 + $0x25] sm:$0xff]
    %v1216 = vld [vmem:[#allocation2 + $0x2d] sm:$0xff]
    %v1217 = vperm.slane %v1140, 5
    %v1218 = vmul.f32 %v1213, %v1217
    %v1219 = vmul.f32 %v1214, %v1217
    %v1220 = vmul.f32 %v1215, %v1217
    %v1221 = vmul.f32 %v1216, %v1217
    %v1222 = vadd.f32 %v1209, %v1218
    %v1223 = vadd.f32 %v1210, %v1219
    %v1224 = vadd.f32 %v1211, %v1220
    %v1225 = vadd.f32 %v1212, %v1221
    %v1226 = vld [vmem:[#allocation2 + $0x6] sm:$0xff]
    %v1227 = vld [vmem:[#allocation2 + $0xe] sm:$0xff]
    %v1228 = vld [vmem:[#allocation2 + $0x26] sm:$0xff]
    %v1229 = vld [vmem:[#allocation2 + $0x2e] sm:$0xff]
    %v1230 = vperm.slane %v1140, 6
    %v1231 = vmul.f32 %v1226, %v1230
    %v1232 = vmul.f32 %v1227, %v1230
    %v1233 = vmul.f32 %v1228, %v1230
    %v1234 = vmul.f32 %v1229, %v1230
    %v1235 = vadd.f32 %v1222, %v1231
    %v1236 = vadd.f32 %v1223, %v1232
    %v1237 = vadd.f32 %v1224, %v1233
    %v1238 = vadd.f32 %v1225, %v1234
    %v1239 = vld [vmem:[#allocation2 + $0x7] sm:$0xff]
    %v1240 = vld [vmem:[#allocation2 + $0xf] sm:$0xff]
    %v1241 = vld [vmem:[#allocation2 + $0x27] sm:$0xff]
    %v1242 = vld [vmem:[#allocation2 + $0x2f] sm:$0xff]
    %v1243 = vperm.slane %v1140, 7
    %v1244 = vmul.f32 %v1239, %v1243
    %v1245 = vmul.f32 %v1240, %v1243
    %v1246 = vmul.f32 %v1241, %v1243
    %v1247 = vmul.f32 %v1242, %v1243
    %v1248 = vadd.f32 %v1235, %v1244
    %v1249 = vadd.f32 %v1236, %v1245
    %v1250 = vadd.f32 %v1237, %v1246
    %v1251 = vadd.f32 %v1238, %v1247
    %v1252 = vld [vmem:[#allocation2 + $0x11] sm:$0xff]
    %v1253 = vld [vmem:[#allocation2 + $0x31] sm:$0xff]
    %v1254 = vperm.slane %v1141, 1
    %v1255 = vmul.f32 %v1162, %v1254
    %v1256 = vmul.f32 %v1252, %v1254
    %v1257 = vmul.f32 %v1164, %v1254
    %v1258 = vmul.f32 %v1253, %v1254
    %v1259 = vadd.f32 %v1248, %v1255
    %v1260 = vadd.f32 %v1249, %v1256
    %v1261 = vadd.f32 %v1250, %v1257
    %v1262 = vadd.f32 %v1251, %v1258
    %v1263 = vld [vmem:[#allocation2 + $0x12] sm:$0xff]
    %v1264 = vld [vmem:[#allocation2 + $0x32] sm:$0xff]
    %v1265 = vperm.slane %v1141, 2
    %v1266 = vmul.f32 %v1175, %v1265
    %v1267 = vmul.f32 %v1263, %v1265
    %v1268 = vmul.f32 %v1177, %v1265
    %v1269 = vmul.f32 %v1264, %v1265
    %v1270 = vadd.f32 %v1259, %v1266
    %v1271 = vadd.f32 %v1260, %v1267
    %v1272 = vadd.f32 %v1261, %v1268
    %v1273 = vadd.f32 %v1262, %v1269
    %v1274 = vld [vmem:[#allocation2 + $0x13] sm:$0xff]
    %v1275 = vld [vmem:[#allocation2 + $0x33] sm:$0xff]
    %v1276 = vperm.slane %v1141, 3
    %v1277 = vmul.f32 %v1188, %v1276
    %v1278 = vmul.f32 %v1274, %v1276
    %v1279 = vmul.f32 %v1190, %v1276
    %v1280 = vmul.f32 %v1275, %v1276
    %v1281 = vadd.f32 %v1270, %v1277
    %v1282 = vadd.f32 %v1271, %v1278
    %v1283 = vadd.f32 %v1272, %v1279
    %v1284 = vadd.f32 %v1273, %v1280
    %v1285 = vld [vmem:[#allocation2 + $0x14] sm:$0xff]
    %v1286 = vld [vmem:[#allocation2 + $0x34] sm:$0xff]
    %v1287 = vperm.slane %v1141, 4
    %v1288 = vmul.f32 %v1201, %v1287
    %v1289 = vmul.f32 %v1285, %v1287
    %v1290 = vmul.f32 %v1203, %v1287
    %v1291 = vmul.f32 %v1286, %v1287
    %v1292 = vadd.f32 %v1281, %v1288
    %v1293 = vadd.f32 %v1282, %v1289
    %v1294 = vadd.f32 %v1283, %v1290
    %v1295 = vadd.f32 %v1284, %v1291
    %v1296 = vld [vmem:[#allocation2 + $0x15] sm:$0xff]
    %v1297 = vld [vmem:[#allocation2 + $0x35] sm:$0xff]
    %v1298 = vperm.slane %v1141, 5
    %v1299 = vmul.f32 %v1214, %v1298
    %v1300 = vmul.f32 %v1296, %v1298
    %v1301 = vmul.f32 %v1216, %v1298
    %v1302 = vmul.f32 %v1297, %v1298
    %v1303 = vadd.f32 %v1292, %v1299
    %v1304 = vadd.f32 %v1293, %v1300
    %v1305 = vadd.f32 %v1294, %v1301
    %v1306 = vadd.f32 %v1295, %v1302
    %v1307 = vld [vmem:[#allocation2 + $0x16] sm:$0xff]
    %v1308 = vld [vmem:[#allocation2 + $0x36] sm:$0xff]
    %v1309 = vperm.slane %v1141, 6
    %v1310 = vmul.f32 %v1227, %v1309
    %v1311 = vmul.f32 %v1307, %v1309
    %v1312 = vmul.f32 %v1229, %v1309
    %v1313 = vmul.f32 %v1308, %v1309
    %v1314 = vadd.f32 %v1303, %v1310
    %v1315 = vadd.f32 %v1304, %v1311
    %v1316 = vadd.f32 %v1305, %v1312
    %v1317 = vadd.f32 %v1306, %v1313
    %v1318 = vld [vmem:[#allocation2 + $0x17] sm:$0xff]
    %v1319 = vld [vmem:[#allocation2 + $0x37] sm:$0xff]
    %v1320 = vperm.slane %v1141, 7
    %v1321 = vmul.f32 %v1240, %v1320
    %v1322 = vmul.f32 %v1318, %v1320
    %v1323 = vmul.f32 %v1242, %v1320
    %v1324 = vmul.f32 %v1319, %v1320
    %v1325 = vadd.f32 %v1314, %v1321
    %v1326 = vadd.f32 %v1315, %v1322
    %v1327 = vadd.f32 %v1316, %v1323
    %v1328 = vadd.f32 %v1317, %v1324
    %v1329 = vld [vmem:[#allocation2 + $0x10] sm:$0xff]
    %v1330 = vld [vmem:[#allocation2 + $0x18] sm:$0xff]
    %v1331 = vld [vmem:[#allocation2 + $0x30] sm:$0xff]
    %v1332 = vld [vmem:[#allocation2 + $0x38] sm:$0xff]
    %v1333 = vperm.slane %v1142, 0
    %v1334 = vmul.f32 %v1329, %v1333
    %v1335 = vmul.f32 %v1330, %v1333
    %v1336 = vmul.f32 %v1331, %v1333
    %v1337 = vmul.f32 %v1332, %v1333
    %v1338 = vadd.f32 %v1325, %v1334
    %v1339 = vadd.f32 %v1326, %v1335
    %v1340 = vadd.f32 %v1327, %v1336
    %v1341 = vadd.f32 %v1328, %v1337
    %s1342 = scalar_lea.vmem [#allocation11], 2
    %v1343 = vld [vmem:[%s1342] sm:$0x1]
    %v1345 = vperm.slane %v1343, 0
    %v1347 = vadd.f32 %v1338, %v1345
    %v1348 = vadd.f32 %v1339, %v1345
    %v1349 = vadd.f32 %v1340, %v1345
    %v1350 = vadd.f32 %v1341, %v1345
    %v1351 = vmul.f32 %v1347, %v1347
    %v1352 = vmul.f32 %v1348, %v1348
    %v1353 = vmul.f32 %v1349, %v1349
    %v1354 = vmul.f32 %v1350, %v1350
    %v1355 = vmul.f32 %v1347, %v1351
    %v1356 = vmul.f32 %v1348, %v1352
    %v1357 = vmul.f32 %v1349, %v1353
    %v1358 = vmul.f32 %v1350, %v1354
    %v1359 = vmul.f32 %v1355, 0.044715
    %v1360 = vmul.f32 %v1356, 0.044715
    %v1361 = vmul.f32 %v1357, 0.044715
    %v1362 = vmul.f32 %v1358, 0.044715
    %v1363 = vadd.f32 %v1347, %v1359
    %v1364 = vadd.f32 %v1348, %v1360
    %v1365 = vadd.f32 %v1349, %v1361
    %v1366 = vadd.f32 %v1350, %v1362
    %v1367 = vmul.f32 %v1363, 0.7978846
    %v1368 = vmul.f32 %v1364, 0.7978846
    %v1369 = vmul.f32 %v1365, 0.7978846
    %v1370 = vmul.f32 %v1366, 0.7978846
    %v1371 = vtanh.pop %v1367
    %v1372 = vtanh.pop %v1368
    %v1373 = vtanh.pop %v1369
    %v1374 = vtanh.pop %v1370
    %v1375 = vadd.f32 %v1371, 1.0
    %v1376 = vadd.f32 %v1372, 1.0
    %v1377 = vadd.f32 %v1373, 1.0
    %v1378 = vadd.f32 %v1374, 1.0
    %v1379 = vmul.f32 %v1375, 0.5
    %v1380 = vmul.f32 %v1376, 0.5
    %v1381 = vmul.f32 %v1377, 0.5
    %v1382 = vmul.f32 %v1378, 0.5
    %v1383 = vmul.f32 %v1347, %v1379
    %v1384 = vmul.f32 %v1348, %v1380
    %v1385 = vmul.f32 %v1349, %v1381
    %v1386 = vmul.f32 %v1350, %v1382
    %v1387 = vpack.c.bf16 %v1384, %v1383
    %v1388 = vpack.c.bf16 %v1386, %v1385
    %s1389 = scalar_lea.vmem [#allocation12], 32
    %v1390 = vld [vmem:[%s1389] sm:$0xf]
    %v1391 = vld [vmem:[%s1389 + $0x4] sm:$0xf]
    %v1392 = vld [vmem:[%s1389 + $0x8] sm:$0xf]
    %v1393 = vld [vmem:[%s1389 + $0xc] sm:$0xf]
    %v1398 = vunpack.c.l.b16 %v1390
    %v1399 = vunpack.c.l.b16 %v1391
    %v1400 = vunpack.c.l.b16 %v1392
    %v1401 = vunpack.c.l.b16 %v1393
    %v1402 = vpack.c.b16 %v1399, %v1398
    %v1403 = vpack.c.b16 %v1401, %v1400
    %v1407 = vsel %vm189, %v1387, 0
    %v1410 = vsel %vm189, %v1388, 0
    %1412 = vmatpush.bf16.msra.mxu0 0
    %1413 = vmatpush.bf16.msra.mxu0 0
    %1414 = vmatpush.bf16.msra.mxu0 0
    %1415 = vmatpush.bf16.msra.mxu0 0
    %1416 = vmatpush.bf16.msra.mxu0 0
    %1417 = vmatpush.bf16.msra.mxu0 0
    %1418 = vmatpush.bf16.msra.mxu0 %v1403
    %1419 = vmatpush.bf16.msra.mxu0 %v1402
    %1420 = vmatmul.bf16.gmra.mxu0 %v1407
    %v1421 = vpop.f32.mrf.mxu0
    %v1422 = vadd.f32 0.0, %v1421
    %v1423 = vpop.f32.mrf.mxu0
    %v1424 = vadd.f32 0.0, %v1423
    %1425 = vmatmul.bf16.gmra.mxu0 %v1410
    %v1426 = vpop.f32.mrf.mxu0
    %v1427 = vadd.f32 0.0, %v1426
    %v1428 = vpop.f32.mrf.mxu0
    %v1429 = vadd.f32 0.0, %v1428
    %1430 = vdwg.mxu0
    %s1431 = scalar_lea.vmem [#allocation14], 2
    %v1432 = vld [vmem:[%s1431] sm:$0x1]
    %v1434 = vperm.slane %v1432, 0
    %v1436 = vadd.f32 %v1422, %v1434
    %v1437 = vadd.f32 %v1424, %v1434
    %v1438 = vadd.f32 %v1427, %v1434
    %v1439 = vadd.f32 %v1429, %v1434
    %v1440 = vadd.f32 %v1025, %v1436
    %v1441 = vadd.f32 %v1026, %v1437
    %v1442 = vadd.f32 %v1027, %v1438
    %v1443 = vadd.f32 %v1028, %v1439
    %v1444 = vld [vmem:[%s7] sm:$0x1]
    %v1445 = vld [vmem:[%s8] sm:$0x1]
    %v1446 = vsel %vm189, %v1440, 0.0
    %1447 = vadd.xlane.f32.xlu0 %v1446
    %v1448 = vpop.xlane.xlu0 %1447
    %v1449 = vsel %vm189, %v1441, 0.0
    %1450 = vadd.xlane.f32.xlu0 %v1449
    %v1451 = vpop.xlane.xlu0 %1450
    %v1452 = vsel %vm189, %v1442, 0.0
    %1453 = vadd.xlane.f32.xlu0 %v1452
    %v1454 = vpop.xlane.xlu0 %1453
    %v1455 = vsel %vm189, %v1443, 0.0
    %1456 = vadd.xlane.f32.xlu0 %v1455
    %v1457 = vpop.xlane.xlu0 %1456
    %v1458 = vmul.f32 %v1448, %v218
    %v1459 = vmul.f32 %v1451, %v218
    %v1460 = vmul.f32 %v1454, %v218
    %v1461 = vmul.f32 %v1457, %v218
    %v1462 = vsub.f32 %v1440, %v1458
    %v1463 = vsub.f32 %v1441, %v1459
    %v1464 = vsub.f32 %v1442, %v1460
    %v1465 = vsub.f32 %v1443, %v1461
    %v1466 = vmul.f32 %v1462, %v1462
    %v1467 = vmul.f32 %v1463, %v1463
    %v1468 = vmul.f32 %v1464, %v1464
    %v1469 = vmul.f32 %v1465, %v1465
    %v1470 = vsel %vm189, %v1466, 0.0
    %1471 = vadd.xlane.f32.xlu0 %v1470
    %v1472 = vpop.xlane.xlu0 %1471
    %v1473 = vsel %vm189, %v1467, 0.0
    %1474 = vadd.xlane.f32.xlu0 %v1473
    %v1475 = vpop.xlane.xlu0 %1474
    %v1476 = vsel %vm189, %v1468, 0.0
    %1477 = vadd.xlane.f32.xlu0 %v1476
    %v1478 = vpop.xlane.xlu0 %1477
    %v1479 = vsel %vm189, %v1469, 0.0
    %1480 = vadd.xlane.f32.xlu0 %v1479
    %v1481 = vpop.xlane.xlu0 %1480
    %v1482 = vmul.f32 %v1472, %v218
    %v1483 = vmul.f32 %v1475, %v218
    %v1484 = vmul.f32 %v1478, %v218
    %v1485 = vmul.f32 %v1481, %v218
    %v1486 = vadd.f32 %v1482, 1e-05
    %v1487 = vadd.f32 %v1483, 1e-05
    %v1488 = vadd.f32 %v1484, 1e-05
    %v1489 = vadd.f32 %v1485, 1e-05
    %v1490 = vrsqrt.pop %v1486
    %v1491 = vmul.f32 %v1490, %v1486
    %v1492 = vmul.f32 %v1491, %v1490
    %v1493 = vmul.f32 0.5, %v1492
    %v1494 = vsub.f32 1.5, %v1493
    %v1495 = vmul.f32 %v1490, %v1494
    %vm1496 = vweird.f32 %v1486
    %vm1497 = vweird.f32 %v1490
    %vm1498 = vmor %vm1496, %vm1497
    %v1499 = vsel %vm1498, %v1490, %v1495
    %v1500 = vrsqrt.pop %v1487
    %v1501 = vmul.f32 %v1500, %v1487
    %v1502 = vmul.f32 %v1501, %v1500
    %v1503 = vmul.f32 0.5, %v1502
    %v1504 = vsub.f32 1.5, %v1503
    %v1505 = vmul.f32 %v1500, %v1504
    %vm1506 = vweird.f32 %v1487
    %vm1507 = vweird.f32 %v1500
    %vm1508 = vmor %vm1506, %vm1507
    %v1509 = vsel %vm1508, %v1500, %v1505
    %v1510 = vrsqrt.pop %v1488
    %v1511 = vmul.f32 %v1510, %v1488
    %v1512 = vmul.f32 %v1511, %v1510
    %v1513 = vmul.f32 0.5, %v1512
    %v1514 = vsub.f32 1.5, %v1513
    %v1515 = vmul.f32 %v1510, %v1514
    %vm1516 = vweird.f32 %v1488
    %vm1517 = vweird.f32 %v1510
    %vm1518 = vmor %vm1516, %vm1517
    %v1519 = vsel %vm1518, %v1510, %v1515
    %v1520 = vrsqrt.pop %v1489
    %v1521 = vmul.f32 %v1520, %v1489
    %v1522 = vmul.f32 %v1521, %v1520
    %v1523 = vmul.f32 0.5, %v1522
    %v1524 = vsub.f32 1.5, %v1523
    %v1525 = vmul.f32 %v1520, %v1524
    %vm1526 = vweird.f32 %v1489
    %vm1527 = vweird.f32 %v1520
    %vm1528 = vmor %vm1526, %vm1527
    %v1529 = vsel %vm1528, %v1520, %v1525
    %v1530 = vmul.f32 %v1462, %v1499
    %v1531 = vmul.f32 %v1463, %v1509
    %v1532 = vmul.f32 %v1464, %v1519
    %v1533 = vmul.f32 %v1465, %v1529
    %v1535 = vperm.slane %v1444, 0
    %v1537 = vmul.f32 %v1530, %v1535
    %v1538 = vmul.f32 %v1531, %v1535
    %v1539 = vmul.f32 %v1532, %v1535
    %v1540 = vmul.f32 %v1533, %v1535
    %v1542 = vperm.slane %v1445, 0
    %v1544 = vadd.f32 %v1537, %v1542
    %v1545 = vadd.f32 %v1538, %v1542
    %v1546 = vadd.f32 %v1539, %v1542
    %v1547 = vadd.f32 %v1540, %v1542
    %s1548 = scalar_lea.vmem [#allocation6], 3
    %v1549 = vld [vmem:[%s1548] sm:$0x1]
    %s1550 = scalar_lea.vmem [#allocation8], 3
    %v1551 = vld [vmem:[%s1550] sm:$0x1]
    %v1552 = vsel %vm189, %v1544, 0.0
    %1553 = vadd.xlane.f32.xlu0 %v1552
    %v1554 = vpop.xlane.xlu0 %1553
    %v1555 = vsel %vm189, %v1545, 0.0
    %1556 = vadd.xlane.f32.xlu0 %v1555
    %v1557 = vpop.xlane.xlu0 %1556
    %v1558 = vsel %vm189, %v1546, 0.0
    %1559 = vadd.xlane.f32.xlu0 %v1558
    %v1560 = vpop.xlane.xlu0 %1559
    %v1561 = vsel %vm189, %v1547, 0.0
    %1562 = vadd.xlane.f32.xlu0 %v1561
    %v1563 = vpop.xlane.xlu0 %1562
    %v1564 = vmul.f32 %v1554, %v218
    %v1565 = vmul.f32 %v1557, %v218
    %v1566 = vmul.f32 %v1560, %v218
    %v1567 = vmul.f32 %v1563, %v218
    %v1568 = vsub.f32 %v1544, %v1564
    %v1569 = vsub.f32 %v1545, %v1565
    %v1570 = vsub.f32 %v1546, %v1566
    %v1571 = vsub.f32 %v1547, %v1567
    %v1572 = vmul.f32 %v1568, %v1568
    %v1573 = vmul.f32 %v1569, %v1569
    %v1574 = vmul.f32 %v1570, %v1570
    %v1575 = vmul.f32 %v1571, %v1571
    %v1576 = vsel %vm189, %v1572, 0.0
    %1577 = vadd.xlane.f32.xlu0 %v1576
    %v1578 = vpop.xlane.xlu0 %1577
    %v1579 = vsel %vm189, %v1573, 0.0
    %1580 = vadd.xlane.f32.xlu0 %v1579
    %v1581 = vpop.xlane.xlu0 %1580
    %v1582 = vsel %vm189, %v1574, 0.0
    %1583 = vadd.xlane.f32.xlu0 %v1582
    %v1584 = vpop.xlane.xlu0 %1583
    %v1585 = vsel %vm189, %v1575, 0.0
    %1586 = vadd.xlane.f32.xlu0 %v1585
    %v1587 = vpop.xlane.xlu0 %1586
    %v1588 = vmul.f32 %v1578, %v218
    %v1589 = vmul.f32 %v1581, %v218
    %v1590 = vmul.f32 %v1584, %v218
    %v1591 = vmul.f32 %v1587, %v218
    %v1592 = vadd.f32 %v1588, 1e-05
    %v1593 = vadd.f32 %v1589, 1e-05
    %v1594 = vadd.f32 %v1590, 1e-05
    %v1595 = vadd.f32 %v1591, 1e-05
    %v1596 = vrsqrt.pop %v1592
    %v1597 = vmul.f32 %v1596, %v1592
    %v1598 = vmul.f32 %v1597, %v1596
    %v1599 = vmul.f32 0.5, %v1598
    %v1600 = vsub.f32 1.5, %v1599
    %v1601 = vmul.f32 %v1596, %v1600
    %vm1602 = vweird.f32 %v1592
    %vm1603 = vweird.f32 %v1596
    %vm1604 = vmor %vm1602, %vm1603
    %v1605 = vsel %vm1604, %v1596, %v1601
    %v1606 = vrsqrt.pop %v1593
    %v1607 = vmul.f32 %v1606, %v1593
    %v1608 = vmul.f32 %v1607, %v1606
    %v1609 = vmul.f32 0.5, %v1608
    %v1610 = vsub.f32 1.5, %v1609
    %v1611 = vmul.f32 %v1606, %v1610
    %vm1612 = vweird.f32 %v1593
    %vm1613 = vweird.f32 %v1606
    %vm1614 = vmor %vm1612, %vm1613
    %v1615 = vsel %vm1614, %v1606, %v1611
    %v1616 = vrsqrt.pop %v1594
    %v1617 = vmul.f32 %v1616, %v1594
    %v1618 = vmul.f32 %v1617, %v1616
    %v1619 = vmul.f32 0.5, %v1618
    %v1620 = vsub.f32 1.5, %v1619
    %v1621 = vmul.f32 %v1616, %v1620
    %vm1622 = vweird.f32 %v1594
    %vm1623 = vweird.f32 %v1616
    %vm1624 = vmor %vm1622, %vm1623
    %v1625 = vsel %vm1624, %v1616, %v1621
    %v1626 = vrsqrt.pop %v1595
    %v1627 = vmul.f32 %v1626, %v1595
    %v1628 = vmul.f32 %v1627, %v1626
    %v1629 = vmul.f32 0.5, %v1628
    %v1630 = vsub.f32 1.5, %v1629
    %v1631 = vmul.f32 %v1626, %v1630
    %vm1632 = vweird.f32 %v1595
    %vm1633 = vweird.f32 %v1626
    %vm1634 = vmor %vm1632, %vm1633
    %v1635 = vsel %vm1634, %v1626, %v1631
    %v1636 = vmul.f32 %v1568, %v1605
    %v1637 = vmul.f32 %v1569, %v1615
    %v1638 = vmul.f32 %v1570, %v1625
    %v1639 = vmul.f32 %v1571, %v1635
    %v1641 = vperm.slane %v1549, 0
    %v1643 = vmul.f32 %v1636, %v1641
    %v1644 = vmul.f32 %v1637, %v1641
    %v1645 = vmul.f32 %v1638, %v1641
    %v1646 = vmul.f32 %v1639, %v1641
    %v1648 = vperm.slane %v1551, 0
    %v1650 = vadd.f32 %v1643, %v1648
    %v1651 = vadd.f32 %v1644, %v1648
    %v1652 = vadd.f32 %v1645, %v1648
    %v1653 = vadd.f32 %v1646, %v1648
    %1654 = vst.msk [vmem:[#allocation2 + $0x8] sm:$0xff] %vm189, %v1650
    %1655 = vst.msk [vmem:[#allocation2 + $0x10] sm:$0xff] %vm189, %v1651
    %1656 = vst.msk [vmem:[#allocation2 + $0x28] sm:$0xff] %vm189, %v1652
    %1657 = vst.msk [vmem:[#allocation2 + $0x30] sm:$0xff] %vm189, %v1653
    %s1658 = scalar_lea.vmem [#allocation9], 72
    %v1659 = vld [vmem:[%s1658] sm:$0xff]
    %v1660 = vld [vmem:[%s1658 + $0x8] sm:$0xff]
    %v1661 = vperm.slane %v1660, 0
    %v1662 = vmul.f32 %v1650, %v1661
    %v1663 = vmul.f32 %v1651, %v1661
    %v1664 = vmul.f32 %v1652, %v1661
    %v1665 = vmul.f32 %v1653, %v1661
    %v1666 = vld [vmem:[#allocation2 + $0x7] sm:$0xff]
    %v1667 = vld [vmem:[#allocation2 + $0xf] sm:$0xff]
    %v1668 = vld [vmem:[#allocation2 + $0x27] sm:$0xff]
    %v1669 = vld [vmem:[#allocation2 + $0x2f] sm:$0xff]
    %v1670 = vperm.slane %v1659, 7
    %v1671 = vmul.f32 %v1666, %v1670
    %v1672 = vmul.f32 %v1667, %v1670
    %v1673 = vmul.f32 %v1668, %v1670
    %v1674 = vmul.f32 %v1669, %v1670
    %v1675 = vadd.f32 %v1662, %v1671
    %v1676 = vadd.f32 %v1663, %v1672
    %v1677 = vadd.f32 %v1664, %v1673
    %v1678 = vadd.f32 %v1665, %v1674
    %v1679 = vld [vmem:[#allocation2 + $0x9] sm:$0xff]
    %v1680 = vld [vmem:[#allocation2 + $0x11] sm:$0xff]
    %v1681 = vld [vmem:[#allocation2 + $0x29] sm:$0xff]
    %v1682 = vld [vmem:[#allocation2 + $0x31] sm:$0xff]
    %v1683 = vperm.slane %v1660, 1
    %v1684 = vmul.f32 %v1679, %v1683
    %v1685 = vmul.f32 %v1680, %v1683
    %v1686 = vmul.f32 %v1681, %v1683
    %v1687 = vmul.f32 %v1682, %v1683
    %v1688 = vadd.f32 %v1675, %v1684
    %v1689 = vadd.f32 %v1676, %v1685
    %v1690 = vadd.f32 %v1677, %v1686
    %v1691 = vadd.f32 %v1678, %v1687
    %s1692 = scalar_lea.vmem [#allocation11], 3
    %v1693 = vld [vmem:[%s1692] sm:$0x1]
    %v1695 = vperm.slane %v1693, 0
    %v1697 = vadd.f32 %v1688, %v1695
    %v1698 = vadd.f32 %v1689, %v1695
    %v1699 = vadd.f32 %v1690, %v1695
    %v1700 = vadd.f32 %v1691, %v1695
    %v1701 = vmul.f32 %v1697, %v1697
    %v1702 = vmul.f32 %v1698, %v1698
    %v1703 = vmul.f32 %v1699, %v1699
    %v1704 = vmul.f32 %v1700, %v1700
    %v1705 = vmul.f32 %v1697, %v1701
    %v1706 = vmul.f32 %v1698, %v1702
    %v1707 = vmul.f32 %v1699, %v1703
    %v1708 = vmul.f32 %v1700, %v1704
    %v1709 = vmul.f32 %v1705, 0.044715
    %v1710 = vmul.f32 %v1706, 0.044715
    %v1711 = vmul.f32 %v1707, 0.044715
    %v1712 = vmul.f32 %v1708, 0.044715
    %v1713 = vadd.f32 %v1697, %v1709
    %v1714 = vadd.f32 %v1698, %v1710
    %v1715 = vadd.f32 %v1699, %v1711
    %v1716 = vadd.f32 %v1700, %v1712
    %v1717 = vmul.f32 %v1713, 0.7978846
    %v1718 = vmul.f32 %v1714, 0.7978846
    %v1719 = vmul.f32 %v1715, 0.7978846
    %v1720 = vmul.f32 %v1716, 0.7978846
    %v1721 = vtanh.pop %v1717
    %v1722 = vtanh.pop %v1718
    %v1723 = vtanh.pop %v1719
    %v1724 = vtanh.pop %v1720
    %v1725 = vadd.f32 %v1721, 1.0
    %v1726 = vadd.f32 %v1722, 1.0
    %v1727 = vadd.f32 %v1723, 1.0
    %v1728 = vadd.f32 %v1724, 1.0
    %v1729 = vmul.f32 %v1725, 0.5
    %v1730 = vmul.f32 %v1726, 0.5
    %v1731 = vmul.f32 %v1727, 0.5
    %v1732 = vmul.f32 %v1728, 0.5
    %v1733 = vmul.f32 %v1697, %v1729
    %v1734 = vmul.f32 %v1698, %v1730
    %v1735 = vmul.f32 %v1699, %v1731
    %v1736 = vmul.f32 %v1700, %v1732
    %v1737 = vpack.c.bf16 %v1734, %v1733
    %v1738 = vpack.c.bf16 %v1736, %v1735
    %s1739 = scalar_lea.vmem [#allocation12], 48
    %v1740 = vld [vmem:[%s1739] sm:$0xf]
    %v1741 = vld [vmem:[%s1739 + $0x4] sm:$0xf]
    %v1742 = vld [vmem:[%s1739 + $0x8] sm:$0xf]
    %v1743 = vld [vmem:[%s1739 + $0xc] sm:$0xf]
    %v1748 = vunpack.c.l.b16 %v1740
    %v1749 = vunpack.c.l.b16 %v1741
    %v1750 = vunpack.c.l.b16 %v1742
    %v1751 = vunpack.c.l.b16 %v1743
    %v1752 = vpack.c.b16 %v1749, %v1748
    %v1753 = vpack.c.b16 %v1751, %v1750
    %v1757 = vsel %vm189, %v1737, 0
    %v1760 = vsel %vm189, %v1738, 0
    %1762 = vmatpush.bf16.msra.mxu0 0
    %1763 = vmatpush.bf16.msra.mxu0 0
    %1764 = vmatpush.bf16.msra.mxu0 0
    %1765 = vmatpush.bf16.msra.mxu0 0
    %1766 = vmatpush.bf16.msra.mxu0 0
    %1767 = vmatpush.bf16.msra.mxu0 0
    %1768 = vmatpush.bf16.msra.mxu0 %v1753
    %1769 = vmatpush.bf16.msra.mxu0 %v1752
    %1770 = vmatmul.bf16.gmra.mxu0 %v1757
    %v1771 = vpop.f32.mrf.mxu0
    %v1772 = vadd.f32 0.0, %v1771
    %v1773 = vpop.f32.mrf.mxu0
    %v1774 = vadd.f32 0.0, %v1773
    %1775 = vmatmul.bf16.gmra.mxu0 %v1760
    %v1776 = vpop.f32.mrf.mxu0
    %v1777 = vadd.f32 0.0, %v1776
    %v1778 = vpop.f32.mrf.mxu0
    %v1779 = vadd.f32 0.0, %v1778
    %1780 = vdwg.mxu0
    %s1781 = scalar_lea.vmem [#allocation14], 3
    %v1782 = vld [vmem:[%s1781] sm:$0x1]
    %v1784 = vperm.slane %v1782, 0
    %v1786 = vadd.f32 %v1772, %v1784
    %v1787 = vadd.f32 %v1774, %v1784
    %v1788 = vadd.f32 %v1777, %v1784
    %v1789 = vadd.f32 %v1779, %v1784
    %v1790 = vadd.f32 %v1544, %v1786
    %v1791 = vadd.f32 %v1545, %v1787
    %v1792 = vadd.f32 %v1546, %v1788
    %v1793 = vadd.f32 %v1547, %v1789
    %s1794 = scalar_lea.vmem [#allocation6], 4
    %v1795 = vld [vmem:[%s1794] sm:$0x1]
    %s1796 = scalar_lea.vmem [#allocation8], 4
    %v1797 = vld [vmem:[%s1796] sm:$0x1]
    %v1798 = vsel %vm189, %v1790, 0.0
    %1799 = vadd.xlane.f32.xlu0 %v1798
    %v1800 = vpop.xlane.xlu0 %1799
    %v1801 = vsel %vm189, %v1791, 0.0
    %1802 = vadd.xlane.f32.xlu0 %v1801
    %v1803 = vpop.xlane.xlu0 %1802
    %v1804 = vsel %vm189, %v1792, 0.0
    %1805 = vadd.xlane.f32.xlu0 %v1804
    %v1806 = vpop.xlane.xlu0 %1805
    %v1807 = vsel %vm189, %v1793, 0.0
    %1808 = vadd.xlane.f32.xlu0 %v1807
    %v1809 = vpop.xlane.xlu0 %1808
    %v1810 = vmul.f32 %v1800, %v218
    %v1811 = vmul.f32 %v1803, %v218
    %v1812 = vmul.f32 %v1806, %v218
    %v1813 = vmul.f32 %v1809, %v218
    %v1814 = vsub.f32 %v1790, %v1810
    %v1815 = vsub.f32 %v1791, %v1811
    %v1816 = vsub.f32 %v1792, %v1812
    %v1817 = vsub.f32 %v1793, %v1813
    %v1818 = vmul.f32 %v1814, %v1814
    %v1819 = vmul.f32 %v1815, %v1815
    %v1820 = vmul.f32 %v1816, %v1816
    %v1821 = vmul.f32 %v1817, %v1817
    %v1822 = vsel %vm189, %v1818, 0.0
    %1823 = vadd.xlane.f32.xlu0 %v1822
    %v1824 = vpop.xlane.xlu0 %1823
    %v1825 = vsel %vm189, %v1819, 0.0
    %1826 = vadd.xlane.f32.xlu0 %v1825
    %v1827 = vpop.xlane.xlu0 %1826
    %v1828 = vsel %vm189, %v1820, 0.0
    %1829 = vadd.xlane.f32.xlu0 %v1828
    %v1830 = vpop.xlane.xlu0 %1829
    %v1831 = vsel %vm189, %v1821, 0.0
    %1832 = vadd.xlane.f32.xlu0 %v1831
    %v1833 = vpop.xlane.xlu0 %1832
    %v1834 = vmul.f32 %v1824, %v218
    %v1835 = vmul.f32 %v1827, %v218
    %v1836 = vmul.f32 %v1830, %v218
    %v1837 = vmul.f32 %v1833, %v218
    %v1838 = vadd.f32 %v1834, 1e-05
    %v1839 = vadd.f32 %v1835, 1e-05
    %v1840 = vadd.f32 %v1836, 1e-05
    %v1841 = vadd.f32 %v1837, 1e-05
    %v1842 = vrsqrt.pop %v1838
    %v1843 = vmul.f32 %v1842, %v1838
    %v1844 = vmul.f32 %v1843, %v1842
    %v1845 = vmul.f32 0.5, %v1844
    %v1846 = vsub.f32 1.5, %v1845
    %v1847 = vmul.f32 %v1842, %v1846
    %vm1848 = vweird.f32 %v1838
    %vm1849 = vweird.f32 %v1842
    %vm1850 = vmor %vm1848, %vm1849
    %v1851 = vsel %vm1850, %v1842, %v1847
    %v1852 = vrsqrt.pop %v1839
    %v1853 = vmul.f32 %v1852, %v1839
    %v1854 = vmul.f32 %v1853, %v1852
    %v1855 = vmul.f32 0.5, %v1854
    %v1856 = vsub.f32 1.5, %v1855
    %v1857 = vmul.f32 %v1852, %v1856
    %vm1858 = vweird.f32 %v1839
    %vm1859 = vweird.f32 %v1852
    %vm1860 = vmor %vm1858, %vm1859
    %v1861 = vsel %vm1860, %v1852, %v1857
    %v1862 = vrsqrt.pop %v1840
    %v1863 = vmul.f32 %v1862, %v1840
    %v1864 = vmul.f32 %v1863, %v1862
    %v1865 = vmul.f32 0.5, %v1864
    %v1866 = vsub.f32 1.5, %v1865
    %v1867 = vmul.f32 %v1862, %v1866
    %vm1868 = vweird.f32 %v1840
    %vm1869 = vweird.f32 %v1862
    %vm1870 = vmor %vm1868, %vm1869
    %v1871 = vsel %vm1870, %v1862, %v1867
    %v1872 = vrsqrt.pop %v1841
    %v1873 = vmul.f32 %v1872, %v1841
    %v1874 = vmul.f32 %v1873, %v1872
    %v1875 = vmul.f32 0.5, %v1874
    %v1876 = vsub.f32 1.5, %v1875
    %v1877 = vmul.f32 %v1872, %v1876
    %vm1878 = vweird.f32 %v1841
    %vm1879 = vweird.f32 %v1872
    %vm1880 = vmor %vm1878, %vm1879
    %v1881 = vsel %vm1880, %v1872, %v1877
    %v1882 = vmul.f32 %v1814, %v1851
    %v1883 = vmul.f32 %v1815, %v1861
    %v1884 = vmul.f32 %v1816, %v1871
    %v1885 = vmul.f32 %v1817, %v1881
    %v1887 = vperm.slane %v1795, 0
    %v1889 = vmul.f32 %v1882, %v1887
    %v1890 = vmul.f32 %v1883, %v1887
    %v1891 = vmul.f32 %v1884, %v1887
    %v1892 = vmul.f32 %v1885, %v1887
    %v1894 = vperm.slane %v1797, 0
    %v1896 = vadd.f32 %v1889, %v1894
    %v1897 = vadd.f32 %v1890, %v1894
    %v1898 = vadd.f32 %v1891, %v1894
    %v1899 = vadd.f32 %v1892, %v1894
    %1900 = vst.msk [vmem:[#allocation2 + $0x8] sm:$0xff] %vm189, %v1896
    %1901 = vst.msk [vmem:[#allocation2 + $0x10] sm:$0xff] %vm189, %v1897
    %1902 = vst.msk [vmem:[#allocation2 + $0x28] sm:$0xff] %vm189, %v1898
    %1903 = vst.msk [vmem:[#allocation2 + $0x30] sm:$0xff] %vm189, %v1899
    %s1904 = scalar_lea.vmem [#allocation9], 96
    %v1905 = vld [vmem:[%s1904] sm:$0xff]
    %v1906 = vld [vmem:[%s1904 + $0x8] sm:$0xff]
    %v1907 = vperm.slane %v1906, 0
    %v1908 = vmul.f32 %v1896, %v1907
    %v1909 = vmul.f32 %v1897, %v1907
    %v1910 = vmul.f32 %v1898, %v1907
    %v1911 = vmul.f32 %v1899, %v1907
    %v1912 = vld [vmem:[#allocation2 + $0x7] sm:$0xff]
    %v1913 = vld [vmem:[#allocation2 + $0xf] sm:$0xff]
    %v1914 = vld [vmem:[#allocation2 + $0x27] sm:$0xff]
    %v1915 = vld [vmem:[#allocation2 + $0x2f] sm:$0xff]
    %v1916 = vperm.slane %v1905, 7
    %v1917 = vmul.f32 %v1912, %v1916
    %v1918 = vmul.f32 %v1913, %v1916
    %v1919 = vmul.f32 %v1914, %v1916
    %v1920 = vmul.f32 %v1915, %v1916
    %v1921 = vadd.f32 %v1908, %v1917
    %v1922 = vadd.f32 %v1909, %v1918
    %v1923 = vadd.f32 %v1910, %v1919
    %v1924 = vadd.f32 %v1911, %v1920
    %v1925 = vld [vmem:[#allocation2 + $0x9] sm:$0xff]
    %v1926 = vld [vmem:[#allocation2 + $0x11] sm:$0xff]
    %v1927 = vld [vmem:[#allocation2 + $0x29] sm:$0xff]
    %v1928 = vld [vmem:[#allocation2 + $0x31] sm:$0xff]
    %v1929 = vperm.slane %v1906, 1
    %v1930 = vmul.f32 %v1925, %v1929
    %v1931 = vmul.f32 %v1926, %v1929
    %v1932 = vmul.f32 %v1927, %v1929
    %v1933 = vmul.f32 %v1928, %v1929
    %v1934 = vadd.f32 %v1921, %v1930
    %v1935 = vadd.f32 %v1922, %v1931
    %v1936 = vadd.f32 %v1923, %v1932
    %v1937 = vadd.f32 %v1924, %v1933
    %s1938 = scalar_lea.vmem [#allocation11], 4
    %v1939 = vld [vmem:[%s1938] sm:$0x1]
    %v1941 = vperm.slane %v1939, 0
    %v1943 = vadd.f32 %v1934, %v1941
    %v1944 = vadd.f32 %v1935, %v1941
    %v1945 = vadd.f32 %v1936, %v1941
    %v1946 = vadd.f32 %v1937, %v1941
    %v1947 = vmul.f32 %v1943, %v1943
    %v1948 = vmul.f32 %v1944, %v1944
    %v1949 = vmul.f32 %v1945, %v1945
    %v1950 = vmul.f32 %v1946, %v1946
    %v1951 = vmul.f32 %v1943, %v1947
    %v1952 = vmul.f32 %v1944, %v1948
    %v1953 = vmul.f32 %v1945, %v1949
    %v1954 = vmul.f32 %v1946, %v1950
    %v1955 = vmul.f32 %v1951, 0.044715
    %v1956 = vmul.f32 %v1952, 0.044715
    %v1957 = vmul.f32 %v1953, 0.044715
    %v1958 = vmul.f32 %v1954, 0.044715
    %v1959 = vadd.f32 %v1943, %v1955
    %v1960 = vadd.f32 %v1944, %v1956
    %v1961 = vadd.f32 %v1945, %v1957
    %v1962 = vadd.f32 %v1946, %v1958
    %v1963 = vmul.f32 %v1959, 0.7978846
    %v1964 = vmul.f32 %v1960, 0.7978846
    %v1965 = vmul.f32 %v1961, 0.7978846
    %v1966 = vmul.f32 %v1962, 0.7978846
    %v1967 = vtanh.pop %v1963
    %v1968 = vtanh.pop %v1964
    %v1969 = vtanh.pop %v1965
    %v1970 = vtanh.pop %v1966
    %v1971 = vadd.f32 %v1967, 1.0
    %v1972 = vadd.f32 %v1968, 1.0
    %v1973 = vadd.f32 %v1969, 1.0
    %v1974 = vadd.f32 %v1970, 1.0
    %v1975 = vmul.f32 %v1971, 0.5
    %v1976 = vmul.f32 %v1972, 0.5
    %v1977 = vmul.f32 %v1973, 0.5
    %v1978 = vmul.f32 %v1974, 0.5
    %v1979 = vmul.f32 %v1943, %v1975
    %v1980 = vmul.f32 %v1944, %v1976
    %v1981 = vmul.f32 %v1945, %v1977
    %v1982 = vmul.f32 %v1946, %v1978
    %v1983 = vpack.c.bf16 %v1980, %v1979
    %v1984 = vpack.c.bf16 %v1982, %v1981
    %s1985 = scalar_lea.vmem [#allocation12], 64
    %v1986 = vld [vmem:[%s1985] sm:$0xf]
    %v1987 = vld [vmem:[%s1985 + $0x4] sm:$0xf]
    %v1988 = vld [vmem:[%s1985 + $0x8] sm:$0xf]
    %v1989 = vld [vmem:[%s1985 + $0xc] sm:$0xf]
    %v1994 = vunpack.c.l.b16 %v1986
    %v1995 = vunpack.c.l.b16 %v1987
    %v1996 = vunpack.c.l.b16 %v1988
    %v1997 = vunpack.c.l.b16 %v1989
    %v1998 = vpack.c.b16 %v1995, %v1994
    %v1999 = vpack.c.b16 %v1997, %v1996
    %v2003 = vsel %vm189, %v1983, 0
    %v2006 = vsel %vm189, %v1984, 0
    %2008 = vmatpush.bf16.msra.mxu0 0
    %2009 = vmatpush.bf16.msra.mxu0 0
    %2010 = vmatpush.bf16.msra.mxu0 0
    %2011 = vmatpush.bf16.msra.mxu0 0
    %2012 = vmatpush.bf16.msra.mxu0 0
    %2013 = vmatpush.bf16.msra.mxu0 0
    %2014 = vmatpush.bf16.msra.mxu0 %v1999
    %2015 = vmatpush.bf16.msra.mxu0 %v1998
    %2016 = vmatmul.bf16.gmra.mxu0 %v2003
    %v2017 = vpop.f32.mrf.mxu0
    %v2018 = vadd.f32 0.0, %v2017
    %v2019 = vpop.f32.mrf.mxu0
    %v2020 = vadd.f32 0.0, %v2019
    %2021 = vmatmul.bf16.gmra.mxu0 %v2006
    %v2022 = vpop.f32.mrf.mxu0
    %v2023 = vadd.f32 0.0, %v2022
    %v2024 = vpop.f32.mrf.mxu0
    %v2025 = vadd.f32 0.0, %v2024
    %2026 = vdwg.mxu0
    %s2027 = scalar_lea.vmem [#allocation14], 4
    %v2028 = vld [vmem:[%s2027] sm:$0x1]
    %v2030 = vperm.slane %v2028, 0
    %v2032 = vadd.f32 %v2018, %v2030
    %v2033 = vadd.f32 %v2020, %v2030
    %v2034 = vadd.f32 %v2023, %v2030
    %v2035 = vadd.f32 %v2025, %v2030
    %v2036 = vadd.f32 %v1790, %v2032
    %v2037 = vadd.f32 %v1791, %v2033
    %v2038 = vadd.f32 %v1792, %v2034
    %v2039 = vadd.f32 %v1793, %v2035
    %s2040 = scalar_lea.vmem [#allocation6], 5
    %v2041 = vld [vmem:[%s2040] sm:$0x1]
    %s2042 = scalar_lea.vmem [#allocation8], 5
    %v2043 = vld [vmem:[%s2042] sm:$0x1]
    %v2044 = vsel %vm189, %v2036, 0.0
    %2045 = vadd.xlane.f32.xlu0 %v2044
    %v2046 = vpop.xlane.xlu0 %2045
    %v2047 = vsel %vm189, %v2037, 0.0
    %2048 = vadd.xlane.f32.xlu0 %v2047
    %v2049 = vpop.xlane.xlu0 %2048
    %v2050 = vsel %vm189, %v2038, 0.0
    %2051 = vadd.xlane.f32.xlu0 %v2050
    %v2052 = vpop.xlane.xlu0 %2051
    %v2053 = vsel %vm189, %v2039, 0.0
    %2054 = vadd.xlane.f32.xlu0 %v2053
    %v2055 = vpop.xlane.xlu0 %2054
    %v2056 = vmul.f32 %v2046, %v218
    %v2057 = vmul.f32 %v2049, %v218
    %v2058 = vmul.f32 %v2052, %v218
    %v2059 = vmul.f32 %v2055, %v218
    %v2060 = vsub.f32 %v2036, %v2056
    %v2061 = vsub.f32 %v2037, %v2057
    %v2062 = vsub.f32 %v2038, %v2058
    %v2063 = vsub.f32 %v2039, %v2059
    %v2064 = vmul.f32 %v2060, %v2060
    %v2065 = vmul.f32 %v2061, %v2061
    %v2066 = vmul.f32 %v2062, %v2062
    %v2067 = vmul.f32 %v2063, %v2063
    %v2068 = vsel %vm189, %v2064, 0.0
    %2069 = vadd.xlane.f32.xlu0 %v2068
    %v2070 = vpop.xlane.xlu0 %2069
    %v2071 = vsel %vm189, %v2065, 0.0
    %2072 = vadd.xlane.f32.xlu0 %v2071
    %v2073 = vpop.xlane.xlu0 %2072
    %v2074 = vsel %vm189, %v2066, 0.0
    %2075 = vadd.xlane.f32.xlu0 %v2074
    %v2076 = vpop.xlane.xlu0 %2075
    %v2077 = vsel %vm189, %v2067, 0.0
    %2078 = vadd.xlane.f32.xlu0 %v2077
    %v2079 = vpop.xlane.xlu0 %2078
    %v2080 = vmul.f32 %v2070, %v218
    %v2081 = vmul.f32 %v2073, %v218
    %v2082 = vmul.f32 %v2076, %v218
    %v2083 = vmul.f32 %v2079, %v218
    %v2084 = vadd.f32 %v2080, 1e-05
    %v2085 = vadd.f32 %v2081, 1e-05
    %v2086 = vadd.f32 %v2082, 1e-05
    %v2087 = vadd.f32 %v2083, 1e-05
    %v2088 = vrsqrt.pop %v2084
    %v2089 = vmul.f32 %v2088, %v2084
    %v2090 = vmul.f32 %v2089, %v2088
    %v2091 = vmul.f32 0.5, %v2090
    %v2092 = vsub.f32 1.5, %v2091
    %v2093 = vmul.f32 %v2088, %v2092
    %vm2094 = vweird.f32 %v2084
    %vm2095 = vweird.f32 %v2088
    %vm2096 = vmor %vm2094, %vm2095
    %v2097 = vsel %vm2096, %v2088, %v2093
    %v2098 = vrsqrt.pop %v2085
    %v2099 = vmul.f32 %v2098, %v2085
    %v2100 = vmul.f32 %v2099, %v2098
    %v2101 = vmul.f32 0.5, %v2100
    %v2102 = vsub.f32 1.5, %v2101
    %v2103 = vmul.f32 %v2098, %v2102
    %vm2104 = vweird.f32 %v2085
    %vm2105 = vweird.f32 %v2098
    %vm2106 = vmor %vm2104, %vm2105
    %v2107 = vsel %vm2106, %v2098, %v2103
    %v2108 = vrsqrt.pop %v2086
    %v2109 = vmul.f32 %v2108, %v2086
    %v2110 = vmul.f32 %v2109, %v2108
    %v2111 = vmul.f32 0.5, %v2110
    %v2112 = vsub.f32 1.5, %v2111
    %v2113 = vmul.f32 %v2108, %v2112
    %vm2114 = vweird.f32 %v2086
    %vm2115 = vweird.f32 %v2108
    %vm2116 = vmor %vm2114, %vm2115
    %v2117 = vsel %vm2116, %v2108, %v2113
    %v2118 = vrsqrt.pop %v2087
    %v2119 = vmul.f32 %v2118, %v2087
    %v2120 = vmul.f32 %v2119, %v2118
    %v2121 = vmul.f32 0.5, %v2120
    %v2122 = vsub.f32 1.5, %v2121
    %v2123 = vmul.f32 %v2118, %v2122
    %vm2124 = vweird.f32 %v2087
    %vm2125 = vweird.f32 %v2118
    %vm2126 = vmor %vm2124, %vm2125
    %v2127 = vsel %vm2126, %v2118, %v2123
    %v2128 = vmul.f32 %v2060, %v2097
    %v2129 = vmul.f32 %v2061, %v2107
    %v2130 = vmul.f32 %v2062, %v2117
    %v2131 = vmul.f32 %v2063, %v2127
    %v2133 = vperm.slane %v2041, 0
    %v2135 = vmul.f32 %v2128, %v2133
    %v2136 = vmul.f32 %v2129, %v2133
    %v2137 = vmul.f32 %v2130, %v2133
    %v2138 = vmul.f32 %v2131, %v2133
    %v2140 = vperm.slane %v2043, 0
    %v2142 = vadd.f32 %v2135, %v2140
    %v2143 = vadd.f32 %v2136, %v2140
    %v2144 = vadd.f32 %v2137, %v2140
    %v2145 = vadd.f32 %v2138, %v2140
    %2146 = vst.msk [vmem:[#allocation2 + $0x8] sm:$0xff] %vm189, %v2142
    %2147 = vst.msk [vmem:[#allocation2 + $0x10] sm:$0xff] %vm189, %v2143
    %2148 = vst.msk [vmem:[#allocation2 + $0x28] sm:$0xff] %vm189, %v2144
    %2149 = vst.msk [vmem:[#allocation2 + $0x30] sm:$0xff] %vm189, %v2145
    %s2150 = scalar_lea.vmem [#allocation9], 120
    %v2151 = vld [vmem:[%s2150] sm:$0xff]
    %v2152 = vld [vmem:[%s2150 + $0x8] sm:$0xff]
    %v2153 = vperm.slane %v2152, 0
    %v2154 = vmul.f32 %v2142, %v2153
    %v2155 = vmul.f32 %v2143, %v2153
    %v2156 = vmul.f32 %v2144, %v2153
    %v2157 = vmul.f32 %v2145, %v2153
    %v2158 = vld [vmem:[#allocation2 + $0x7] sm:$0xff]
    %v2159 = vld [vmem:[#allocation2 + $0xf] sm:$0xff]
    %v2160 = vld [vmem:[#allocation2 + $0x27] sm:$0xff]
    %v2161 = vld [vmem:[#allocation2 + $0x2f] sm:$0xff]
    %v2162 = vperm.slane %v2151, 7
    %v2163 = vmul.f32 %v2158, %v2162
    %v2164 = vmul.f32 %v2159, %v2162
    %v2165 = vmul.f32 %v2160, %v2162
    %v2166 = vmul.f32 %v2161, %v2162
    %v2167 = vadd.f32 %v2154, %v2163
    %v2168 = vadd.f32 %v2155, %v2164
    %v2169 = vadd.f32 %v2156, %v2165
    %v2170 = vadd.f32 %v2157, %v2166
    %v2171 = vld [vmem:[#allocation2 + $0x9] sm:$0xff]
    %v2172 = vld [vmem:[#allocation2 + $0x11] sm:$0xff]
    %v2173 = vld [vmem:[#allocation2 + $0x29] sm:$0xff]
    %v2174 = vld [vmem:[#allocation2 + $0x31] sm:$0xff]
    %v2175 = vperm.slane %v2152, 1
    %v2176 = vmul.f32 %v2171, %v2175
    %v2177 = vmul.f32 %v2172, %v2175
    %v2178 = vmul.f32 %v2173, %v2175
    %v2179 = vmul.f32 %v2174, %v2175
    %v2180 = vadd.f32 %v2167, %v2176
    %v2181 = vadd.f32 %v2168, %v2177
    %v2182 = vadd.f32 %v2169, %v2178
    %v2183 = vadd.f32 %v2170, %v2179
    %s2184 = scalar_lea.vmem [#allocation11], 5
    %v2185 = vld [vmem:[%s2184] sm:$0x1]
    %v2187 = vperm.slane %v2185, 0
    %v2189 = vadd.f32 %v2180, %v2187
    %v2190 = vadd.f32 %v2181, %v2187
    %v2191 = vadd.f32 %v2182, %v2187
    %v2192 = vadd.f32 %v2183, %v2187
    %v2193 = vmul.f32 %v2189, %v2189
    %v2194 = vmul.f32 %v2190, %v2190
    %v2195 = vmul.f32 %v2191, %v2191
    %v2196 = vmul.f32 %v2192, %v2192
    %v2197 = vmul.f32 %v2189, %v2193
    %v2198 = vmul.f32 %v2190, %v2194
    %v2199 = vmul.f32 %v2191, %v2195
    %v2200 = vmul.f32 %v2192, %v2196
    %v2201 = vmul.f32 %v2197, 0.044715
    %v2202 = vmul.f32 %v2198, 0.044715
    %v2203 = vmul.f32 %v2199, 0.044715
    %v2204 = vmul.f32 %v2200, 0.044715
    %v2205 = vadd.f32 %v2189, %v2201
    %v2206 = vadd.f32 %v2190, %v2202
    %v2207 = vadd.f32 %v2191, %v2203
    %v2208 = vadd.f32 %v2192, %v2204
    %v2209 = vmul.f32 %v2205, 0.7978846
    %v2210 = vmul.f32 %v2206, 0.7978846
    %v2211 = vmul.f32 %v2207, 0.7978846
    %v2212 = vmul.f32 %v2208, 0.7978846
    %v2213 = vtanh.pop %v2209
    %v2214 = vtanh.pop %v2210
    %v2215 = vtanh.pop %v2211
    %v2216 = vtanh.pop %v2212
    %v2217 = vadd.f32 %v2213, 1.0
    %v2218 = vadd.f32 %v2214, 1.0
    %v2219 = vadd.f32 %v2215, 1.0
    %v2220 = vadd.f32 %v2216, 1.0
    %v2221 = vmul.f32 %v2217, 0.5
    %v2222 = vmul.f32 %v2218, 0.5
    %v2223 = vmul.f32 %v2219, 0.5
    %v2224 = vmul.f32 %v2220, 0.5
    %v2225 = vmul.f32 %v2189, %v2221
    %v2226 = vmul.f32 %v2190, %v2222
    %v2227 = vmul.f32 %v2191, %v2223
    %v2228 = vmul.f32 %v2192, %v2224
    %v2229 = vpack.c.bf16 %v2226, %v2225
    %v2230 = vpack.c.bf16 %v2228, %v2227
    %s2231 = scalar_lea.vmem [#allocation12], 80
    %v2232 = vld [vmem:[%s2231] sm:$0xf]
    %v2233 = vld [vmem:[%s2231 + $0x4] sm:$0xf]
    %v2234 = vld [vmem:[%s2231 + $0x8] sm:$0xf]
    %v2235 = vld [vmem:[%s2231 + $0xc] sm:$0xf]
    %v2240 = vunpack.c.l.b16 %v2232
    %v2241 = vunpack.c.l.b16 %v2233
    %v2242 = vunpack.c.l.b16 %v2234
    %v2243 = vunpack.c.l.b16 %v2235
    %v2244 = vpack.c.b16 %v2241, %v2240
    %v2245 = vpack.c.b16 %v2243, %v2242
    %v2249 = vsel %vm189, %v2229, 0
    %v2252 = vsel %vm189, %v2230, 0
    %2254 = vmatpush.bf16.msra.mxu0 0
    %2255 = vmatpush.bf16.msra.mxu0 0
    %2256 = vmatpush.bf16.msra.mxu0 0
    %2257 = vmatpush.bf16.msra.mxu0 0
    %2258 = vmatpush.bf16.msra.mxu0 0
    %2259 = vmatpush.bf16.msra.mxu0 0
    %2260 = vmatpush.bf16.msra.mxu0 %v2245
    %2261 = vmatpush.bf16.msra.mxu0 %v2244
    %2262 = vmatmul.bf16.gmra.mxu0 %v2249
    %v2263 = vpop.f32.mrf.mxu0
    %v2264 = vadd.f32 0.0, %v2263
    %v2265 = vpop.f32.mrf.mxu0
    %v2266 = vadd.f32 0.0, %v2265
    %2267 = vmatmul.bf16.gmra.mxu0 %v2252
    %v2268 = vpop.f32.mrf.mxu0
    %v2269 = vadd.f32 0.0, %v2268
    %v2270 = vpop.f32.mrf.mxu0
    %v2271 = vadd.f32 0.0, %v2270
    %2272 = vdwg.mxu0
    %s2273 = scalar_lea.vmem [#allocation14], 5
    %v2274 = vld [vmem:[%s2273] sm:$0x1]
    %v2276 = vperm.slane %v2274, 0
    %v2278 = vadd.f32 %v2264, %v2276
    %v2279 = vadd.f32 %v2266, %v2276
    %v2280 = vadd.f32 %v2269, %v2276
    %v2281 = vadd.f32 %v2271, %v2276
    %v2282 = vadd.f32 %v2036, %v2278
    %v2283 = vadd.f32 %v2037, %v2279
    %v2284 = vadd.f32 %v2038, %v2280
    %v2285 = vadd.f32 %v2039, %v2281
    %s2286 = scalar_lea.vmem [#allocation6], 6
    %v2287 = vld [vmem:[%s2286] sm:$0x1]
    %s2288 = scalar_lea.vmem [#allocation8], 6
    %v2289 = vld [vmem:[%s2288] sm:$0x1]
    %v2290 = vsel %vm189, %v2282, 0.0
    %2291 = vadd.xlane.f32.xlu0 %v2290
    %v2292 = vpop.xlane.xlu0 %2291
    %v2293 = vsel %vm189, %v2283, 0.0
    %2294 = vadd.xlane.f32.xlu0 %v2293
    %v2295 = vpop.xlane.xlu0 %2294
    %v2296 = vsel %vm189, %v2284, 0.0
    %2297 = vadd.xlane.f32.xlu0 %v2296
    %v2298 = vpop.xlane.xlu0 %2297
    %v2299 = vsel %vm189, %v2285, 0.0
    %2300 = vadd.xlane.f32.xlu0 %v2299
    %v2301 = vpop.xlane.xlu0 %2300
    %v2302 = vmul.f32 %v2292, %v218
    %v2303 = vmul.f32 %v2295, %v218
    %v2304 = vmul.f32 %v2298, %v218
    %v2305 = vmul.f32 %v2301, %v218
    %v2306 = vsub.f32 %v2282, %v2302
    %v2307 = vsub.f32 %v2283, %v2303
    %v2308 = vsub.f32 %v2284, %v2304
    %v2309 = vsub.f32 %v2285, %v2305
    %v2310 = vmul.f32 %v2306, %v2306
    %v2311 = vmul.f32 %v2307, %v2307
    %v2312 = vmul.f32 %v2308, %v2308
    %v2313 = vmul.f32 %v2309, %v2309
    %v2314 = vsel %vm189, %v2310, 0.0
    %2315 = vadd.xlane.f32.xlu0 %v2314
    %v2316 = vpop.xlane.xlu0 %2315
    %v2317 = vsel %vm189, %v2311, 0.0
    %2318 = vadd.xlane.f32.xlu0 %v2317
    %v2319 = vpop.xlane.xlu0 %2318
    %v2320 = vsel %vm189, %v2312, 0.0
    %2321 = vadd.xlane.f32.xlu0 %v2320
    %v2322 = vpop.xlane.xlu0 %2321
    %v2323 = vsel %vm189, %v2313, 0.0
    %2324 = vadd.xlane.f32.xlu0 %v2323
    %v2325 = vpop.xlane.xlu0 %2324
    %v2326 = vmul.f32 %v2316, %v218
    %v2327 = vmul.f32 %v2319, %v218
    %v2328 = vmul.f32 %v2322, %v218
    %v2329 = vmul.f32 %v2325, %v218
    %v2330 = vadd.f32 %v2326, 1e-05
    %v2331 = vadd.f32 %v2327, 1e-05
    %v2332 = vadd.f32 %v2328, 1e-05
    %v2333 = vadd.f32 %v2329, 1e-05
    %v2334 = vrsqrt.pop %v2330
    %v2335 = vmul.f32 %v2334, %v2330
    %v2336 = vmul.f32 %v2335, %v2334
    %v2337 = vmul.f32 0.5, %v2336
    %v2338 = vsub.f32 1.5, %v2337
    %v2339 = vmul.f32 %v2334, %v2338
    %vm2340 = vweird.f32 %v2330
    %vm2341 = vweird.f32 %v2334
    %vm2342 = vmor %vm2340, %vm2341
    %v2343 = vsel %vm2342, %v2334, %v2339
    %v2344 = vrsqrt.pop %v2331
    %v2345 = vmul.f32 %v2344, %v2331
    %v2346 = vmul.f32 %v2345, %v2344
    %v2347 = vmul.f32 0.5, %v2346
    %v2348 = vsub.f32 1.5, %v2347
    %v2349 = vmul.f32 %v2344, %v2348
    %vm2350 = vweird.f32 %v2331
    %vm2351 = vweird.f32 %v2344
    %vm2352 = vmor %vm2350, %vm2351
    %v2353 = vsel %vm2352, %v2344, %v2349
    %v2354 = vrsqrt.pop %v2332
    %v2355 = vmul.f32 %v2354, %v2332
    %v2356 = vmul.f32 %v2355, %v2354
    %v2357 = vmul.f32 0.5, %v2356
    %v2358 = vsub.f32 1.5, %v2357
    %v2359 = vmul.f32 %v2354, %v2358
    %vm2360 = vweird.f32 %v2332
    %vm2361 = vweird.f32 %v2354
    %vm2362 = vmor %vm2360, %vm2361
    %v2363 = vsel %vm2362, %v2354, %v2359
    %v2364 = vrsqrt.pop %v2333
    %v2365 = vmul.f32 %v2364, %v2333
    %v2366 = vmul.f32 %v2365, %v2364
    %v2367 = vmul.f32 0.5, %v2366
    %v2368 = vsub.f32 1.5, %v2367
    %v2369 = vmul.f32 %v2364, %v2368
    %vm2370 = vweird.f32 %v2333
    %vm2371 = vweird.f32 %v2364
    %vm2372 = vmor %vm2370, %vm2371
    %v2373 = vsel %vm2372, %v2364, %v2369
    %v2374 = vmul.f32 %v2306, %v2343
    %v2375 = vmul.f32 %v2307, %v2353
    %v2376 = vmul.f32 %v2308, %v2363
    %v2377 = vmul.f32 %v2309, %v2373
    %v2379 = vperm.slane %v2287, 0
    %v2381 = vmul.f32 %v2374, %v2379
    %v2382 = vmul.f32 %v2375, %v2379
    %v2383 = vmul.f32 %v2376, %v2379
    %v2384 = vmul.f32 %v2377, %v2379
    %v2386 = vperm.slane %v2289, 0
    %v2388 = vadd.f32 %v2381, %v2386
    %v2389 = vadd.f32 %v2382, %v2386
    %v2390 = vadd.f32 %v2383, %v2386
    %v2391 = vadd.f32 %v2384, %v2386
    %2392 = vst.msk [vmem:[#allocation2 + $0x8] sm:$0xff] %vm189, %v2388
    %2393 = vst.msk [vmem:[#allocation2 + $0x10] sm:$0xff] %vm189, %v2389
    %2394 = vst.msk [vmem:[#allocation2 + $0x28] sm:$0xff] %vm189, %v2390
    %2395 = vst.msk [vmem:[#allocation2 + $0x30] sm:$0xff] %vm189, %v2391
    %s2396 = scalar_lea.vmem [#allocation9], 144
    %v2397 = vld [vmem:[%s2396] sm:$0xff]
    %v2398 = vld [vmem:[%s2396 + $0x8] sm:$0xff]
    %v2399 = vperm.slane %v2398, 0
    %v2400 = vmul.f32 %v2388, %v2399
    %v2401 = vmul.f32 %v2389, %v2399
    %v2402 = vmul.f32 %v2390, %v2399
    %v2403 = vmul.f32 %v2391, %v2399
    %v2404 = vld [vmem:[#allocation2 + $0x7] sm:$0xff]
    %v2405 = vld [vmem:[#allocation2 + $0xf] sm:$0xff]
    %v2406 = vld [vmem:[#allocation2 + $0x27] sm:$0xff]
    %v2407 = vld [vmem:[#allocation2 + $0x2f] sm:$0xff]
    %v2408 = vperm.slane %v2397, 7
    %v2409 = vmul.f32 %v2404, %v2408
    %v2410 = vmul.f32 %v2405, %v2408
    %v2411 = vmul.f32 %v2406, %v2408
    %v2412 = vmul.f32 %v2407, %v2408
    %v2413 = vadd.f32 %v2400, %v2409
    %v2414 = vadd.f32 %v2401, %v2410
    %v2415 = vadd.f32 %v2402, %v2411
    %v2416 = vadd.f32 %v2403, %v2412
    %v2417 = vld [vmem:[#allocation2 + $0x9] sm:$0xff]
    %v2418 = vld [vmem:[#allocation2 + $0x11] sm:$0xff]
    %v2419 = vld [vmem:[#allocation2 + $0x29] sm:$0xff]
    %v2420 = vld [vmem:[#allocation2 + $0x31] sm:$0xff]
    %v2421 = vperm.slane %v2398, 1
    %v2422 = vmul.f32 %v2417, %v2421
    %v2423 = vmul.f32 %v2418, %v2421
    %v2424 = vmul.f32 %v2419, %v2421
    %v2425 = vmul.f32 %v2420, %v2421
    %v2426 = vadd.f32 %v2413, %v2422
    %v2427 = vadd.f32 %v2414, %v2423
    %v2428 = vadd.f32 %v2415, %v2424
    %v2429 = vadd.f32 %v2416, %v2425
    %s2430 = scalar_lea.vmem [#allocation11], 6
    %v2431 = vld [vmem:[%s2430] sm:$0x1]
    %v2433 = vperm.slane %v2431, 0
    %v2435 = vadd.f32 %v2426, %v2433
    %v2436 = vadd.f32 %v2427, %v2433
    %v2437 = vadd.f32 %v2428, %v2433
    %v2438 = vadd.f32 %v2429, %v2433
    %v2439 = vmul.f32 %v2435, %v2435
    %v2440 = vmul.f32 %v2436, %v2436
    %v2441 = vmul.f32 %v2437, %v2437
    %v2442 = vmul.f32 %v2438, %v2438
    %v2443 = vmul.f32 %v2435, %v2439
    %v2444 = vmul.f32 %v2436, %v2440
    %v2445 = vmul.f32 %v2437, %v2441
    %v2446 = vmul.f32 %v2438, %v2442
    %v2447 = vmul.f32 %v2443, 0.044715
    %v2448 = vmul.f32 %v2444, 0.044715
    %v2449 = vmul.f32 %v2445, 0.044715
    %v2450 = vmul.f32 %v2446, 0.044715
    %v2451 = vadd.f32 %v2435, %v2447
    %v2452 = vadd.f32 %v2436, %v2448
    %v2453 = vadd.f32 %v2437, %v2449
    %v2454 = vadd.f32 %v2438, %v2450
    %v2455 = vmul.f32 %v2451, 0.7978846
    %v2456 = vmul.f32 %v2452, 0.7978846
    %v2457 = vmul.f32 %v2453, 0.7978846
    %v2458 = vmul.f32 %v2454, 0.7978846
    %v2459 = vtanh.pop %v2455
    %v2460 = vtanh.pop %v2456
    %v2461 = vtanh.pop %v2457
    %v2462 = vtanh.pop %v2458
    %v2463 = vadd.f32 %v2459, 1.0
    %v2464 = vadd.f32 %v2460, 1.0
    %v2465 = vadd.f32 %v2461, 1.0
    %v2466 = vadd.f32 %v2462, 1.0
    %v2467 = vmul.f32 %v2463, 0.5
    %v2468 = vmul.f32 %v2464, 0.5
    %v2469 = vmul.f32 %v2465, 0.5
    %v2470 = vmul.f32 %v2466, 0.5
    %v2471 = vmul.f32 %v2435, %v2467
    %v2472 = vmul.f32 %v2436, %v2468
    %v2473 = vmul.f32 %v2437, %v2469
    %v2474 = vmul.f32 %v2438, %v2470
    %v2475 = vpack.c.bf16 %v2472, %v2471
    %v2476 = vpack.c.bf16 %v2474, %v2473
    %s2477 = scalar_lea.vmem [#allocation12], 96
    %v2478 = vld [vmem:[%s2477] sm:$0xf]
    %v2479 = vld [vmem:[%s2477 + $0x4] sm:$0xf]
    %v2480 = vld [vmem:[%s2477 + $0x8] sm:$0xf]
    %v2481 = vld [vmem:[%s2477 + $0xc] sm:$0xf]
    %v2486 = vunpack.c.l.b16 %v2478
    %v2487 = vunpack.c.l.b16 %v2479
    %v2488 = vunpack.c.l.b16 %v2480
    %v2489 = vunpack.c.l.b16 %v2481
    %v2490 = vpack.c.b16 %v2487, %v2486
    %v2491 = vpack.c.b16 %v2489, %v2488
    %v2495 = vsel %vm189, %v2475, 0
    %v2498 = vsel %vm189, %v2476, 0
    %2500 = vmatpush.bf16.msra.mxu0 0
    %2501 = vmatpush.bf16.msra.mxu0 0
    %2502 = vmatpush.bf16.msra.mxu0 0
    %2503 = vmatpush.bf16.msra.mxu0 0
    %2504 = vmatpush.bf16.msra.mxu0 0
    %2505 = vmatpush.bf16.msra.mxu0 0
    %2506 = vmatpush.bf16.msra.mxu0 %v2491
    %2507 = vmatpush.bf16.msra.mxu0 %v2490
    %2508 = vmatmul.bf16.gmra.mxu0 %v2495
    %v2509 = vpop.f32.mrf.mxu0
    %v2510 = vadd.f32 0.0, %v2509
    %v2511 = vpop.f32.mrf.mxu0
    %v2512 = vadd.f32 0.0, %v2511
    %2513 = vmatmul.bf16.gmra.mxu0 %v2498
    %v2514 = vpop.f32.mrf.mxu0
    %v2515 = vadd.f32 0.0, %v2514
    %v2516 = vpop.f32.mrf.mxu0
    %v2517 = vadd.f32 0.0, %v2516
    %2518 = vdwg.mxu0
    %s2519 = scalar_lea.vmem [#allocation14], 6
    %v2520 = vld [vmem:[%s2519] sm:$0x1]
    %v2522 = vperm.slane %v2520, 0
    %v2524 = vadd.f32 %v2510, %v2522
    %v2525 = vadd.f32 %v2512, %v2522
    %v2526 = vadd.f32 %v2515, %v2522
    %v2527 = vadd.f32 %v2517, %v2522
    %v2528 = vadd.f32 %v2282, %v2524
    %v2529 = vadd.f32 %v2283, %v2525
    %v2530 = vadd.f32 %v2284, %v2526
    %v2531 = vadd.f32 %v2285, %v2527
    %s2532 = scalar_lea.vmem [#allocation6], 7
    %v2533 = vld [vmem:[%s2532] sm:$0x1]
    %s2534 = scalar_lea.vmem [#allocation8], 7
    %v2535 = vld [vmem:[%s2534] sm:$0x1]
    %v2536 = vsel %vm189, %v2528, 0.0
    %2537 = vadd.xlane.f32.xlu0 %v2536
    %v2538 = vpop.xlane.xlu0 %2537
    %v2539 = vsel %vm189, %v2529, 0.0
    %2540 = vadd.xlane.f32.xlu0 %v2539
    %v2541 = vpop.xlane.xlu0 %2540
    %v2542 = vsel %vm189, %v2530, 0.0
    %2543 = vadd.xlane.f32.xlu0 %v2542
    %v2544 = vpop.xlane.xlu0 %2543
    %v2545 = vsel %vm189, %v2531, 0.0
    %2546 = vadd.xlane.f32.xlu0 %v2545
    %v2547 = vpop.xlane.xlu0 %2546
    %v2548 = vmul.f32 %v2538, %v218
    %v2549 = vmul.f32 %v2541, %v218
    %v2550 = vmul.f32 %v2544, %v218
    %v2551 = vmul.f32 %v2547, %v218
    %v2552 = vsub.f32 %v2528, %v2548
    %v2553 = vsub.f32 %v2529, %v2549
    %v2554 = vsub.f32 %v2530, %v2550
    %v2555 = vsub.f32 %v2531, %v2551
    %v2556 = vmul.f32 %v2552, %v2552
    %v2557 = vmul.f32 %v2553, %v2553
    %v2558 = vmul.f32 %v2554, %v2554
    %v2559 = vmul.f32 %v2555, %v2555
    %v2560 = vsel %vm189, %v2556, 0.0
    %2561 = vadd.xlane.f32.xlu0 %v2560
    %v2562 = vpop.xlane.xlu0 %2561
    %v2563 = vsel %vm189, %v2557, 0.0
    %2564 = vadd.xlane.f32.xlu0 %v2563
    %v2565 = vpop.xlane.xlu0 %2564
    %v2566 = vsel %vm189, %v2558, 0.0
    %2567 = vadd.xlane.f32.xlu0 %v2566
    %v2568 = vpop.xlane.xlu0 %2567
    %v2569 = vsel %vm189, %v2559, 0.0
    %2570 = vadd.xlane.f32.xlu0 %v2569
    %v2571 = vpop.xlane.xlu0 %2570
    %v2572 = vmul.f32 %v2562, %v218
    %v2573 = vmul.f32 %v2565, %v218
    %v2574 = vmul.f32 %v2568, %v218
    %v2575 = vmul.f32 %v2571, %v218
    %v2576 = vadd.f32 %v2572, 1e-05
    %v2577 = vadd.f32 %v2573, 1e-05
    %v2578 = vadd.f32 %v2574, 1e-05
    %v2579 = vadd.f32 %v2575, 1e-05
    %v2580 = vrsqrt.pop %v2576
    %v2581 = vmul.f32 %v2580, %v2576
    %v2582 = vmul.f32 %v2581, %v2580
    %v2583 = vmul.f32 0.5, %v2582
    %v2584 = vsub.f32 1.5, %v2583
    %v2585 = vmul.f32 %v2580, %v2584
    %vm2586 = vweird.f32 %v2576
    %vm2587 = vweird.f32 %v2580
    %vm2588 = vmor %vm2586, %vm2587
    %v2589 = vsel %vm2588, %v2580, %v2585
    %v2590 = vrsqrt.pop %v2577
    %v2591 = vmul.f32 %v2590, %v2577
    %v2592 = vmul.f32 %v2591, %v2590
    %v2593 = vmul.f32 0.5, %v2592
    %v2594 = vsub.f32 1.5, %v2593
    %v2595 = vmul.f32 %v2590, %v2594
    %vm2596 = vweird.f32 %v2577
    %vm2597 = vweird.f32 %v2590
    %vm2598 = vmor %vm2596, %vm2597
    %v2599 = vsel %vm2598, %v2590, %v2595
    %v2600 = vrsqrt.pop %v2578
    %v2601 = vmul.f32 %v2600, %v2578
    %v2602 = vmul.f32 %v2601, %v2600
    %v2603 = vmul.f32 0.5, %v2602
    %v2604 = vsub.f32 1.5, %v2603
    %v2605 = vmul.f32 %v2600, %v2604
    %vm2606 = vweird.f32 %v2578
    %vm2607 = vweird.f32 %v2600
    %vm2608 = vmor %vm2606, %vm2607
    %v2609 = vsel %vm2608, %v2600, %v2605
    %v2610 = vrsqrt.pop %v2579
    %v2611 = vmul.f32 %v2610, %v2579
    %v2612 = vmul.f32 %v2611, %v2610
    %v2613 = vmul.f32 0.5, %v2612
    %v2614 = vsub.f32 1.5, %v2613
    %v2615 = vmul.f32 %v2610, %v2614
    %vm2616 = vweird.f32 %v2579
    %vm2617 = vweird.f32 %v2610
    %vm2618 = vmor %vm2616, %vm2617
    %v2619 = vsel %vm2618, %v2610, %v2615
    %v2620 = vmul.f32 %v2552, %v2589
    %v2621 = vmul.f32 %v2553, %v2599
    %v2622 = vmul.f32 %v2554, %v2609
    %v2623 = vmul.f32 %v2555, %v2619
    %v2625 = vperm.slane %v2533, 0
    %v2627 = vmul.f32 %v2620, %v2625
    %v2628 = vmul.f32 %v2621, %v2625
    %v2629 = vmul.f32 %v2622, %v2625
    %v2630 = vmul.f32 %v2623, %v2625
    %v2632 = vperm.slane %v2535, 0
    %v2634 = vadd.f32 %v2627, %v2632
    %v2635 = vadd.f32 %v2628, %v2632
    %v2636 = vadd.f32 %v2629, %v2632
    %v2637 = vadd.f32 %v2630, %v2632
    %2638 = vst.msk [vmem:[#allocation2 + $0x8] sm:$0xff] %vm189, %v2634
    %2639 = vst.msk [vmem:[#allocation2 + $0x10] sm:$0xff] %vm189, %v2635
    %2640 = vst.msk [vmem:[#allocation2 + $0x28] sm:$0xff] %vm189, %v2636
    %2641 = vst.msk [vmem:[#allocation2 + $0x30] sm:$0xff] %vm189, %v2637
    %s2642 = scalar_lea.vmem [#allocation9], 168
    %v2643 = vld [vmem:[%s2642] sm:$0xff]
    %v2644 = vld [vmem:[%s2642 + $0x8] sm:$0xff]
    %v2645 = vperm.slane %v2644, 0
    %v2646 = vmul.f32 %v2634, %v2645
    %v2647 = vmul.f32 %v2635, %v2645
    %v2648 = vmul.f32 %v2636, %v2645
    %v2649 = vmul.f32 %v2637, %v2645
    %v2650 = vld [vmem:[#allocation2 + $0x7] sm:$0xff]
    %v2651 = vld [vmem:[#allocation2 + $0xf] sm:$0xff]
    %v2652 = vld [vmem:[#allocation2 + $0x27] sm:$0xff]
    %v2653 = vld [vmem:[#allocation2 + $0x2f] sm:$0xff]
    %v2654 = vperm.slane %v2643, 7
    %v2655 = vmul.f32 %v2650, %v2654
    %v2656 = vmul.f32 %v2651, %v2654
    %v2657 = vmul.f32 %v2652, %v2654
    %v2658 = vmul.f32 %v2653, %v2654
    %v2659 = vadd.f32 %v2646, %v2655
    %v2660 = vadd.f32 %v2647, %v2656
    %v2661 = vadd.f32 %v2648, %v2657
    %v2662 = vadd.f32 %v2649, %v2658
    %v2663 = vld [vmem:[#allocation2 + $0x9] sm:$0xff]
    %v2664 = vld [vmem:[#allocation2 + $0x11] sm:$0xff]
    %v2665 = vld [vmem:[#allocation2 + $0x29] sm:$0xff]
    %v2666 = vld [vmem:[#allocation2 + $0x31] sm:$0xff]
    %v2667 = vperm.slane %v2644, 1
    %v2668 = vmul.f32 %v2663, %v2667
    %v2669 = vmul.f32 %v2664, %v2667
    %v2670 = vmul.f32 %v2665, %v2667
    %v2671 = vmul.f32 %v2666, %v2667
    %v2672 = vadd.f32 %v2659, %v2668
    %v2673 = vadd.f32 %v2660, %v2669
    %v2674 = vadd.f32 %v2661, %v2670
    %v2675 = vadd.f32 %v2662, %v2671
    %s2676 = scalar_lea.vmem [#allocation11], 7
    %v2677 = vld [vmem:[%s2676] sm:$0x1]
    %v2679 = vperm.slane %v2677, 0
    %v2681 = vadd.f32 %v2672, %v2679
    %v2682 = vadd.f32 %v2673, %v2679
    %v2683 = vadd.f32 %v2674, %v2679
    %v2684 = vadd.f32 %v2675, %v2679
    %v2685 = vmul.f32 %v2681, %v2681
    %v2686 = vmul.f32 %v2682, %v2682
    %v2687 = vmul.f32 %v2683, %v2683
    %v2688 = vmul.f32 %v2684, %v2684
    %v2689 = vmul.f32 %v2681, %v2685
    %v2690 = vmul.f32 %v2682, %v2686
    %v2691 = vmul.f32 %v2683, %v2687
    %v2692 = vmul.f32 %v2684, %v2688
    %v2693 = vmul.f32 %v2689, 0.044715
    %v2694 = vmul.f32 %v2690, 0.044715
    %v2695 = vmul.f32 %v2691, 0.044715
    %v2696 = vmul.f32 %v2692, 0.044715
    %v2697 = vadd.f32 %v2681, %v2693
    %v2698 = vadd.f32 %v2682, %v2694
    %v2699 = vadd.f32 %v2683, %v2695
    %v2700 = vadd.f32 %v2684, %v2696
    %v2701 = vmul.f32 %v2697, 0.7978846
    %v2702 = vmul.f32 %v2698, 0.7978846
    %v2703 = vmul.f32 %v2699, 0.7978846
    %v2704 = vmul.f32 %v2700, 0.7978846
    %v2705 = vtanh.pop %v2701
    %v2706 = vtanh.pop %v2702
    %v2707 = vtanh.pop %v2703
    %v2708 = vtanh.pop %v2704
    %v2709 = vadd.f32 %v2705, 1.0
    %v2710 = vadd.f32 %v2706, 1.0
    %v2711 = vadd.f32 %v2707, 1.0
    %v2712 = vadd.f32 %v2708, 1.0
    %v2713 = vmul.f32 %v2709, 0.5
    %v2714 = vmul.f32 %v2710, 0.5
    %v2715 = vmul.f32 %v2711, 0.5
    %v2716 = vmul.f32 %v2712, 0.5
    %v2717 = vmul.f32 %v2681, %v2713
    %v2718 = vmul.f32 %v2682, %v2714
    %v2719 = vmul.f32 %v2683, %v2715
    %v2720 = vmul.f32 %v2684, %v2716
    %v2721 = vpack.c.bf16 %v2718, %v2717
    %v2722 = vpack.c.bf16 %v2720, %v2719
    %s2723 = scalar_lea.vmem [#allocation12], 112
    %v2724 = vld [vmem:[%s2723] sm:$0xf]
    %v2725 = vld [vmem:[%s2723 + $0x4] sm:$0xf]
    %v2726 = vld [vmem:[%s2723 + $0x8] sm:$0xf]
    %v2727 = vld [vmem:[%s2723 + $0xc] sm:$0xf]
    %v2732 = vunpack.c.l.b16 %v2724
    %v2733 = vunpack.c.l.b16 %v2725
    %v2734 = vunpack.c.l.b16 %v2726
    %v2735 = vunpack.c.l.b16 %v2727
    %v2736 = vpack.c.b16 %v2733, %v2732
    %v2737 = vpack.c.b16 %v2735, %v2734
    %v2741 = vsel %vm189, %v2721, 0
    %v2744 = vsel %vm189, %v2722, 0
    %2746 = vmatpush.bf16.msra.mxu0 0
    %2747 = vmatpush.bf16.msra.mxu0 0
    %2748 = vmatpush.bf16.msra.mxu0 0
    %2749 = vmatpush.bf16.msra.mxu0 0
    %2750 = vmatpush.bf16.msra.mxu0 0
    %2751 = vmatpush.bf16.msra.mxu0 0
    %2752 = vmatpush.bf16.msra.mxu0 %v2737
    %2753 = vmatpush.bf16.msra.mxu0 %v2736
    %2754 = vmatmul.bf16.gmra.mxu0 %v2741
    %v2755 = vpop.f32.mrf.mxu0
    %v2756 = vadd.f32 0.0, %v2755
    %v2757 = vpop.f32.mrf.mxu0
    %v2758 = vadd.f32 0.0, %v2757
    %2759 = vmatmul.bf16.gmra.mxu0 %v2744
    %v2760 = vpop.f32.mrf.mxu0
    %v2761 = vadd.f32 0.0, %v2760
    %v2762 = vpop.f32.mrf.mxu0
    %v2763 = vadd.f32 0.0, %v2762
    %2764 = vdwg.mxu0
    %s2765 = scalar_lea.vmem [#allocation14], 7
    %v2766 = vld [vmem:[%s2765] sm:$0x1]
    %v2768 = vperm.slane %v2766, 0
    %v2770 = vadd.f32 %v2756, %v2768
    %v2771 = vadd.f32 %v2758, %v2768
    %v2772 = vadd.f32 %v2761, %v2768
    %v2773 = vadd.f32 %v2763, %v2768
    %v2774 = vadd.f32 %v2528, %v2770
    %v2775 = vadd.f32 %v2529, %v2771
    %v2776 = vadd.f32 %v2530, %v2772
    %v2777 = vadd.f32 %v2531, %v2773
    %s2778 = scalar_lea.vmem [#allocation6], 8
    %v2779 = vld [vmem:[%s2778] sm:$0x1]
    %s2780 = scalar_lea.vmem [#allocation8], 8
    %v2781 = vld [vmem:[%s2780] sm:$0x1]
    %v2782 = vsel %vm189, %v2774, 0.0
    %2783 = vadd.xlane.f32.xlu0 %v2782
    %v2784 = vpop.xlane.xlu0 %2783
    %v2785 = vsel %vm189, %v2775, 0.0
    %2786 = vadd.xlane.f32.xlu0 %v2785
    %v2787 = vpop.xlane.xlu0 %2786
    %v2788 = vsel %vm189, %v2776, 0.0
    %2789 = vadd.xlane.f32.xlu0 %v2788
    %v2790 = vpop.xlane.xlu0 %2789
    %v2791 = vsel %vm189, %v2777, 0.0
    %2792 = vadd.xlane.f32.xlu0 %v2791
    %v2793 = vpop.xlane.xlu0 %2792
    %v2794 = vmul.f32 %v2784, %v218
    %v2795 = vmul.f32 %v2787, %v218
    %v2796 = vmul.f32 %v2790, %v218
    %v2797 = vmul.f32 %v2793, %v218
    %v2798 = vsub.f32 %v2774, %v2794
    %v2799 = vsub.f32 %v2775, %v2795
    %v2800 = vsub.f32 %v2776, %v2796
    %v2801 = vsub.f32 %v2777, %v2797
    %v2802 = vmul.f32 %v2798, %v2798
    %v2803 = vmul.f32 %v2799, %v2799
    %v2804 = vmul.f32 %v2800, %v2800
    %v2805 = vmul.f32 %v2801, %v2801
    %v2806 = vsel %vm189, %v2802, 0.0
    %2807 = vadd.xlane.f32.xlu0 %v2806
    %v2808 = vpop.xlane.xlu0 %2807
    %v2809 = vsel %vm189, %v2803, 0.0
    %2810 = vadd.xlane.f32.xlu0 %v2809
    %v2811 = vpop.xlane.xlu0 %2810
    %v2812 = vsel %vm189, %v2804, 0.0
    %2813 = vadd.xlane.f32.xlu0 %v2812
    %v2814 = vpop.xlane.xlu0 %2813
    %v2815 = vsel %vm189, %v2805, 0.0
    %2816 = vadd.xlane.f32.xlu0 %v2815
    %v2817 = vpop.xlane.xlu0 %2816
    %v2818 = vmul.f32 %v2808, %v218
    %v2819 = vmul.f32 %v2811, %v218
    %v2820 = vmul.f32 %v2814, %v218
    %v2821 = vmul.f32 %v2817, %v218
    %v2822 = vadd.f32 %v2818, 1e-05
    %v2823 = vadd.f32 %v2819, 1e-05
    %v2824 = vadd.f32 %v2820, 1e-05
    %v2825 = vadd.f32 %v2821, 1e-05
    %v2826 = vrsqrt.pop %v2822
    %v2827 = vmul.f32 %v2826, %v2822
    %v2828 = vmul.f32 %v2827, %v2826
    %v2829 = vmul.f32 0.5, %v2828
    %v2830 = vsub.f32 1.5, %v2829
    %v2831 = vmul.f32 %v2826, %v2830
    %vm2832 = vweird.f32 %v2822
    %vm2833 = vweird.f32 %v2826
    %vm2834 = vmor %vm2832, %vm2833
    %v2835 = vsel %vm2834, %v2826, %v2831
    %v2836 = vrsqrt.pop %v2823
    %v2837 = vmul.f32 %v2836, %v2823
    %v2838 = vmul.f32 %v2837, %v2836
    %v2839 = vmul.f32 0.5, %v2838
    %v2840 = vsub.f32 1.5, %v2839
    %v2841 = vmul.f32 %v2836, %v2840
    %vm2842 = vweird.f32 %v2823
    %vm2843 = vweird.f32 %v2836
    %vm2844 = vmor %vm2842, %vm2843
    %v2845 = vsel %vm2844, %v2836, %v2841
    %v2846 = vrsqrt.pop %v2824
    %v2847 = vmul.f32 %v2846, %v2824
    %v2848 = vmul.f32 %v2847, %v2846
    %v2849 = vmul.f32 0.5, %v2848
    %v2850 = vsub.f32 1.5, %v2849
    %v2851 = vmul.f32 %v2846, %v2850
    %vm2852 = vweird.f32 %v2824
    %vm2853 = vweird.f32 %v2846
    %vm2854 = vmor %vm2852, %vm2853
    %v2855 = vsel %vm2854, %v2846, %v2851
    %v2856 = vrsqrt.pop %v2825
    %v2857 = vmul.f32 %v2856, %v2825
    %v2858 = vmul.f32 %v2857, %v2856
    %v2859 = vmul.f32 0.5, %v2858
    %v2860 = vsub.f32 1.5, %v2859
    %v2861 = vmul.f32 %v2856, %v2860
    %vm2862 = vweird.f32 %v2825
    %vm2863 = vweird.f32 %v2856
    %vm2864 = vmor %vm2862, %vm2863
    %v2865 = vsel %vm2864, %v2856, %v2861
    %v2866 = vmul.f32 %v2798, %v2835
    %v2867 = vmul.f32 %v2799, %v2845
    %v2868 = vmul.f32 %v2800, %v2855
    %v2869 = vmul.f32 %v2801, %v2865
    %v2871 = vperm.slane %v2779, 0
    %v2873 = vmul.f32 %v2866, %v2871
    %v2874 = vmul.f32 %v2867, %v2871
    %v2875 = vmul.f32 %v2868, %v2871
    %v2876 = vmul.f32 %v2869, %v2871
    %v2878 = vperm.slane %v2781, 0
    %v2880 = vadd.f32 %v2873, %v2878
    %v2881 = vadd.f32 %v2874, %v2878
    %v2882 = vadd.f32 %v2875, %v2878
    %v2883 = vadd.f32 %v2876, %v2878
    %2884 = vst.msk [vmem:[#allocation2 + $0x8] sm:$0xff] %vm189, %v2880
    %2885 = vst.msk [vmem:[#allocation2 + $0x10] sm:$0xff] %vm189, %v2881
    %2886 = vst.msk [vmem:[#allocation2 + $0x28] sm:$0xff] %vm189, %v2882
    %2887 = vst.msk [vmem:[#allocation2 + $0x30] sm:$0xff] %vm189, %v2883
    %s2888 = scalar_lea.vmem [#allocation9], 192
    %v2889 = vld [vmem:[%s2888] sm:$0xff]
    %v2890 = vld [vmem:[%s2888 + $0x8] sm:$0xff]
    %v2891 = vperm.slane %v2890, 0
    %v2892 = vmul.f32 %v2880, %v2891
    %v2893 = vmul.f32 %v2881, %v2891
    %v2894 = vmul.f32 %v2882, %v2891
    %v2895 = vmul.f32 %v2883, %v2891
    %v2896 = vld [vmem:[#allocation2 + $0x7] sm:$0xff]
    %v2897 = vld [vmem:[#allocation2 + $0xf] sm:$0xff]
    %v2898 = vld [vmem:[#allocation2 + $0x27] sm:$0xff]
    %v2899 = vld [vmem:[#allocation2 + $0x2f] sm:$0xff]
    %v2900 = vperm.slane %v2889, 7
    %v2901 = vmul.f32 %v2896, %v2900
    %v2902 = vmul.f32 %v2897, %v2900
    %v2903 = vmul.f32 %v2898, %v2900
    %v2904 = vmul.f32 %v2899, %v2900
    %v2905 = vadd.f32 %v2892, %v2901
    %v2906 = vadd.f32 %v2893, %v2902
    %v2907 = vadd.f32 %v2894, %v2903
    %v2908 = vadd.f32 %v2895, %v2904
    %v2909 = vld [vmem:[#allocation2 + $0x9] sm:$0xff]
    %v2910 = vld [vmem:[#allocation2 + $0x11] sm:$0xff]
    %v2911 = vld [vmem:[#allocation2 + $0x29] sm:$0xff]
    %v2912 = vld [vmem:[#allocation2 + $0x31] sm:$0xff]
    %v2913 = vperm.slane %v2890, 1
    %v2914 = vmul.f32 %v2909, %v2913
    %v2915 = vmul.f32 %v2910, %v2913
    %v2916 = vmul.f32 %v2911, %v2913
    %v2917 = vmul.f32 %v2912, %v2913
    %v2918 = vadd.f32 %v2905, %v2914
    %v2919 = vadd.f32 %v2906, %v2915
    %v2920 = vadd.f32 %v2907, %v2916
    %v2921 = vadd.f32 %v2908, %v2917
    %s2922 = scalar_lea.vmem [#allocation11], 8
    %v2923 = vld [vmem:[%s2922] sm:$0x1]
    %v2925 = vperm.slane %v2923, 0
    %v2927 = vadd.f32 %v2918, %v2925
    %v2928 = vadd.f32 %v2919, %v2925
    %v2929 = vadd.f32 %v2920, %v2925
    %v2930 = vadd.f32 %v2921, %v2925
    %v2931 = vmul.f32 %v2927, %v2927
    %v2932 = vmul.f32 %v2928, %v2928
    %v2933 = vmul.f32 %v2929, %v2929
    %v2934 = vmul.f32 %v2930, %v2930
    %v2935 = vmul.f32 %v2927, %v2931
    %v2936 = vmul.f32 %v2928, %v2932
    %v2937 = vmul.f32 %v2929, %v2933
    %v2938 = vmul.f32 %v2930, %v2934
    %v2939 = vmul.f32 %v2935, 0.044715
    %v2940 = vmul.f32 %v2936, 0.044715
    %v2941 = vmul.f32 %v2937, 0.044715
    %v2942 = vmul.f32 %v2938, 0.044715
    %v2943 = vadd.f32 %v2927, %v2939
    %v2944 = vadd.f32 %v2928, %v2940
    %v2945 = vadd.f32 %v2929, %v2941
    %v2946 = vadd.f32 %v2930, %v2942
    %v2947 = vmul.f32 %v2943, 0.7978846
    %v2948 = vmul.f32 %v2944, 0.7978846
    %v2949 = vmul.f32 %v2945, 0.7978846
    %v2950 = vmul.f32 %v2946, 0.7978846
    %v2951 = vtanh.pop %v2947
    %v2952 = vtanh.pop %v2948
    %v2953 = vtanh.pop %v2949
    %v2954 = vtanh.pop %v2950
    %v2955 = vadd.f32 %v2951, 1.0
    %v2956 = vadd.f32 %v2952, 1.0
    %v2957 = vadd.f32 %v2953, 1.0
    %v2958 = vadd.f32 %v2954, 1.0
    %v2959 = vmul.f32 %v2955, 0.5
    %v2960 = vmul.f32 %v2956, 0.5
    %v2961 = vmul.f32 %v2957, 0.5
    %v2962 = vmul.f32 %v2958, 0.5
    %v2963 = vmul.f32 %v2927, %v2959
    %v2964 = vmul.f32 %v2928, %v2960
    %v2965 = vmul.f32 %v2929, %v2961
    %v2966 = vmul.f32 %v2930, %v2962
    %v2967 = vpack.c.bf16 %v2964, %v2963
    %v2968 = vpack.c.bf16 %v2966, %v2965
    %s2969 = scalar_lea.vmem [#allocation12], 128
    %v2970 = vld [vmem:[%s2969] sm:$0xf]
    %v2971 = vld [vmem:[%s2969 + $0x4] sm:$0xf]
    %v2972 = vld [vmem:[%s2969 + $0x8] sm:$0xf]
    %v2973 = vld [vmem:[%s2969 + $0xc] sm:$0xf]
    %v2978 = vunpack.c.l.b16 %v2970
    %v2979 = vunpack.c.l.b16 %v2971
    %v2980 = vunpack.c.l.b16 %v2972
    %v2981 = vunpack.c.l.b16 %v2973
    %v2982 = vpack.c.b16 %v2979, %v2978
    %v2983 = vpack.c.b16 %v2981, %v2980
    %v2987 = vsel %vm189, %v2967, 0
    %v2990 = vsel %vm189, %v2968, 0
    %2992 = vmatpush.bf16.msra.mxu0 0
    %2993 = vmatpush.bf16.msra.mxu0 0
    %2994 = vmatpush.bf16.msra.mxu0 0
    %2995 = vmatpush.bf16.msra.mxu0 0
    %2996 = vmatpush.bf16.msra.mxu0 0
    %2997 = vmatpush.bf16.msra.mxu0 0
    %2998 = vmatpush.bf16.msra.mxu0 %v2983
    %2999 = vmatpush.bf16.msra.mxu0 %v2982
    %3000 = vmatmul.bf16.gmra.mxu0 %v2987
    %v3001 = vpop.f32.mrf.mxu0
    %v3002 = vadd.f32 0.0, %v3001
    %v3003 = vpop.f32.mrf.mxu0
    %v3004 = vadd.f32 0.0, %v3003
    %3005 = vmatmul.bf16.gmra.mxu0 %v2990
    %v3006 = vpop.f32.mrf.mxu0
    %v3007 = vadd.f32 0.0, %v3006
    %v3008 = vpop.f32.mrf.mxu0
    %v3009 = vadd.f32 0.0, %v3008
    %3010 = vdwg.mxu0
    %s3011 = scalar_lea.vmem [#allocation14], 8
    %v3012 = vld [vmem:[%s3011] sm:$0x1]
    %v3014 = vperm.slane %v3012, 0
    %v3016 = vadd.f32 %v3002, %v3014
    %v3017 = vadd.f32 %v3004, %v3014
    %v3018 = vadd.f32 %v3007, %v3014
    %v3019 = vadd.f32 %v3009, %v3014
    %v3020 = vadd.f32 %v2774, %v3016
    %v3021 = vadd.f32 %v2775, %v3017
    %v3022 = vadd.f32 %v2776, %v3018
    %v3023 = vadd.f32 %v2777, %v3019
    %s3024 = scalar_lea.vmem %s7, 1
    %v3025 = vld [vmem:[%s3024] sm:$0x1]
    %s3026 = scalar_lea.vmem %s8, 1
    %v3027 = vld [vmem:[%s3026] sm:$0x1]
    %v3028 = vsel %vm189, %v3020, 0.0
    %3029 = vadd.xlane.f32.xlu0 %v3028
    %v3030 = vpop.xlane.xlu0 %3029
    %v3031 = vsel %vm189, %v3021, 0.0
    %3032 = vadd.xlane.f32.xlu0 %v3031
    %v3033 = vpop.xlane.xlu0 %3032
    %v3034 = vsel %vm189, %v3022, 0.0
    %3035 = vadd.xlane.f32.xlu0 %v3034
    %v3036 = vpop.xlane.xlu0 %3035
    %v3037 = vsel %vm189, %v3023, 0.0
    %3038 = vadd.xlane.f32.xlu0 %v3037
    %v3039 = vpop.xlane.xlu0 %3038
    %v3040 = vmul.f32 %v3030, %v218
    %v3041 = vmul.f32 %v3033, %v218
    %v3042 = vmul.f32 %v3036, %v218
    %v3043 = vmul.f32 %v3039, %v218
    %v3044 = vsub.f32 %v3020, %v3040
    %v3045 = vsub.f32 %v3021, %v3041
    %v3046 = vsub.f32 %v3022, %v3042
    %v3047 = vsub.f32 %v3023, %v3043
    %v3048 = vmul.f32 %v3044, %v3044
    %v3049 = vmul.f32 %v3045, %v3045
    %v3050 = vmul.f32 %v3046, %v3046
    %v3051 = vmul.f32 %v3047, %v3047
    %v3052 = vsel %vm189, %v3048, 0.0
    %3053 = vadd.xlane.f32.xlu0 %v3052
    %v3054 = vpop.xlane.xlu0 %3053
    %v3055 = vsel %vm189, %v3049, 0.0
    %3056 = vadd.xlane.f32.xlu0 %v3055
    %v3057 = vpop.xlane.xlu0 %3056
    %v3058 = vsel %vm189, %v3050, 0.0
    %3059 = vadd.xlane.f32.xlu0 %v3058
    %v3060 = vpop.xlane.xlu0 %3059
    %v3061 = vsel %vm189, %v3051, 0.0
    %3062 = vadd.xlane.f32.xlu0 %v3061
    %v3063 = vpop.xlane.xlu0 %3062
    %v3064 = vmul.f32 %v3054, %v218
    %v3065 = vmul.f32 %v3057, %v218
    %v3066 = vmul.f32 %v3060, %v218
    %v3067 = vmul.f32 %v3063, %v218
    %v3068 = vadd.f32 %v3064, 1e-05
    %v3069 = vadd.f32 %v3065, 1e-05
    %v3070 = vadd.f32 %v3066, 1e-05
    %v3071 = vadd.f32 %v3067, 1e-05
    %v3072 = vrsqrt.pop %v3068
    %v3073 = vmul.f32 %v3072, %v3068
    %v3074 = vmul.f32 %v3073, %v3072
    %v3075 = vmul.f32 0.5, %v3074
    %v3076 = vsub.f32 1.5, %v3075
    %v3077 = vmul.f32 %v3072, %v3076
    %vm3078 = vweird.f32 %v3068
    %vm3079 = vweird.f32 %v3072
    %vm3080 = vmor %vm3078, %vm3079
    %v3081 = vsel %vm3080, %v3072, %v3077
    %v3082 = vrsqrt.pop %v3069
    %v3083 = vmul.f32 %v3082, %v3069
    %v3084 = vmul.f32 %v3083, %v3082
    %v3085 = vmul.f32 0.5, %v3084
    %v3086 = vsub.f32 1.5, %v3085
    %v3087 = vmul.f32 %v3082, %v3086
    %vm3088 = vweird.f32 %v3069
    %vm3089 = vweird.f32 %v3082
    %vm3090 = vmor %vm3088, %vm3089
    %v3091 = vsel %vm3090, %v3082, %v3087
    %v3092 = vrsqrt.pop %v3070
    %v3093 = vmul.f32 %v3092, %v3070
    %v3094 = vmul.f32 %v3093, %v3092
    %v3095 = vmul.f32 0.5, %v3094
    %v3096 = vsub.f32 1.5, %v3095
    %v3097 = vmul.f32 %v3092, %v3096
    %vm3098 = vweird.f32 %v3070
    %vm3099 = vweird.f32 %v3092
    %vm3100 = vmor %vm3098, %vm3099
    %v3101 = vsel %vm3100, %v3092, %v3097
    %v3102 = vrsqrt.pop %v3071
    %v3103 = vmul.f32 %v3102, %v3071
    %v3104 = vmul.f32 %v3103, %v3102
    %v3105 = vmul.f32 0.5, %v3104
    %v3106 = vsub.f32 1.5, %v3105
    %v3107 = vmul.f32 %v3102, %v3106
    %vm3108 = vweird.f32 %v3071
    %vm3109 = vweird.f32 %v3102
    %vm3110 = vmor %vm3108, %vm3109
    %v3111 = vsel %vm3110, %v3102, %v3107
    %v3112 = vmul.f32 %v3044, %v3081
    %v3113 = vmul.f32 %v3045, %v3091
    %v3114 = vmul.f32 %v3046, %v3101
    %v3115 = vmul.f32 %v3047, %v3111
    %v3117 = vperm.slane %v3025, 0
    %v3119 = vmul.f32 %v3112, %v3117
    %v3120 = vmul.f32 %v3113, %v3117
    %v3121 = vmul.f32 %v3114, %v3117
    %v3122 = vmul.f32 %v3115, %v3117
    %v3124 = vperm.slane %v3027, 0
    %v3126 = vadd.f32 %v3119, %v3124
    %v3127 = vadd.f32 %v3120, %v3124
    %v3128 = vadd.f32 %v3121, %v3124
    %v3129 = vadd.f32 %v3122, %v3124
    %v3130 = vpack.c.bf16 %v3127, %v3126
    %v3131 = vpack.c.bf16 %v3129, %v3128
    %v3132 = vld [vmem:[#allocation15] sm:$0xf]
    %v3133 = vld [vmem:[#allocation15 + $0x4] sm:$0xf]
    %v3134 = vld [vmem:[#allocation15 + $0x8] sm:$0xf]
    %v3135 = vld [vmem:[#allocation15 + $0xc] sm:$0xf]
    %v3136 = vld [vmem:[%s11] sm:$0x1]
    %v3138 = vperm.slane %v3136, 0
    %v3144 = vunpack.c.l.b16 %v3132
    %v3145 = vunpack.c.l.b16 %v3133
    %v3146 = vunpack.c.l.b16 %v3134
    %v3147 = vunpack.c.l.b16 %v3135
    %v3148 = vpack.c.b16 %v3145, %v3144
    %v3149 = vpack.c.b16 %v3147, %v3146
    %v3153 = vsel %vm189, %v3130, 0
    %v3156 = vsel %vm189, %v3131, 0
    %3158 = vmatpush.bf16.msra.mxu0 0
    %3159 = vmatpush.bf16.msra.mxu0 0
    %3160 = vmatpush.bf16.msra.mxu0 0
    %3161 = vmatpush.bf16.msra.mxu0 0
    %3162 = vmatpush.bf16.msra.mxu0 0
    %3163 = vmatpush.bf16.msra.mxu0 0
    %3164 = vmatpush.bf16.msra.mxu0 %v3149
    %3165 = vmatpush.bf16.msra.mxu0 %v3148
    %3166 = vmatmul.bf16.gmra.mxu0 %v3153
    %v3167 = vpop.f32.mrf.mxu0
    %v3168 = vadd.f32 %v3138, %v3167
    %v3169 = vpop.f32.mrf.mxu0
    %v3170 = vadd.f32 %v3138, %v3169
    %3171 = vmatmul.bf16.gmra.mxu0 %v3156
    %v3172 = vpop.f32.mrf.mxu0
    %v3173 = vadd.f32 %v3138, %v3172
    %v3174 = vpop.f32.mrf.mxu0
    %v3175 = vadd.f32 %v3138, %v3174
    %3176 = vdwg.mxu0
    %v3177 = vld [vmem:[#allocation17] sm:$0xf]
    %v3178 = vld [vmem:[#allocation17 + $0x4] sm:$0xf]
    %v3179 = vld [vmem:[#allocation17 + $0x8] sm:$0xf]
    %v3180 = vld [vmem:[#allocation17 + $0xc] sm:$0xf]
    %v3181 = vld [vmem:[%s12] sm:$0x1]
    %v3183 = vperm.slane %v3181, 0
    %v3189 = vunpack.c.l.b16 %v3177
    %v3190 = vunpack.c.l.b16 %v3178
    %v3191 = vunpack.c.l.b16 %v3179
    %v3192 = vunpack.c.l.b16 %v3180
    %v3193 = vpack.c.b16 %v3190, %v3189
    %v3194 = vpack.c.b16 %v3192, %v3191
    %3197 = vmatpush.bf16.msra.mxu0 0
    %3198 = vmatpush.bf16.msra.mxu0 0
    %3199 = vmatpush.bf16.msra.mxu0 0
    %3200 = vmatpush.bf16.msra.mxu0 0
    %3201 = vmatpush.bf16.msra.mxu0 0
    %3202 = vmatpush.bf16.msra.mxu0 0
    %3203 = vmatpush.bf16.msra.mxu0 %v3194
    %3204 = vmatpush.bf16.msra.mxu0 %v3193
    %3205 = vmatmul.bf16.gmra.mxu0 %v3153
    %v3206 = vpop.f32.mrf.mxu0
    %v3207 = vadd.f32 %v3183, %v3206
    %v3208 = vpop.f32.mrf.mxu0
    %v3209 = vadd.f32 %v3183, %v3208
    %3210 = vmatmul.bf16.gmra.mxu0 %v3156
    %v3211 = vpop.f32.mrf.mxu0
    %v3212 = vadd.f32 %v3183, %v3211
    %v3213 = vpop.f32.mrf.mxu0
    %v3214 = vadd.f32 %v3183, %v3213
    %3215 = vdwg.mxu0
    %3216 = vst.msk [vmem:[#allocation19] sm:$0xff] %vm189, %v3168
    %3217 = vst.msk [vmem:[#allocation19 + $0x8] sm:$0xff] %vm189, %v3170
    %3218 = vst.msk [vmem:[#allocation19 + $0x10] sm:$0xff] %vm189, %v3173
    %3219 = vst.msk [vmem:[#allocation19 + $0x18] sm:$0xff] %vm189, %v3175
    %3220 = vst.msk [vmem:[#allocation18] sm:$0xff] %vm189, %v3207
    %3221 = vst.msk [vmem:[#allocation18 + $0x8] sm:$0xff] %vm189, %v3209
    %3222 = vst.msk [vmem:[#allocation18 + $0x10] sm:$0xff] %vm189, %v3212
    %3223 = vst.msk [vmem:[#allocation18 + $0x18] sm:$0xff] %vm189, %v3214
    // Predicated region
    $region90: #{tpu_custom_call.1} parent=1 // pred_check
      _
    $region91: #{tpu_custom_call.1} parent=1 // pred_check_branch
      %3225 = sbr.rel (0) target = $region93
    $region92: #{tpu_custom_call.1} parent=1 // pred_region
      %3227 = vsyncadd [#allocation5], 0
      %s3228 = sshll.u32 [#allocation18], 4
      %s3229 = int_to_ptr.vmem [resolvable:$true] %s3228
      %s3230 = sshll.u32 %s13, 4
      %s3231 = int_to_ptr.hbm [resolvable:$true] %s3230
      %3236 = dma.vmem_to_hbm [thread:$0]  %s3229, 512, %s3231, [#allocation5], 128, 128, 8
    $region93: #{tpu_custom_call.1} parent=1 // pred_fallthru
      _
    // Predicated region
    $region94: #{tpu_custom_call.1} parent=1 // pred_check
      _
    $region95: #{tpu_custom_call.1} parent=1 // pred_check_branch
      %3238 = sbr.rel (0) target = $region97
    $region96: #{tpu_custom_call.1} parent=1 // pred_region
      %3240 = vsyncadd [#allocation20], 0
      %s3241 = sshll.u32 [#allocation19], 4
      %s3242 = int_to_ptr.vmem [resolvable:$true] %s3241
      %s3243 = sshll.u32 %s14, 4
      %s3244 = int_to_ptr.hbm [resolvable:$true] %s3243
      %3249 = dma.vmem_to_hbm [thread:$0]  %s3242, 512, %s3244, [#allocation20], 128, 128, 8
    $region97: #{tpu_custom_call.1} parent=1 // pred_fallthru
      _
    // Predicated region
    $region98: #{tpu_custom_call.1} parent=1 // pred_check
      _
    $region99: #{tpu_custom_call.1} parent=1 // pred_check_branch
      %3251 = sbr.rel (0) target = $region101
    $region100: #{tpu_custom_call.1} parent=1 // pred_region
      %3253 = dma.done [#allocation5], 512
    $region101: #{tpu_custom_call.1} parent=1 // pred_fallthru
      _
    // Predicated region
    $region102: #{tpu_custom_call.1} parent=1 // pred_check
      _
    $region103: #{tpu_custom_call.1} parent=1 // pred_check_branch
      %3255 = sbr.rel (0) target = $region105
    $region104: #{tpu_custom_call.1} parent=1 // pred_region
      %3257 = dma.done [#allocation20], 512
    $region105: #{tpu_custom_call.1} parent=1 // pred_fallthru
      _
    %3258 = vsyncpa [#allocation4], 1
    %3259 = vsyncpa [#allocation7], 1
    %3260 = vsyncpa [#allocation10], 1
    %3261 = vsyncpa [#allocation13], 1
    %3262 = vsyncpa [#allocation16], 1
    %3263 = vsyncpa [#allocation5], 1
    %3264 = vsyncpa [#allocation20], 1

</llo_original>
